<compile_context>
chip_gen: v5e
topology: v5e:2x2
jax: 0.10.0
libtpu: 0.0.40
codegen_flags: <defaults>
</compile_context>

<pallas_src>
import functools

import jax
import jax.numpy as jnp
from jax.experimental import pallas as pl
from jax.experimental.pallas import tpu as pltpu


# ----------------------------------------------------------------------------
# small helpers
# ----------------------------------------------------------------------------
def _round_up(x, m):
    return ((x + m - 1) // m) * m


def _pad2d(x, rows, cols):
    r, c = x.shape
    if (r, c) == (rows, cols):
        return x
    return jnp.pad(x, ((0, rows - r), (0, cols - c)))


def _choose_tm(m):
    """Right-size the row tile.

    * tiny M (decoder path, M=32): use round_up(M, 8), no 4x zero padding
    * large M: prefer 256-row tiles when they add no extra padding (v6e/v7x
      256x256 MXU), otherwise 128.
    """
    if m < 128:
        return _round_up(m, 8)
    pad128 = _round_up(m, 128) - m
    pad256 = _round_up(m, 256) - m
    return 256 if pad256 <= pad128 else 128


# ----------------------------------------------------------------------------
# Kernel 1: matmul + bias + activation (no residual stream)
#           bf16 operands, f32 accumulation on the MXU
# ----------------------------------------------------------------------------
def _mm_kernel(a_ref, w_ref, b_ref, o_ref, *, act):
    y = jnp.dot(a_ref[...], w_ref[...], preferred_element_type=jnp.float32)
    y = y + b_ref[...]
    if act == "relu":
        y = jnp.maximum(y, 0.0)
    elif act == "sigmoid":
        y = jax.nn.sigmoid(y)
    o_ref[...] = y


def matmul_bias_act(patches, wmat, bias, act):
    """out[:M, :Cout] = act(patches @ wmat + bias)."""
    M, K = patches.shape
    _, Cout = wmat.shape
    TM = _choose_tm(M)
    Mp = _round_up(M, TM)
    Kp = _round_up(K, 128)
    Np = _round_up(Cout, 128)

    a = _pad2d(patches.astype(jnp.bfloat16), Mp, Kp)
    w = _pad2d(wmat.astype(jnp.bfloat16), Kp, Np)
    b = _pad2d(bias.reshape(1, Cout).astype(jnp.float32), 1, Np)

    out = pl.pallas_call(
        functools.partial(_mm_kernel, act=act),
        out_shape=jax.ShapeDtypeStruct((Mp, Np), jnp.float32),
        grid_spec=pltpu.PrefetchScalarGridSpec(
            num_scalar_prefetch=0,
            grid=(Mp // TM,),
            in_specs=[
                pl.BlockSpec((TM, Kp), lambda i: (i, 0)),
                pl.BlockSpec((Kp, Np), lambda i: (0, 0)),
                pl.BlockSpec((1, Np), lambda i: (0, 0)),
            ],
            out_specs=pl.BlockSpec((TM, Np), lambda i: (i, 0)),
        ),
        compiler_params=pltpu.CompilerParams(
            dimension_semantics=("parallel",)),
    )(a, w, b)
    return out[:M, :Cout]


# ----------------------------------------------------------------------------
# Kernel 2: encoder conv + fused attention split
#   primary = relu(patches @ W + b)
#   fg      = primary * att          (att broadcast over 128 ch == cat x128)
#   bg      = primary * (1 - att)
# ----------------------------------------------------------------------------
def _enc_split_kernel(a_ref, w_ref, b_ref, att_ref, prim_ref, fg_ref, bg_ref):
    y = jnp.dot(a_ref[...], w_ref[...], preferred_element_type=jnp.float32)
    p = jnp.maximum(y + b_ref[...], 0.0)                   # encoder relu
    att = jnp.broadcast_to(att_ref[...], p.shape)          # == 128x stacking
    prim_ref[...] = p
    fg_ref[...] = p * att
    bg_ref[...] = p * (1.0 - att)


def encoder_split(patches, wmat, bias, att):
    """patches: (M, K), wmat: (K, 128), bias: (128,), att: (M, 1)."""
    M, K = patches.shape
    _, Cout = wmat.shape
    Mp = _round_up(M, 8)
    Kp = _round_up(K, 128)
    Np = _round_up(Cout, 128)

    a = _pad2d(patches.astype(jnp.bfloat16), Mp, Kp)
    w = _pad2d(wmat.astype(jnp.bfloat16), Kp, Np)
    b = _pad2d(bias.reshape(1, Cout).astype(jnp.float32), 1, Np)
    att_p = _pad2d(att.astype(jnp.float32), Mp, 1)

    prim, fg, bg = pl.pallas_call(
        _enc_split_kernel,
        out_shape=tuple(jax.ShapeDtypeStruct((Mp, Np), jnp.float32)
                        for _ in range(3)),
        grid_spec=pltpu.PrefetchScalarGridSpec(
            num_scalar_prefetch=0,
            grid=(1,),
            in_specs=[
                pl.BlockSpec((Mp, Kp), lambda i: (0, 0)),
                pl.BlockSpec((Kp, Np), lambda i: (0, 0)),
                pl.BlockSpec((1, Np), lambda i: (0, 0)),
                pl.BlockSpec((Mp, 1), lambda i: (0, 0)),
            ],
            out_specs=tuple(pl.BlockSpec((Mp, Np), lambda i: (0, 0))
                            for _ in range(3)),
        ),
    )(a, w, b, att_p)
    return prim[:M, :Cout], fg[:M, :Cout], bg[:M, :Cout]


# ----------------------------------------------------------------------------
# Kernel 3: one decoder layer for ALL THREE decoders (branch grid axis = 3)
#   i=0 (fg), i=1 (bg): out = relu(conv);  running sum kept in VMEM scratch
#   i=2 (pd)          : out = relu(conv + fg_out + bg_out)   (residual)
# ----------------------------------------------------------------------------
def _dec_layer_kernel(a_ref, w_ref, b_ref, o_ref, acc_ref):
    i = pl.program_id(0)

    @pl.when(i == 0)
    def _():
        acc_ref[...] = jnp.zeros_like(acc_ref)

    y = jnp.dot(a_ref[...], w_ref[...], preferred_element_type=jnp.float32)
    y = y + b_ref[...]

    @pl.when(i < 2)
    def _():
        r = jnp.maximum(y, 0.0)
        o_ref[...] = r
        acc_ref[...] = acc_ref[...] + r

    @pl.when(i == 2)
    def _():
        o_ref[...] = jnp.maximum(y + acc_ref[...], 0.0)


# Kernel 4: final decoder layer (sigmoid, no cross-branch residual) — branch
# axis is fully parallel, so v7x can shard it across its two TensorCores.
def _dec_final_kernel(a_ref, w_ref, b_ref, o_ref):
    y = jnp.dot(a_ref[...], w_ref[...], preferred_element_type=jnp.float32)
    o_ref[...] = jax.nn.sigmoid(y + b_ref[...])


def _batched_matmul(a3, w3, b3, *, kernel, semantics, scratch):
    """a3: (3, M, K), w3: (3, K, N), b3: (3, N) -> (3, M, N) float32."""
    _, M, K = a3.shape
    _, _, Cout = w3.shape
    Mp = _round_up(M, 8)
    Kp = _round_up(K, 128)
    Np = _round_up(Cout, 128)

    a = jnp.pad(a3.astype(jnp.bfloat16), ((0, 0), (0, Mp - M), (0, Kp - K)))
    w = jnp.pad(w3.astype(jnp.bfloat16), ((0, 0), (0, Kp - K), (0, Np - Cout)))
    b = jnp.pad(b3.astype(jnp.float32).reshape(3, 1, Cout),
                ((0, 0), (0, 0), (0, Np - Cout)))

    out = pl.pallas_call(
        kernel,
        out_shape=jax.ShapeDtypeStruct((3, Mp, Np), jnp.float32),
        grid_spec=pltpu.PrefetchScalarGridSpec(
            num_scalar_prefetch=0,
            grid=(3,),
            in_specs=[
                pl.BlockSpec((None, Mp, Kp), lambda i: (i, 0, 0)),
                pl.BlockSpec((None, Kp, Np), lambda i: (i, 0, 0)),
                pl.BlockSpec((None, 1, Np), lambda i: (i, 0, 0)),
            ],
            out_specs=pl.BlockSpec((None, Mp, Np), lambda i: (i, 0, 0)),
            scratch_shapes=(
                [pltpu.VMEM((Mp, Np), jnp.float32)] if scratch else []),
        ),
        compiler_params=pltpu.CompilerParams(
            dimension_semantics=(semantics,)),
    )(a, w, b)
    return out[:, :M, :Cout]


# ----------------------------------------------------------------------------
# im2col glue + single-conv wrapper
# ----------------------------------------------------------------------------
def _im2col(x, kh, kw, stride, padding):
    # TODO(synk): patches are still formed as XLA glue; in-kernel patch
    # formation (padded VMEM scratch + shifted slices) would cut decoder-path
    # HBM traffic ~9x, but at these 4x4 / 16x16 sizes the glue is cheap.
    N, H, W, Cin = x.shape
    Hout = (H + 2 * padding - kh) // stride + 1
    Wout = (W + 2 * padding - kw) // stride + 1
    xp = jnp.pad(x, ((0, 0), (padding, padding), (padding, padding), (0, 0)))
    cols = []
    for i in range(kh):
        for j in range(kw):
            sl = xp[:, i: i + (Hout - 1) * stride + 1: stride,
                    j: j + (Wout - 1) * stride + 1: stride, :]
            cols.append(sl)
    patches = jnp.concatenate(cols, axis=-1)
    return patches.reshape(N * Hout * Wout, kh * kw * Cin), (N, Hout, Wout)


def conv2d_pallas(x, w, b, *, stride=1, padding=0, act="none"):
    KH, KW, Cin, Cout = w.shape
    patches, (N, Hout, Wout) = _im2col(x, KH, KW, stride, padding)
    out2d = matmul_bias_act(patches, w.reshape(KH * KW * Cin, Cout), b, act)
    return out2d.reshape(N, Hout, Wout, Cout)


# ----------------------------------------------------------------------------
# parameter init (deterministic, PyTorch-like fan_in uniform)
# ----------------------------------------------------------------------------
def _init_conv(key, kh, kw, cin, cout):
    k1, k2 = jax.random.split(key)
    bound = 1.0 / (kh * kw * cin) ** 0.5
    w = jax.random.uniform(k1, (kh, kw, cin, cout), jnp.float32, -bound, bound)
    b = jax.random.uniform(k2, (cout,), jnp.float32, -bound, bound)
    return w, b


def _init_decoder(key):
    ks = jax.random.split(key, 4)
    p = {}
    p["w1"], p["b1"] = _init_conv(ks[0], 3, 3, 128, 64)
    p["w2"], p["b2"] = _init_conv(ks[1], 3, 3, 64, 32)
    p["w3"], p["b3"] = _init_conv(ks[2], 3, 3, 32, 16)
    p["w4"], p["b4"] = _init_conv(ks[3], 3, 3, 16, 3)
    return p


def init_params(key):
    ks = jax.random.split(key, 8)
    p = {}
    # downsample: Conv2d(3, 3, kernel_size=5, stride=4, padding=2)
    p["down_w"], p["down_b"] = _init_conv(ks[0], 5, 5, 3, 3)
    # Attention (synthesized): conv3->8 relu, conv8->1 sigmoid  (keeps H,W)
    aw1, ab1 = _init_conv(ks[1], 3, 3, 3, 8)
    aw2, ab2 = _init_conv(ks[2], 3, 3, 8, 1)
    p["att"] = {"w1": aw1, "b1": ab1, "w2": aw2, "b2": ab2}
    # Encoder (synthesized): conv 3->128, stride 4, relu  (matches 128-stack)
    p["enc_w"], p["enc_b"] = _init_conv(ks[3], 5, 5, 3, 128)
    # Decoders (synthesized)
    p["fg"] = _init_decoder(ks[4])
    p["bg"] = _init_decoder(ks[5])
    p["pd"] = _init_decoder(ks[6])
    return p


# ----------------------------------------------------------------------------
# sub-module forwards
# ----------------------------------------------------------------------------
def attention_forward_batched(x_big, x_small, p):
    """Applies the (synthesized) 2-layer attention module to two inputs of
    different resolution with a SINGLE pallas_call per layer (shared weights,
    rows concatenated along M)."""
    c1 = p["w1"].shape[-1]
    pb, (nb, hb, wb) = _im2col(x_big, 3, 3, 1, 1)
    ps, (ns, hs, ws) = _im2col(x_small, 3, 3, 1, 1)
    mb = pb.shape[0]

    h = matmul_bias_act(jnp.concatenate([pb, ps], axis=0),
                        p["w1"].reshape(-1, c1), p["b1"], "relu")
    h_big = h[:mb].reshape(nb, hb, wb, c1)
    h_small = h[mb:].reshape(ns, hs, ws, c1)

    # TODO(synk): the 8-channel intermediate still round-trips HBM; fusing both
    # attention layers into one kernel needs in-kernel im2col of `h` and is
    # left as a further optimization.
    qb, _ = _im2col(h_big, 3, 3, 1, 1)
    qs, _ = _im2col(h_small, 3, 3, 1, 1)
    a = matmul_bias_act(jnp.concatenate([qb, qs], axis=0),
                        p["w2"].reshape(-1, 1), p["b2"], "sigmoid")
    att_big = a[:mb].reshape(nb, hb, wb, 1)
    att_small = a[mb:].reshape(ns, hs, ws, 1)
    return att_big, att_small


def decoders_forward(fg_in, bg_in, primary, params):
    """FGDecoder, BGDecoder and PDecoder, one pallas_call per layer (branch
    grid axis = 3).  PDecoder residual (fg_l + bg_l) added pre-activation via
    VMEM scratch accumulation across the (sequential) branch axis."""
    p_fg, p_bg, p_pd = params["fg"], params["bg"], params["pd"]
    N, H, W, _ = fg_in.shape

    def stacked_weights(idx):
        w3 = jnp.stack([p[f"w{idx}"].reshape(-1, p[f"w{idx}"].shape[-1])
                        for p in (p_fg, p_bg, p_pd)], axis=0)
        b3 = jnp.stack([p[f"b{idx}"] for p in (p_fg, p_bg, p_pd)], axis=0)
        return w3, b3

    def stacked_patches(branches):
        return jnp.stack([_im2col(t, 3, 3, 1, 1)[0] for t in branches], axis=0)

    cur = (fg_in, bg_in, primary)
    for idx in (1, 2, 3):
        w3, b3 = stacked_weights(idx)
        out = _batched_matmul(stacked_patches(cur), w3, b3,
                              kernel=_dec_layer_kernel,
                              semantics="arbitrary", scratch=True)
        cout = w3.shape[-1]
        cur = tuple(out[k].reshape(N, H, W, cout) for k in range(3))

    w3, b3 = stacked_weights(4)
    out = _batched_matmul(stacked_patches(cur), w3, b3,
                          kernel=_dec_final_kernel,
                          semantics="parallel", scratch=False)
    cout = w3.shape[-1]
    fg_out, bg_out, p_out = (out[k].reshape(N, H, W, cout) for k in range(3))
    return fg_out, bg_out, p_out


# ----------------------------------------------------------------------------
# HumanAware forward
# ----------------------------------------------------------------------------
def human_aware_forward(img_nchw, params):
    # PyTorch input is NCHW -> kernels use NHWC
    img = jnp.transpose(img_nchw, (0, 2, 3, 1)).astype(jnp.float32)

    # downsample: Conv2d(3, 3, k=5, s=4, p=2), no activation
    downsampled = conv2d_pallas(img, params["down_w"], params["down_b"],
                                stride=4, padding=2, act="none")

    # attention on the original AND the downsampled image, batched per layer
    att_orig, att_fg = attention_forward_batched(img, downsampled,
                                                 params["att"])

    # encoder (3->128, k=5, s=4, p=2, relu) with the 128x attention stacking
    # + multiply (fg) and the (1 - att) multiply (bg) fused into its epilogue
    enc_patches, (n, ho, wo) = _im2col(img, 5, 5, 4, 2)
    cenc = params["enc_w"].shape[-1]
    prim2d, fg2d, bg2d = encoder_split(
        enc_patches, params["enc_w"].reshape(-1, cenc), params["enc_b"],
        att_fg.reshape(-1, 1))
    primary = prim2d.reshape(n, ho, wo, cenc)
    fg_in = fg2d.reshape(n, ho, wo, cenc)
    bg_in = bg2d.reshape(n, ho, wo, cenc)

    fg_out, bg_out, p_out = decoders_forward(fg_in, bg_in, primary, params)

    # back to NCHW to match the PyTorch module's output convention
    to_nchw = lambda t: jnp.transpose(t, (0, 3, 1, 2))
    return (to_nchw(p_out), to_nchw(fg_out), to_nchw(bg_out),
            to_nchw(att_orig))


# ----------------------------------------------------------------------------
if __name__ == "__main__":
    key = jax.random.PRNGKey(0)
    k_img, k_par = jax.random.split(key)

    img = jax.random.normal(k_img, (2, 3, 16, 16), jnp.float32)  # NCHW
    params = init_params(k_par)

    fwd = jax.jit(human_aware_forward)
    outs = jax.block_until_ready(fwd(img, params))

    p_out, fg_out, bg_out, att_orig = outs
    assert p_out.shape == (2, 3, 4, 4)
    assert fg_out.shape == (2, 3, 4, 4)
    assert bg_out.shape == (2, 3, 4, 4)
    assert att_orig.shape == (2, 1, 16, 16)
    assert all(bool(jnp.all(jnp.isfinite(o))) for o in outs)
    print("KERNEL_OK")
</pallas_src>

<mosaic_0001>
module attributes {stable_mosaic.version = 11 : i64} {
  func.func @_mm_kernel(%arg0: i32, %arg1: memref<32x128xbf16, #tpu.memory_space<vmem>>, %arg2: memref<128x128xbf16, #tpu.memory_space<vmem>>, %arg3: memref<1x128xf32, #tpu.memory_space<vmem>>, %arg4: memref<32x128xf32, #tpu.memory_space<vmem>>) attributes {dimension_semantics = [#tpu.dimension_semantics<parallel>], iteration_bounds = array<i64: 1>, scalar_prefetch = 0 : i64, scratch_operands = 0 : i64, tpu.core_type = #tpu.core_type<tc>, window_params = [{transform_indices = @transform_0, window_bounds = array<i64: 32, 128>}, {pipeline_mode = #tpu.pipeline_mode<synchronous>, transform_indices = @transform_1, window_bounds = array<i64: 128, 128>}, {pipeline_mode = #tpu.pipeline_mode<synchronous>, transform_indices = @transform_2, window_bounds = array<i64: 1, 128>}, {transform_indices = @transform_3, window_bounds = array<i64: 32, 128>}]} {
    %c0 = arith.constant 0 : index
    %c0_0 = arith.constant 0 : index
    %0 = vector.load %arg1[%c0, %c0_0] : memref<32x128xbf16, #tpu.memory_space<vmem>>, vector<32x128xbf16>
    %c0_1 = arith.constant 0 : index
    %c0_2 = arith.constant 0 : index
    %1 = vector.load %arg2[%c0_1, %c0_2] : memref<128x128xbf16, #tpu.memory_space<vmem>>, vector<128x128xbf16>
    %cst = arith.constant dense<0.000000e+00> : vector<32x128xf32>
    %2 = tpu.matmul %0, %1, %cst {dimension_numbers = #tpu.dot_dimension_numbers<[1], [0], [0], [1], [0, 0, 1, 1], [], []>} : vector<32x128xbf16>, vector<128x128xbf16>, vector<32x128xf32> -> vector<32x128xf32>
    %c0_3 = arith.constant 0 : index
    %c0_4 = arith.constant 0 : index
    %3 = vector.load %arg3[%c0_3, %c0_4] : memref<1x128xf32, #tpu.memory_space<vmem>>, vector<1x128xf32>
    %4 = vector.broadcast %3 : vector<1x128xf32> to vector<32x128xf32>
    %5 = arith.addf %2, %4 : vector<32x128xf32>
    %c0_5 = arith.constant 0 : index
    %c0_6 = arith.constant 0 : index
    %6 = vector.load %arg4[%c0_5, %c0_6] : memref<32x128xf32, #tpu.memory_space<vmem>>, vector<32x128xf32>
    tpu.vector_store %arg4[%c0_5, %c0_6], %5 {strides = array<i32>} : memref<32x128xf32, #tpu.memory_space<vmem>>, vector<32x128xf32>,
    return
  }
  func.func @transform_0(%arg0: i32) -> (i32, i32) {
    %c0_i32 = arith.constant 0 : i32
    %c0_i32_0 = arith.constant 0 : i32
    return %arg0, %c0_i32 : i32, i32
  }
  func.func @transform_1(%arg0: i32) -> (i32, i32) {
    %c0_i32 = arith.constant 0 : i32
    %c0_i32_0 = arith.constant 0 : i32
    %c0_i32_1 = arith.constant 0 : i32
    return %c0_i32, %c0_i32_0 : i32, i32
  }
  func.func @transform_2(%arg0: i32) -> (i32, i32) {
    %c0_i32 = arith.constant 0 : i32
    %c0_i32_0 = arith.constant 0 : i32
    %c0_i32_1 = arith.constant 0 : i32
    return %c0_i32, %c0_i32_0 : i32, i32
  }
  func.func @transform_3(%arg0: i32) -> (i32, i32) {
    %c0_i32 = arith.constant 0 : i32
    %c0_i32_0 = arith.constant 0 : i32
    return %arg0, %c0_i32 : i32, i32
  }
}

module attributes {stable_mosaic.version = 11 : i64} {
  func.func @_mm_kernel(%arg0: i32, %arg1: memref<128x128xbf16, #tpu.memory_space<vmem>>, %arg2: memref<128x128xbf16, #tpu.memory_space<vmem>>, %arg3: memref<1x128xf32, #tpu.memory_space<vmem>>, %arg4: memref<128x128xf32, #tpu.memory_space<vmem>>) attributes {dimension_semantics = [#tpu.dimension_semantics<parallel>], iteration_bounds = array<i64: 5>, scalar_prefetch = 0 : i64, scratch_operands = 0 : i64, tpu.core_type = #tpu.core_type<tc>, window_params = [{transform_indices = @transform_0, window_bounds = array<i64: 128, 128>}, {pipeline_mode = #tpu.pipeline_mode<synchronous>, transform_indices = @transform_1, window_bounds = array<i64: 128, 128>}, {pipeline_mode = #tpu.pipeline_mode<synchronous>, transform_indices = @transform_2, window_bounds = array<i64: 1, 128>}, {transform_indices = @transform_3, window_bounds = array<i64: 128, 128>}]} {
    %c0 = arith.constant 0 : index
    %c0_0 = arith.constant 0 : index
    %0 = vector.load %arg1[%c0, %c0_0] : memref<128x128xbf16, #tpu.memory_space<vmem>>, vector<128x128xbf16>
    %c0_1 = arith.constant 0 : index
    %c0_2 = arith.constant 0 : index
    %1 = vector.load %arg2[%c0_1, %c0_2] : memref<128x128xbf16, #tpu.memory_space<vmem>>, vector<128x128xbf16>
    %cst = arith.constant dense<0.000000e+00> : vector<128x128xf32>
    %2 = tpu.matmul %0, %1, %cst {dimension_numbers = #tpu.dot_dimension_numbers<[1], [0], [0], [1], [0, 0, 1, 1], [], []>} : vector<128x128xbf16>, vector<128x128xbf16>, vector<128x128xf32> -> vector<128x128xf32>
    %c0_3 = arith.constant 0 : index
    %c0_4 = arith.constant 0 : index
    %3 = vector.load %arg3[%c0_3, %c0_4] : memref<1x128xf32, #tpu.memory_space<vmem>>, vector<1x128xf32>
    %4 = vector.broadcast %3 : vector<1x128xf32> to vector<128x128xf32>
    %5 = arith.addf %2, %4 : vector<128x128xf32>
    %cst_5 = arith.constant 0.000000e+00 : f32
    %6 = vector.broadcast %cst_5 : f32 to vector<128x128xf32>
    %7 = arith.maximumf %5, %6 : vector<128x128xf32>
    %c0_6 = arith.constant 0 : index
    %c0_7 = arith.constant 0 : index
    %8 = vector.load %arg4[%c0_6, %c0_7] : memref<128x128xf32, #tpu.memory_space<vmem>>, vector<128x128xf32>
    tpu.vector_store %arg4[%c0_6, %c0_7], %7 {strides = array<i32>} : memref<128x128xf32, #tpu.memory_space<vmem>>, vector<128x128xf32>,
    return
  }
  func.func @transform_0(%arg0: i32) -> (i32, i32) {
    %c0_i32 = arith.constant 0 : i32
    %c0_i32_0 = arith.constant 0 : i32
    return %arg0, %c0_i32 : i32, i32
  }
  func.func @transform_1(%arg0: i32) -> (i32, i32) {
    %c0_i32 = arith.constant 0 : i32
    %c0_i32_0 = arith.constant 0 : i32
    %c0_i32_1 = arith.constant 0 : i32
    return %c0_i32, %c0_i32_0 : i32, i32
  }
  func.func @transform_2(%arg0: i32) -> (i32, i32) {
    %c0_i32 = arith.constant 0 : i32
    %c0_i32_0 = arith.constant 0 : i32
    %c0_i32_1 = arith.constant 0 : i32
    return %c0_i32, %c0_i32_0 : i32, i32
  }
  func.func @transform_3(%arg0: i32) -> (i32, i32) {
    %c0_i32 = arith.constant 0 : i32
    %c0_i32_0 = arith.constant 0 : i32
    return %arg0, %c0_i32 : i32, i32
  }
}

module attributes {stable_mosaic.version = 11 : i64} {
  func.func @_mm_kernel(%arg0: i32, %arg1: memref<128x128xbf16, #tpu.memory_space<vmem>>, %arg2: memref<128x128xbf16, #tpu.memory_space<vmem>>, %arg3: memref<1x128xf32, #tpu.memory_space<vmem>>, %arg4: memref<128x128xf32, #tpu.memory_space<vmem>>) attributes {dimension_semantics = [#tpu.dimension_semantics<parallel>], iteration_bounds = array<i64: 5>, scalar_prefetch = 0 : i64, scratch_operands = 0 : i64, tpu.core_type = #tpu.core_type<tc>, window_params = [{transform_indices = @transform_0, window_bounds = array<i64: 128, 128>}, {pipeline_mode = #tpu.pipeline_mode<synchronous>, transform_indices = @transform_1, window_bounds = array<i64: 128, 128>}, {pipeline_mode = #tpu.pipeline_mode<synchronous>, transform_indices = @transform_2, window_bounds = array<i64: 1, 128>}, {transform_indices = @transform_3, window_bounds = array<i64: 128, 128>}]} {
    %c0 = arith.constant 0 : index
    %c0_0 = arith.constant 0 : index
    %0 = vector.load %arg1[%c0, %c0_0] : memref<128x128xbf16, #tpu.memory_space<vmem>>, vector<128x128xbf16>
    %c0_1 = arith.constant 0 : index
    %c0_2 = arith.constant 0 : index
    %1 = vector.load %arg2[%c0_1, %c0_2] : memref<128x128xbf16, #tpu.memory_space<vmem>>, vector<128x128xbf16>
    %cst = arith.constant dense<0.000000e+00> : vector<128x128xf32>
    %2 = tpu.matmul %0, %1, %cst {dimension_numbers = #tpu.dot_dimension_numbers<[1], [0], [0], [1], [0, 0, 1, 1], [], []>} : vector<128x128xbf16>, vector<128x128xbf16>, vector<128x128xf32> -> vector<128x128xf32>
    %c0_3 = arith.constant 0 : index
    %c0_4 = arith.constant 0 : index
    %3 = vector.load %arg3[%c0_3, %c0_4] : memref<1x128xf32, #tpu.memory_space<vmem>>, vector<1x128xf32>
    %4 = vector.broadcast %3 : vector<1x128xf32> to vector<128x128xf32>
    %5 = arith.addf %2, %4 : vector<128x128xf32>
    %6 = arith.negf %5 : vector<128x128xf32>
    %7 = math.exp %6 : vector<128x128xf32>
    %cst_5 = arith.constant 1.000000e+00 : f32
    %8 = vector.broadcast %cst_5 : f32 to vector<128x128xf32>
    %9 = arith.addf %8, %7 : vector<128x128xf32>
    %10 = arith.divf %8, %9 : vector<128x128xf32>
    %c0_6 = arith.constant 0 : index
    %c0_7 = arith.constant 0 : index
    %11 = vector.load %arg4[%c0_6, %c0_7] : memref<128x128xf32, #tpu.memory_space<vmem>>, vector<128x128xf32>
    tpu.vector_store %arg4[%c0_6, %c0_7], %10 {strides = array<i32>} : memref<128x128xf32, #tpu.memory_space<vmem>>, vector<128x128xf32>,
    return
  }
  func.func @transform_0(%arg0: i32) -> (i32, i32) {
    %c0_i32 = arith.constant 0 : i32
    %c0_i32_0 = arith.constant 0 : i32
    return %arg0, %c0_i32 : i32, i32
  }
  func.func @transform_1(%arg0: i32) -> (i32, i32) {
    %c0_i32 = arith.constant 0 : i32
    %c0_i32_0 = arith.constant 0 : i32
    %c0_i32_1 = arith.constant 0 : i32
    return %c0_i32, %c0_i32_0 : i32, i32
  }
  func.func @transform_2(%arg0: i32) -> (i32, i32) {
    %c0_i32 = arith.constant 0 : i32
    %c0_i32_0 = arith.constant 0 : i32
    %c0_i32_1 = arith.constant 0 : i32
    return %c0_i32, %c0_i32_0 : i32, i32
  }
  func.func @transform_3(%arg0: i32) -> (i32, i32) {
    %c0_i32 = arith.constant 0 : i32
    %c0_i32_0 = arith.constant 0 : i32
    return %arg0, %c0_i32 : i32, i32
  }
}

module attributes {stable_mosaic.version = 11 : i64} {
  func.func @_enc_split_kernel(%arg0: i32, %arg1: memref<32x128xbf16, #tpu.memory_space<vmem>>, %arg2: memref<128x128xbf16, #tpu.memory_space<vmem>>, %arg3: memref<1x128xf32, #tpu.memory_space<vmem>>, %arg4: memref<32x1xf32, #tpu.memory_space<vmem>>, %arg5: memref<32x128xf32, #tpu.memory_space<vmem>>, %arg6: memref<32x128xf32, #tpu.memory_space<vmem>>, %arg7: memref<32x128xf32, #tpu.memory_space<vmem>>) attributes {dimension_semantics = [#tpu.dimension_semantics<arbitrary>], iteration_bounds = array<i64: 1>, scalar_prefetch = 0 : i64, scratch_operands = 0 : i64, tpu.core_type = #tpu.core_type<tc>, window_params = [{pipeline_mode = #tpu.pipeline_mode<synchronous>, transform_indices = @transform_0, window_bounds = array<i64: 32, 128>}, {pipeline_mode = #tpu.pipeline_mode<synchronous>, transform_indices = @transform_1, window_bounds = array<i64: 128, 128>}, {pipeline_mode = #tpu.pipeline_mode<synchronous>, transform_indices = @transform_2, window_bounds = array<i64: 1, 128>}, {pipeline_mode = #tpu.pipeline_mode<synchronous>, transform_indices = @transform_3, window_bounds = array<i64: 32, 1>}, {pipeline_mode = #tpu.pipeline_mode<synchronous>, transform_indices = @transform_4, window_bounds = array<i64: 32, 128>}, {pipeline_mode = #tpu.pipeline_mode<synchronous>, transform_indices = @transform_5, window_bounds = array<i64: 32, 128>}, {pipeline_mode = #tpu.pipeline_mode<synchronous>, transform_indices = @transform_6, window_bounds = array<i64: 32, 128>}]} {
    %c0 = arith.constant 0 : index
    %c0_0 = arith.constant 0 : index
    %0 = vector.load %arg1[%c0, %c0_0] : memref<32x128xbf16, #tpu.memory_space<vmem>>, vector<32x128xbf16>
    %c0_1 = arith.constant 0 : index
    %c0_2 = arith.constant 0 : index
    %1 = vector.load %arg2[%c0_1, %c0_2] : memref<128x128xbf16, #tpu.memory_space<vmem>>, vector<128x128xbf16>
    %cst = arith.constant dense<0.000000e+00> : vector<32x128xf32>
    %2 = tpu.matmul %0, %1, %cst {dimension_numbers = #tpu.dot_dimension_numbers<[1], [0], [0], [1], [0, 0, 1, 1], [], []>} : vector<32x128xbf16>, vector<128x128xbf16>, vector<32x128xf32> -> vector<32x128xf32>
    %c0_3 = arith.constant 0 : index
    %c0_4 = arith.constant 0 : index
    %3 = vector.load %arg3[%c0_3, %c0_4] : memref<1x128xf32, #tpu.memory_space<vmem>>, vector<1x128xf32>
    %4 = vector.broadcast %3 : vector<1x128xf32> to vector<32x128xf32>
    %5 = arith.addf %2, %4 : vector<32x128xf32>
    %cst_5 = arith.constant 0.000000e+00 : f32
    %6 = vector.broadcast %cst_5 : f32 to vector<32x128xf32>
    %7 = arith.maximumf %5, %6 : vector<32x128xf32>
    %c0_6 = arith.constant 0 : index
    %c0_7 = arith.constant 0 : index
    %8 = vector.load %arg4[%c0_6, %c0_7] : memref<32x1xf32, #tpu.memory_space<vmem>>, vector<32x1xf32>
    %9 = vector.shape_cast %8 : vector<32x1xf32> to vector<32x1xf32>
    %10 = vector.broadcast %9 : vector<32x1xf32> to vector<32x128xf32>
    %c0_8 = arith.constant 0 : index
    %c0_9 = arith.constant 0 : index
    %11 = vector.load %arg5[%c0_8, %c0_9] : memref<32x128xf32, #tpu.memory_space<vmem>>, vector<32x128xf32>
    tpu.vector_store %arg5[%c0_8, %c0_9], %7 {strides = array<i32>} : memref<32x128xf32, #tpu.memory_space<vmem>>, vector<32x128xf32>,
    %12 = arith.mulf %7, %10 : vector<32x128xf32>
    %c0_10 = arith.constant 0 : index
    %c0_11 = arith.constant 0 : index
    %13 = vector.load %arg6[%c0_10, %c0_11] : memref<32x128xf32, #tpu.memory_space<vmem>>, vector<32x128xf32>
    tpu.vector_store %arg6[%c0_10, %c0_11], %12 {strides = array<i32>} : memref<32x128xf32, #tpu.memory_space<vmem>>, vector<32x128xf32>,
    %cst_12 = arith.constant 1.000000e+00 : f32
    %14 = vector.broadcast %cst_12 : f32 to vector<32x128xf32>
    %15 = arith.subf %14, %10 : vector<32x128xf32>
    %16 = arith.mulf %7, %15 : vector<32x128xf32>
    %c0_13 = arith.constant 0 : index
    %c0_14 = arith.constant 0 : index
    %17 = vector.load %arg7[%c0_13, %c0_14] : memref<32x128xf32, #tpu.memory_space<vmem>>, vector<32x128xf32>
    tpu.vector_store %arg7[%c0_13, %c0_14], %16 {strides = array<i32>} : memref<32x128xf32, #tpu.memory_space<vmem>>, vector<32x128xf32>,
    return
  }
  func.func @transform_0(%arg0: i32) -> (i32, i32) {
    %c0_i32 = arith.constant 0 : i32
    %c0_i32_0 = arith.constant 0 : i32
    %c0_i32_1 = arith.constant 0 : i32
    return %c0_i32, %c0_i32_0 : i32, i32
  }
  func.func @transform_1(%arg0: i32) -> (i32, i32) {
    %c0_i32 = arith.constant 0 : i32
    %c0_i32_0 = arith.constant 0 : i32
    %c0_i32_1 = arith.constant 0 : i32
    return %c0_i32, %c0_i32_0 : i32, i32
  }
  func.func @transform_2(%arg0: i32) -> (i32, i32) {
    %c0_i32 = arith.constant 0 : i32
    %c0_i32_0 = arith.constant 0 : i32
    %c0_i32_1 = arith.constant 0 : i32
    return %c0_i32, %c0_i32_0 : i32, i32
  }
  func.func @transform_3(%arg0: i32) -> (i32, i32) {
    %c0_i32 = arith.constant 0 : i32
    %c0_i32_0 = arith.constant 0 : i32
    %c0_i32_1 = arith.constant 0 : i32
    return %c0_i32, %c0_i32_0 : i32, i32
  }
  func.func @transform_4(%arg0: i32) -> (i32, i32) {
    %c0_i32 = arith.constant 0 : i32
    %c0_i32_0 = arith.constant 0 : i32
    %c0_i32_1 = arith.constant 0 : i32
    return %c0_i32, %c0_i32_0 : i32, i32
  }
  func.func @transform_5(%arg0: i32) -> (i32, i32) {
    %c0_i32 = arith.constant 0 : i32
    %c0_i32_0 = arith.constant 0 : i32
    %c0_i32_1 = arith.constant 0 : i32
    return %c0_i32, %c0_i32_0 : i32, i32
  }
  func.func @transform_6(%arg0: i32) -> (i32, i32) {
    %c0_i32 = arith.constant 0 : i32
    %c0_i32_0 = arith.constant 0 : i32
    %c0_i32_1 = arith.constant 0 : i32
    return %c0_i32, %c0_i32_0 : i32, i32
  }
}

module attributes {stable_mosaic.version = 11 : i64} {
  func.func @_dec_layer_kernel(%arg0: i32, %arg1: memref<1x32x1152xbf16, #tpu.memory_space<vmem>>, %arg2: memref<1x1152x128xbf16, #tpu.memory_space<vmem>>, %arg3: memref<1x1x128xf32, #tpu.memory_space<vmem>>, %arg4: memref<1x32x128xf32, #tpu.memory_space<vmem>>, %arg5: memref<32x128xf32, #tpu.memory_space<vmem>>) attributes {dimension_semantics = [#tpu.dimension_semantics<arbitrary>], iteration_bounds = array<i64: 3>, scalar_prefetch = 0 : i64, scratch_operands = 1 : i64, tpu.core_type = #tpu.core_type<tc>, window_params = [{transform_indices = @transform_0, window_bounds = array<i64: 1, 32, 1152>}, {transform_indices = @transform_1, window_bounds = array<i64: 1, 1152, 128>}, {transform_indices = @transform_2, window_bounds = array<i64: 1, 1, 128>}, {transform_indices = @transform_3, window_bounds = array<i64: 1, 32, 128>}]} {
    %c0_i32 = arith.constant 0 : i32
    %0 = arith.cmpi eq, %arg0, %c0_i32 : i32
    %1 = arith.extui %0 : i1 to i32
    %c0_i32_0 = arith.constant 0 : i32
    %2 = arith.cmpi ne, %1, %c0_i32_0 : i32
    scf.if %2 {
      %cst_12 = arith.constant 0.000000e+00 : f32
      %18 = vector.broadcast %cst_12 : f32 to vector<32x128xf32>
      %c0_13 = arith.constant 0 : index
      %c0_14 = arith.constant 0 : index
      %19 = vector.load %arg5[%c0_13, %c0_14] : memref<32x128xf32, #tpu.memory_space<vmem>>, vector<32x128xf32>
      tpu.vector_store %arg5[%c0_13, %c0_14], %18 {strides = array<i32>} : memref<32x128xf32, #tpu.memory_space<vmem>>, vector<32x128xf32>,
    } else {
    }
    %c0 = arith.constant 0 : index
    %c0_1 = arith.constant 0 : index
    %c0_2 = arith.constant 0 : index
    %3 = vector.load %arg1[%c0, %c0_1, %c0_2] : memref<1x32x1152xbf16, #tpu.memory_space<vmem>>, vector<1x32x1152xbf16>
    %4 = vector.shape_cast %3 : vector<1x32x1152xbf16> to vector<32x1152xbf16>
    %c0_3 = arith.constant 0 : index
    %c0_4 = arith.constant 0 : index
    %c0_5 = arith.constant 0 : index
    %5 = vector.load %arg2[%c0_3, %c0_4, %c0_5] : memref<1x1152x128xbf16, #tpu.memory_space<vmem>>, vector<1x1152x128xbf16>
    %6 = vector.shape_cast %5 : vector<1x1152x128xbf16> to vector<1152x128xbf16>
    %cst = arith.constant dense<0.000000e+00> : vector<32x128xf32>
    %7 = tpu.matmul %4, %6, %cst {dimension_numbers = #tpu.dot_dimension_numbers<[1], [0], [0], [1], [0, 0, 1, 1], [], []>} : vector<32x1152xbf16>, vector<1152x128xbf16>, vector<32x128xf32> -> vector<32x128xf32>
    %c0_6 = arith.constant 0 : index
    %c0_7 = arith.constant 0 : index
    %c0_8 = arith.constant 0 : index
    %8 = vector.load %arg3[%c0_6, %c0_7, %c0_8] : memref<1x1x128xf32, #tpu.memory_space<vmem>>, vector<1x1x128xf32>
    %9 = vector.shape_cast %8 : vector<1x1x128xf32> to vector<1x128xf32>
    %10 = vector.broadcast %9 : vector<1x128xf32> to vector<32x128xf32>
    %11 = arith.addf %7, %10 : vector<32x128xf32>
    %c2_i32 = arith.constant 2 : i32
    %12 = arith.cmpi slt, %arg0, %c2_i32 : i32
    %13 = arith.extui %12 : i1 to i32
    %c0_i32_9 = arith.constant 0 : i32
    %14 = arith.cmpi ne, %13, %c0_i32_9 : i32
    scf.if %14 {
      %cst_12 = arith.constant 0.000000e+00 : f32
      %18 = vector.broadcast %cst_12 : f32 to vector<32x128xf32>
      %19 = arith.maximumf %11, %18 : vector<32x128xf32>
      %c0_13 = arith.constant 0 : index
      %c0_14 = arith.constant 0 : index
      %c0_15 = arith.constant 0 : index
      %20 = vector.load %arg4[%c0_13, %c0_14, %c0_15] : memref<1x32x128xf32, #tpu.memory_space<vmem>>, vector<1x32x128xf32>
      %21 = vector.shape_cast %20 : vector<1x32x128xf32> to vector<32x128xf32>
      %22 = vector.shape_cast %19 : vector<32x128xf32> to vector<1x32x128xf32>
      tpu.vector_store %arg4[%c0_13, %c0_14, %c0_15], %22 {strides = array<i32>} : memref<1x32x128xf32, #tpu.memory_space<vmem>>, vector<1x32x128xf32>,
      %c0_16 = arith.constant 0 : index
      %c0_17 = arith.constant 0 : index
      %23 = vector.load %arg5[%c0_16, %c0_17] : memref<32x128xf32, #tpu.memory_space<vmem>>, vector<32x128xf32>
      %24 = arith.addf %23, %19 : vector<32x128xf32>
      %c0_18 = arith.constant 0 : index
      %c0_19 = arith.constant 0 : index
      %25 = vector.load %arg5[%c0_18, %c0_19] : memref<32x128xf32, #tpu.memory_space<vmem>>, vector<32x128xf32>
      tpu.vector_store %arg5[%c0_18, %c0_19], %24 {strides = array<i32>} : memref<32x128xf32, #tpu.memory_space<vmem>>, vector<32x128xf32>,
    } else {
    }
    %c2_i32_10 = arith.constant 2 : i32
    %15 = arith.cmpi eq, %arg0, %c2_i32_10 : i32
    %16 = arith.extui %15 : i1 to i32
    %c0_i32_11 = arith.constant 0 : i32
    %17 = arith.cmpi ne, %16, %c0_i32_11 : i32
    scf.if %17 {
      %c0_12 = arith.constant 0 : index
      %c0_13 = arith.constant 0 : index
      %18 = vector.load %arg5[%c0_12, %c0_13] : memref<32x128xf32, #tpu.memory_space<vmem>>, vector<32x128xf32>
      %19 = arith.addf %11, %18 : vector<32x128xf32>
      %cst_14 = arith.constant 0.000000e+00 : f32
      %20 = vector.broadcast %cst_14 : f32 to vector<32x128xf32>
      %21 = arith.maximumf %19, %20 : vector<32x128xf32>
      %c0_15 = arith.constant 0 : index
      %c0_16 = arith.constant 0 : index
      %c0_17 = arith.constant 0 : index
      %22 = vector.load %arg4[%c0_15, %c0_16, %c0_17] : memref<1x32x128xf32, #tpu.memory_space<vmem>>, vector<1x32x128xf32>
      %23 = vector.shape_cast %22 : vector<1x32x128xf32> to vector<32x128xf32>
      %24 = vector.shape_cast %21 : vector<32x128xf32> to vector<1x32x128xf32>
      tpu.vector_store %arg4[%c0_15, %c0_16, %c0_17], %24 {strides = array<i32>} : memref<1x32x128xf32, #tpu.memory_space<vmem>>, vector<1x32x128xf32>,
    } else {
    }
    return
  }
  func.func @transform_0(%arg0: i32) -> (i32, i32, i32) {
    %c0_i32 = arith.constant 0 : i32
    %c0_i32_0 = arith.constant 0 : i32
    %c0_i32_1 = arith.constant 0 : i32
    return %arg0, %c0_i32, %c0_i32_0 : i32, i32, i32
  }
  func.func @transform_1(%arg0: i32) -> (i32, i32, i32) {
    %c0_i32 = arith.constant 0 : i32
    %c0_i32_0 = arith.constant 0 : i32
    %c0_i32_1 = arith.constant 0 : i32
    return %arg0, %c0_i32, %c0_i32_0 : i32, i32, i32
  }
  func.func @transform_2(%arg0: i32) -> (i32, i32, i32) {
    %c0_i32 = arith.constant 0 : i32
    %c0_i32_0 = arith.constant 0 : i32
    %c0_i32_1 = arith.constant 0 : i32
    return %arg0, %c0_i32, %c0_i32_0 : i32, i32, i32
  }
  func.func @transform_3(%arg0: i32) -> (i32, i32, i32) {
    %c0_i32 = arith.constant 0 : i32
    %c0_i32_0 = arith.constant 0 : i32
    %c0_i32_1 = arith.constant 0 : i32
    return %arg0, %c0_i32, %c0_i32_0 : i32, i32, i32
  }
}

module attributes {stable_mosaic.version = 11 : i64} {
  func.func @_dec_layer_kernel(%arg0: i32, %arg1: memref<1x32x640xbf16, #tpu.memory_space<vmem>>, %arg2: memref<1x640x128xbf16, #tpu.memory_space<vmem>>, %arg3: memref<1x1x128xf32, #tpu.memory_space<vmem>>, %arg4: memref<1x32x128xf32, #tpu.memory_space<vmem>>, %arg5: memref<32x128xf32, #tpu.memory_space<vmem>>) attributes {dimension_semantics = [#tpu.dimension_semantics<arbitrary>], iteration_bounds = array<i64: 3>, scalar_prefetch = 0 : i64, scratch_operands = 1 : i64, tpu.core_type = #tpu.core_type<tc>, window_params = [{transform_indices = @transform_0, window_bounds = array<i64: 1, 32, 640>}, {transform_indices = @transform_1, window_bounds = array<i64: 1, 640, 128>}, {transform_indices = @transform_2, window_bounds = array<i64: 1, 1, 128>}, {transform_indices = @transform_3, window_bounds = array<i64: 1, 32, 128>}]} {
    %c0_i32 = arith.constant 0 : i32
    %0 = arith.cmpi eq, %arg0, %c0_i32 : i32
    %1 = arith.extui %0 : i1 to i32
    %c0_i32_0 = arith.constant 0 : i32
    %2 = arith.cmpi ne, %1, %c0_i32_0 : i32
    scf.if %2 {
      %cst_12 = arith.constant 0.000000e+00 : f32
      %18 = vector.broadcast %cst_12 : f32 to vector<32x128xf32>
      %c0_13 = arith.constant 0 : index
      %c0_14 = arith.constant 0 : index
      %19 = vector.load %arg5[%c0_13, %c0_14] : memref<32x128xf32, #tpu.memory_space<vmem>>, vector<32x128xf32>
      tpu.vector_store %arg5[%c0_13, %c0_14], %18 {strides = array<i32>} : memref<32x128xf32, #tpu.memory_space<vmem>>, vector<32x128xf32>,
    } else {
    }
    %c0 = arith.constant 0 : index
    %c0_1 = arith.constant 0 : index
    %c0_2 = arith.constant 0 : index
    %3 = vector.load %arg1[%c0, %c0_1, %c0_2] : memref<1x32x640xbf16, #tpu.memory_space<vmem>>, vector<1x32x640xbf16>
    %4 = vector.shape_cast %3 : vector<1x32x640xbf16> to vector<32x640xbf16>
    %c0_3 = arith.constant 0 : index
    %c0_4 = arith.constant 0 : index
    %c0_5 = arith.constant 0 : index
    %5 = vector.load %arg2[%c0_3, %c0_4, %c0_5] : memref<1x640x128xbf16, #tpu.memory_space<vmem>>, vector<1x640x128xbf16>
    %6 = vector.shape_cast %5 : vector<1x640x128xbf16> to vector<640x128xbf16>
    %cst = arith.constant dense<0.000000e+00> : vector<32x128xf32>
    %7 = tpu.matmul %4, %6, %cst {dimension_numbers = #tpu.dot_dimension_numbers<[1], [0], [0], [1], [0, 0, 1, 1], [], []>} : vector<32x640xbf16>, vector<640x128xbf16>, vector<32x128xf32> -> vector<32x128xf32>
    %c0_6 = arith.constant 0 : index
    %c0_7 = arith.constant 0 : index
    %c0_8 = arith.constant 0 : index
    %8 = vector.load %arg3[%c0_6, %c0_7, %c0_8] : memref<1x1x128xf32, #tpu.memory_space<vmem>>, vector<1x1x128xf32>
    %9 = vector.shape_cast %8 : vector<1x1x128xf32> to vector<1x128xf32>
    %10 = vector.broadcast %9 : vector<1x128xf32> to vector<32x128xf32>
    %11 = arith.addf %7, %10 : vector<32x128xf32>
    %c2_i32 = arith.constant 2 : i32
    %12 = arith.cmpi slt, %arg0, %c2_i32 : i32
    %13 = arith.extui %12 : i1 to i32
    %c0_i32_9 = arith.constant 0 : i32
    %14 = arith.cmpi ne, %13, %c0_i32_9 : i32
    scf.if %14 {
      %cst_12 = arith.constant 0.000000e+00 : f32
      %18 = vector.broadcast %cst_12 : f32 to vector<32x128xf32>
      %19 = arith.maximumf %11, %18 : vector<32x128xf32>
      %c0_13 = arith.constant 0 : index
      %c0_14 = arith.constant 0 : index
      %c0_15 = arith.constant 0 : index
      %20 = vector.load %arg4[%c0_13, %c0_14, %c0_15] : memref<1x32x128xf32, #tpu.memory_space<vmem>>, vector<1x32x128xf32>
      %21 = vector.shape_cast %20 : vector<1x32x128xf32> to vector<32x128xf32>
      %22 = vector.shape_cast %19 : vector<32x128xf32> to vector<1x32x128xf32>
      tpu.vector_store %arg4[%c0_13, %c0_14, %c0_15], %22 {strides = array<i32>} : memref<1x32x128xf32, #tpu.memory_space<vmem>>, vector<1x32x128xf32>,
      %c0_16 = arith.constant 0 : index
      %c0_17 = arith.constant 0 : index
      %23 = vector.load %arg5[%c0_16, %c0_17] : memref<32x128xf32, #tpu.memory_space<vmem>>, vector<32x128xf32>
      %24 = arith.addf %23, %19 : vector<32x128xf32>
      %c0_18 = arith.constant 0 : index
      %c0_19 = arith.constant 0 : index
      %25 = vector.load %arg5[%c0_18, %c0_19] : memref<32x128xf32, #tpu.memory_space<vmem>>, vector<32x128xf32>
      tpu.vector_store %arg5[%c0_18, %c0_19], %24 {strides = array<i32>} : memref<32x128xf32, #tpu.memory_space<vmem>>, vector<32x128xf32>,
    } else {
    }
    %c2_i32_10 = arith.constant 2 : i32
    %15 = arith.cmpi eq, %arg0, %c2_i32_10 : i32
    %16 = arith.extui %15 : i1 to i32
    %c0_i32_11 = arith.constant 0 : i32
    %17 = arith.cmpi ne, %16, %c0_i32_11 : i32
    scf.if %17 {
      %c0_12 = arith.constant 0 : index
      %c0_13 = arith.constant 0 : index
      %18 = vector.load %arg5[%c0_12, %c0_13] : memref<32x128xf32, #tpu.memory_space<vmem>>, vector<32x128xf32>
      %19 = arith.addf %11, %18 : vector<32x128xf32>
      %cst_14 = arith.constant 0.000000e+00 : f32
      %20 = vector.broadcast %cst_14 : f32 to vector<32x128xf32>
      %21 = arith.maximumf %19, %20 : vector<32x128xf32>
      %c0_15 = arith.constant 0 : index
      %c0_16 = arith.constant 0 : index
      %c0_17 = arith.constant 0 : index
      %22 = vector.load %arg4[%c0_15, %c0_16, %c0_17] : memref<1x32x128xf32, #tpu.memory_space<vmem>>, vector<1x32x128xf32>
      %23 = vector.shape_cast %22 : vector<1x32x128xf32> to vector<32x128xf32>
      %24 = vector.shape_cast %21 : vector<32x128xf32> to vector<1x32x128xf32>
      tpu.vector_store %arg4[%c0_15, %c0_16, %c0_17], %24 {strides = array<i32>} : memref<1x32x128xf32, #tpu.memory_space<vmem>>, vector<1x32x128xf32>,
    } else {
    }
    return
  }
  func.func @transform_0(%arg0: i32) -> (i32, i32, i32) {
    %c0_i32 = arith.constant 0 : i32
    %c0_i32_0 = arith.constant 0 : i32
    %c0_i32_1 = arith.constant 0 : i32
    return %arg0, %c0_i32, %c0_i32_0 : i32, i32, i32
  }
  func.func @transform_1(%arg0: i32) -> (i32, i32, i32) {
    %c0_i32 = arith.constant 0 : i32
    %c0_i32_0 = arith.constant 0 : i32
    %c0_i32_1 = arith.constant 0 : i32
    return %arg0, %c0_i32, %c0_i32_0 : i32, i32, i32
  }
  func.func @transform_2(%arg0: i32) -> (i32, i32, i32) {
    %c0_i32 = arith.constant 0 : i32
    %c0_i32_0 = arith.constant 0 : i32
    %c0_i32_1 = arith.constant 0 : i32
    return %arg0, %c0_i32, %c0_i32_0 : i32, i32, i32
  }
  func.func @transform_3(%arg0: i32) -> (i32, i32, i32) {
    %c0_i32 = arith.constant 0 : i32
    %c0_i32_0 = arith.constant 0 : i32
    %c0_i32_1 = arith.constant 0 : i32
    return %arg0, %c0_i32, %c0_i32_0 : i32, i32, i32
  }
}

module attributes {stable_mosaic.version = 11 : i64} {
  func.func @_dec_layer_kernel(%arg0: i32, %arg1: memref<1x32x384xbf16, #tpu.memory_space<vmem>>, %arg2: memref<1x384x128xbf16, #tpu.memory_space<vmem>>, %arg3: memref<1x1x128xf32, #tpu.memory_space<vmem>>, %arg4: memref<1x32x128xf32, #tpu.memory_space<vmem>>, %arg5: memref<32x128xf32, #tpu.memory_space<vmem>>) attributes {dimension_semantics = [#tpu.dimension_semantics<arbitrary>], iteration_bounds = array<i64: 3>, scalar_prefetch = 0 : i64, scratch_operands = 1 : i64, tpu.core_type = #tpu.core_type<tc>, window_params = [{transform_indices = @transform_0, window_bounds = array<i64: 1, 32, 384>}, {transform_indices = @transform_1, window_bounds = array<i64: 1, 384, 128>}, {transform_indices = @transform_2, window_bounds = array<i64: 1, 1, 128>}, {transform_indices = @transform_3, window_bounds = array<i64: 1, 32, 128>}]} {
    %c0_i32 = arith.constant 0 : i32
    %0 = arith.cmpi eq, %arg0, %c0_i32 : i32
    %1 = arith.extui %0 : i1 to i32
    %c0_i32_0 = arith.constant 0 : i32
    %2 = arith.cmpi ne, %1, %c0_i32_0 : i32
    scf.if %2 {
      %cst_12 = arith.constant 0.000000e+00 : f32
      %18 = vector.broadcast %cst_12 : f32 to vector<32x128xf32>
      %c0_13 = arith.constant 0 : index
      %c0_14 = arith.constant 0 : index
      %19 = vector.load %arg5[%c0_13, %c0_14] : memref<32x128xf32, #tpu.memory_space<vmem>>, vector<32x128xf32>
      tpu.vector_store %arg5[%c0_13, %c0_14], %18 {strides = array<i32>} : memref<32x128xf32, #tpu.memory_space<vmem>>, vector<32x128xf32>,
    } else {
    }
    %c0 = arith.constant 0 : index
    %c0_1 = arith.constant 0 : index
    %c0_2 = arith.constant 0 : index
    %3 = vector.load %arg1[%c0, %c0_1, %c0_2] : memref<1x32x384xbf16, #tpu.memory_space<vmem>>, vector<1x32x384xbf16>
    %4 = vector.shape_cast %3 : vector<1x32x384xbf16> to vector<32x384xbf16>
    %c0_3 = arith.constant 0 : index
    %c0_4 = arith.constant 0 : index
    %c0_5 = arith.constant 0 : index
    %5 = vector.load %arg2[%c0_3, %c0_4, %c0_5] : memref<1x384x128xbf16, #tpu.memory_space<vmem>>, vector<1x384x128xbf16>
    %6 = vector.shape_cast %5 : vector<1x384x128xbf16> to vector<384x128xbf16>
    %cst = arith.constant dense<0.000000e+00> : vector<32x128xf32>
    %7 = tpu.matmul %4, %6, %cst {dimension_numbers = #tpu.dot_dimension_numbers<[1], [0], [0], [1], [0, 0, 1, 1], [], []>} : vector<32x384xbf16>, vector<384x128xbf16>, vector<32x128xf32> -> vector<32x128xf32>
    %c0_6 = arith.constant 0 : index
    %c0_7 = arith.constant 0 : index
    %c0_8 = arith.constant 0 : index
    %8 = vector.load %arg3[%c0_6, %c0_7, %c0_8] : memref<1x1x128xf32, #tpu.memory_space<vmem>>, vector<1x1x128xf32>
    %9 = vector.shape_cast %8 : vector<1x1x128xf32> to vector<1x128xf32>
    %10 = vector.broadcast %9 : vector<1x128xf32> to vector<32x128xf32>
    %11 = arith.addf %7, %10 : vector<32x128xf32>
    %c2_i32 = arith.constant 2 : i32
    %12 = arith.cmpi slt, %arg0, %c2_i32 : i32
    %13 = arith.extui %12 : i1 to i32
    %c0_i32_9 = arith.constant 0 : i32
    %14 = arith.cmpi ne, %13, %c0_i32_9 : i32
    scf.if %14 {
      %cst_12 = arith.constant 0.000000e+00 : f32
      %18 = vector.broadcast %cst_12 : f32 to vector<32x128xf32>
      %19 = arith.maximumf %11, %18 : vector<32x128xf32>
      %c0_13 = arith.constant 0 : index
      %c0_14 = arith.constant 0 : index
      %c0_15 = arith.constant 0 : index
      %20 = vector.load %arg4[%c0_13, %c0_14, %c0_15] : memref<1x32x128xf32, #tpu.memory_space<vmem>>, vector<1x32x128xf32>
      %21 = vector.shape_cast %20 : vector<1x32x128xf32> to vector<32x128xf32>
      %22 = vector.shape_cast %19 : vector<32x128xf32> to vector<1x32x128xf32>
      tpu.vector_store %arg4[%c0_13, %c0_14, %c0_15], %22 {strides = array<i32>} : memref<1x32x128xf32, #tpu.memory_space<vmem>>, vector<1x32x128xf32>,
      %c0_16 = arith.constant 0 : index
      %c0_17 = arith.constant 0 : index
      %23 = vector.load %arg5[%c0_16, %c0_17] : memref<32x128xf32, #tpu.memory_space<vmem>>, vector<32x128xf32>
      %24 = arith.addf %23, %19 : vector<32x128xf32>
      %c0_18 = arith.constant 0 : index
      %c0_19 = arith.constant 0 : index
      %25 = vector.load %arg5[%c0_18, %c0_19] : memref<32x128xf32, #tpu.memory_space<vmem>>, vector<32x128xf32>
      tpu.vector_store %arg5[%c0_18, %c0_19], %24 {strides = array<i32>} : memref<32x128xf32, #tpu.memory_space<vmem>>, vector<32x128xf32>,
    } else {
    }
    %c2_i32_10 = arith.constant 2 : i32
    %15 = arith.cmpi eq, %arg0, %c2_i32_10 : i32
    %16 = arith.extui %15 : i1 to i32
    %c0_i32_11 = arith.constant 0 : i32
    %17 = arith.cmpi ne, %16, %c0_i32_11 : i32
    scf.if %17 {
      %c0_12 = arith.constant 0 : index
      %c0_13 = arith.constant 0 : index
      %18 = vector.load %arg5[%c0_12, %c0_13] : memref<32x128xf32, #tpu.memory_space<vmem>>, vector<32x128xf32>
      %19 = arith.addf %11, %18 : vector<32x128xf32>
      %cst_14 = arith.constant 0.000000e+00 : f32
      %20 = vector.broadcast %cst_14 : f32 to vector<32x128xf32>
      %21 = arith.maximumf %19, %20 : vector<32x128xf32>
      %c0_15 = arith.constant 0 : index
      %c0_16 = arith.constant 0 : index
      %c0_17 = arith.constant 0 : index
      %22 = vector.load %arg4[%c0_15, %c0_16, %c0_17] : memref<1x32x128xf32, #tpu.memory_space<vmem>>, vector<1x32x128xf32>
      %23 = vector.shape_cast %22 : vector<1x32x128xf32> to vector<32x128xf32>
      %24 = vector.shape_cast %21 : vector<32x128xf32> to vector<1x32x128xf32>
      tpu.vector_store %arg4[%c0_15, %c0_16, %c0_17], %24 {strides = array<i32>} : memref<1x32x128xf32, #tpu.memory_space<vmem>>, vector<1x32x128xf32>,
    } else {
    }
    return
  }
  func.func @transform_0(%arg0: i32) -> (i32, i32, i32) {
    %c0_i32 = arith.constant 0 : i32
    %c0_i32_0 = arith.constant 0 : i32
    %c0_i32_1 = arith.constant 0 : i32
    return %arg0, %c0_i32, %c0_i32_0 : i32, i32, i32
  }
  func.func @transform_1(%arg0: i32) -> (i32, i32, i32) {
    %c0_i32 = arith.constant 0 : i32
    %c0_i32_0 = arith.constant 0 : i32
    %c0_i32_1 = arith.constant 0 : i32
    return %arg0, %c0_i32, %c0_i32_0 : i32, i32, i32
  }
  func.func @transform_2(%arg0: i32) -> (i32, i32, i32) {
    %c0_i32 = arith.constant 0 : i32
    %c0_i32_0 = arith.constant 0 : i32
    %c0_i32_1 = arith.constant 0 : i32
    return %arg0, %c0_i32, %c0_i32_0 : i32, i32, i32
  }
  func.func @transform_3(%arg0: i32) -> (i32, i32, i32) {
    %c0_i32 = arith.constant 0 : i32
    %c0_i32_0 = arith.constant 0 : i32
    %c0_i32_1 = arith.constant 0 : i32
    return %arg0, %c0_i32, %c0_i32_0 : i32, i32, i32
  }
}

module attributes {stable_mosaic.version = 11 : i64} {
  func.func @_dec_final_kernel(%arg0: i32, %arg1: memref<1x32x256xbf16, #tpu.memory_space<vmem>>, %arg2: memref<1x256x128xbf16, #tpu.memory_space<vmem>>, %arg3: memref<1x1x128xf32, #tpu.memory_space<vmem>>, %arg4: memref<1x32x128xf32, #tpu.memory_space<vmem>>) attributes {dimension_semantics = [#tpu.dimension_semantics<parallel>], iteration_bounds = array<i64: 3>, scalar_prefetch = 0 : i64, scratch_operands = 0 : i64, tpu.core_type = #tpu.core_type<tc>, window_params = [{transform_indices = @transform_0, window_bounds = array<i64: 1, 32, 256>}, {transform_indices = @transform_1, window_bounds = array<i64: 1, 256, 128>}, {transform_indices = @transform_2, window_bounds = array<i64: 1, 1, 128>}, {transform_indices = @transform_3, window_bounds = array<i64: 1, 32, 128>}]} {
    %c0 = arith.constant 0 : index
    %c0_0 = arith.constant 0 : index
    %c0_1 = arith.constant 0 : index
    %0 = vector.load %arg1[%c0, %c0_0, %c0_1] : memref<1x32x256xbf16, #tpu.memory_space<vmem>>, vector<1x32x256xbf16>
    %1 = vector.shape_cast %0 : vector<1x32x256xbf16> to vector<32x256xbf16>
    %c0_2 = arith.constant 0 : index
    %c0_3 = arith.constant 0 : index
    %c0_4 = arith.constant 0 : index
    %2 = vector.load %arg2[%c0_2, %c0_3, %c0_4] : memref<1x256x128xbf16, #tpu.memory_space<vmem>>, vector<1x256x128xbf16>
    %3 = vector.shape_cast %2 : vector<1x256x128xbf16> to vector<256x128xbf16>
    %cst = arith.constant dense<0.000000e+00> : vector<32x128xf32>
    %4 = tpu.matmul %1, %3, %cst {dimension_numbers = #tpu.dot_dimension_numbers<[1], [0], [0], [1], [0, 0, 1, 1], [], []>} : vector<32x256xbf16>, vector<256x128xbf16>, vector<32x128xf32> -> vector<32x128xf32>
    %c0_5 = arith.constant 0 : index
    %c0_6 = arith.constant 0 : index
    %c0_7 = arith.constant 0 : index
    %5 = vector.load %arg3[%c0_5, %c0_6, %c0_7] : memref<1x1x128xf32, #tpu.memory_space<vmem>>, vector<1x1x128xf32>
    %6 = vector.shape_cast %5 : vector<1x1x128xf32> to vector<1x128xf32>
    %7 = vector.broadcast %6 : vector<1x128xf32> to vector<32x128xf32>
    %8 = arith.addf %4, %7 : vector<32x128xf32>
    %9 = arith.negf %8 : vector<32x128xf32>
    %10 = math.exp %9 : vector<32x128xf32>
    %cst_8 = arith.constant 1.000000e+00 : f32
    %11 = vector.broadcast %cst_8 : f32 to vector<32x128xf32>
    %12 = arith.addf %11, %10 : vector<32x128xf32>
    %13 = arith.divf %11, %12 : vector<32x128xf32>
    %c0_9 = arith.constant 0 : index
    %c0_10 = arith.constant 0 : index
    %c0_11 = arith.constant 0 : index
    %14 = vector.load %arg4[%c0_9, %c0_10, %c0_11] : memref<1x32x128xf32, #tpu.memory_space<vmem>>, vector<1x32x128xf32>
    %15 = vector.shape_cast %14 : vector<1x32x128xf32> to vector<32x128xf32>
    %16 = vector.shape_cast %13 : vector<32x128xf32> to vector<1x32x128xf32>
    tpu.vector_store %arg4[%c0_9, %c0_10, %c0_11], %16 {strides = array<i32>} : memref<1x32x128xf32, #tpu.memory_space<vmem>>, vector<1x32x128xf32>,
    return
  }
  func.func @transform_0(%arg0: i32) -> (i32, i32, i32) {
    %c0_i32 = arith.constant 0 : i32
    %c0_i32_0 = arith.constant 0 : i32
    %c0_i32_1 = arith.constant 0 : i32
    return %arg0, %c0_i32, %c0_i32_0 : i32, i32, i32
  }
  func.func @transform_1(%arg0: i32) -> (i32, i32, i32) {
    %c0_i32 = arith.constant 0 : i32
    %c0_i32_0 = arith.constant 0 : i32
    %c0_i32_1 = arith.constant 0 : i32
    return %arg0, %c0_i32, %c0_i32_0 : i32, i32, i32
  }
  func.func @transform_2(%arg0: i32) -> (i32, i32, i32) {
    %c0_i32 = arith.constant 0 : i32
    %c0_i32_0 = arith.constant 0 : i32
    %c0_i32_1 = arith.constant 0 : i32
    return %arg0, %c0_i32, %c0_i32_0 : i32, i32, i32
  }
  func.func @transform_3(%arg0: i32) -> (i32, i32, i32) {
    %c0_i32 = arith.constant 0 : i32
    %c0_i32_0 = arith.constant 0 : i32
    %c0_i32_1 = arith.constant 0 : i32
    return %arg0, %c0_i32, %c0_i32_0 : i32, i32, i32
  }
}

</mosaic_0001>

<llo_original>
// kernel: human_aware_forward.8
$region0: #{human_aware_forward.8}
  #allocation0 [shape = 'u32[]', space=smem, size = 0x4, offset = 0x4, fixed_abs, tag = 'smem constant byte address 0x4 - core index']
  #allocation1 [shape = 'u32[72,128]{1,0:T(1,128)}', space=vmem, size = 0x9000, scoped, tag = 'internal scratch']
  %s0 = inlined_call_operand.vmem [shape: bf16[32,128], index: 0, kind: input, shape index: {}]
  %s1 = inlined_call_operand.vmem [shape: bf16[128,128], index: 1, kind: input, shape index: {}]
  %s2 = inlined_call_operand.vmem [shape: f32[1,128], index: 2, kind: input, shape index: {}]
  %s3 = inlined_call_operand.vmem [shape: f32[32,128], index: 3, kind: output, shape index: {}]
  %s4 = sld [smem:[#allocation0]]
  $region22: #{human_aware_forward.8} parent=0
    _
  %s6 = ssub.s32 1, %s4
  %s7 = scalar_select 0, %s6, %s4
  // Predicated region
  $region2: #{human_aware_forward.8} parent=0 // pred_check
    _
  $region3: #{human_aware_forward.8} parent=0 // pred_check_branch
    %9 = sbr.rel (0) target = $region5
  $region4: #{human_aware_forward.8} parent=0 // pred_region
    _
  $region5: #{human_aware_forward.8} parent=0 // pred_fallthru
    _
  // Predicated region
  $region6: #{human_aware_forward.8} parent=0 // pred_check
    _
  $region7: #{human_aware_forward.8} parent=0 // pred_check_branch
    %11 = sbr.rel (0) target = $region9
  $region8: #{human_aware_forward.8} parent=0 // pred_region
    _
  $region9: #{human_aware_forward.8} parent=0 // pred_fallthru
    _
  // Predicated region
  $region10: #{human_aware_forward.8} parent=0 // pred_check
    _
  $region11: #{human_aware_forward.8} parent=0 // pred_check_branch
    %13 = sbr.rel (0) target = $region13
  $region12: #{human_aware_forward.8} parent=0 // pred_region
    _
  $region13: #{human_aware_forward.8} parent=0 // pred_fallthru
    _
  %v14 = vld [vmem:[%s0] sm:$0xf]
  %v15 = vld [vmem:[%s0 + $0x4] sm:$0xf]
  %v16 = vld [vmem:[%s0 + $0x8] sm:$0xf]
  %v17 = vld [vmem:[%s0 + $0xc] sm:$0xf]
  %v18 = vld [vmem:[%s1] sm:$0xf]
  %v19 = vld [vmem:[%s1 + $0x4] sm:$0xf]
  %v20 = vld [vmem:[%s1 + $0x8] sm:$0xf]
  %v21 = vld [vmem:[%s1 + $0xc] sm:$0xf]
  %v22 = vld [vmem:[%s1 + $0x10] sm:$0xf]
  %v23 = vld [vmem:[%s1 + $0x14] sm:$0xf]
  %v24 = vld [vmem:[%s1 + $0x18] sm:$0xf]
  %v25 = vld [vmem:[%s1 + $0x1c] sm:$0xf]
  %v26 = vld [vmem:[%s1 + $0x20] sm:$0xf]
  %v27 = vld [vmem:[%s1 + $0x24] sm:$0xf]
  %v28 = vld [vmem:[%s1 + $0x28] sm:$0xf]
  %v29 = vld [vmem:[%s1 + $0x2c] sm:$0xf]
  %v30 = vld [vmem:[%s1 + $0x30] sm:$0xf]
  %v31 = vld [vmem:[%s1 + $0x34] sm:$0xf]
  %v32 = vld [vmem:[%s1 + $0x38] sm:$0xf]
  %v33 = vld [vmem:[%s1 + $0x3c] sm:$0xf]
  %v34 = vld [vmem:[%s2] sm:$0x1]
  %v36 = vperm.slane %v34, 0
  %v42 = vunpack.c.l.b16 %v14
  %v43 = vunpack.c.l.b16 %v15
  %v44 = vunpack.c.l.b16 %v16
  %v45 = vunpack.c.l.b16 %v17
  %v46 = vpack.c.b16 %v43, %v42
  %v47 = vpack.c.b16 %v45, %v44
  %v66 = vunpack.c.l.b16 %v18
  %v67 = vunpack.c.l.b16 %v19
  %v68 = vunpack.c.l.b16 %v20
  %v69 = vunpack.c.l.b16 %v21
  %v70 = vunpack.c.l.b16 %v22
  %v71 = vunpack.c.l.b16 %v23
  %v72 = vunpack.c.l.b16 %v24
  %v73 = vunpack.c.l.b16 %v25
  %v74 = vunpack.c.l.b16 %v26
  %v75 = vunpack.c.l.b16 %v27
  %v76 = vunpack.c.l.b16 %v28
  %v77 = vunpack.c.l.b16 %v29
  %v78 = vunpack.c.l.b16 %v30
  %v79 = vunpack.c.l.b16 %v31
  %v80 = vunpack.c.l.b16 %v32
  %v81 = vunpack.c.l.b16 %v33
  %v82 = vpack.c.b16 %v67, %v66
  %v83 = vpack.c.b16 %v69, %v68
  %v84 = vpack.c.b16 %v71, %v70
  %v85 = vpack.c.b16 %v73, %v72
  %v86 = vpack.c.b16 %v75, %v74
  %v87 = vpack.c.b16 %v77, %v76
  %v88 = vpack.c.b16 %v79, %v78
  %v89 = vpack.c.b16 %v81, %v80
  %98 = vmatpush.bf16.msra.mxu0 %v89
  %99 = vmatpush.bf16.msra.mxu0 %v88
  %100 = vmatpush.bf16.msra.mxu0 %v87
  %101 = vmatpush.bf16.msra.mxu0 %v86
  %102 = vmatpush.bf16.msra.mxu0 %v85
  %103 = vmatpush.bf16.msra.mxu0 %v84
  %104 = vmatpush.bf16.msra.mxu0 %v83
  %105 = vmatpush.bf16.msra.mxu0 %v82
  %106 = vmatmul.bf16.gmra.mxu0 %v46
  %v107 = vpop.f32.mrf.mxu0
  %v108 = vadd.f32 %v36, %v107
  %v109 = vpop.f32.mrf.mxu0
  %v110 = vadd.f32 %v36, %v109
  %111 = vmatmul.bf16.gmra.mxu0 %v47
  %v112 = vpop.f32.mrf.mxu0
  %v113 = vadd.f32 %v36, %v112
  %v114 = vpop.f32.mrf.mxu0
  %v115 = vadd.f32 %v36, %v114
  %116 = vdwg.mxu0
  %117 = vst [vmem:[%s3] sm:$0xff] %v108
  %118 = vst [vmem:[%s3 + $0x8] sm:$0xff] %v110
  %119 = vst [vmem:[%s3 + $0x10] sm:$0xff] %v113
  %120 = vst [vmem:[%s3 + $0x18] sm:$0xff] %v115
  // Predicated region
  $region14: #{human_aware_forward.8} parent=0 // pred_check
    _
  $region15: #{human_aware_forward.8} parent=0 // pred_check_branch
    %122 = sbr.rel (0) target = $region17
  $region16: #{human_aware_forward.8} parent=0 // pred_region
    _
  $region17: #{human_aware_forward.8} parent=0 // pred_fallthru
    _
  // Predicated region
  $region18: #{human_aware_forward.8} parent=0 // pred_check
    _
  $region19: #{human_aware_forward.8} parent=0 // pred_check_branch
    %124 = sbr.rel (0) target = $region21
  $region20: #{human_aware_forward.8} parent=0 // pred_region
    _
  $region21: #{human_aware_forward.8} parent=0 // pred_fallthru
    _

// kernel: human_aware_forward.9
$region0: #{human_aware_forward.9}
  #allocation0 [shape = 'u32[]', space=smem, size = 0x4, offset = 0x4, fixed_abs, tag = 'smem constant byte address 0x4 - core index']
  #allocation1 [shape = 'u32[72,128]{1,0:T(1,128)}', space=vmem, size = 0x9000, scoped, tag = 'internal scratch']
  %s0 = inlined_call_operand.vmem [shape: bf16[640,128], index: 0, kind: input, shape index: {}]
  %s1 = inlined_call_operand.vmem [shape: bf16[128,128], index: 1, kind: input, shape index: {}]
  %s2 = inlined_call_operand.vmem [shape: f32[1,128], index: 2, kind: input, shape index: {}]
  %s3 = inlined_call_operand.vmem [shape: f32[640,128], index: 3, kind: output, shape index: {}]
  %s4 = sld [smem:[#allocation0]]
  $region45: #{human_aware_forward.9} parent=0
    _
  %s6 = ssub.s32 1, %s4
  %s7 = scalar_select 0, %s6, %s4
  loop: start=0, step=1, limit=7
  $region2: #{human_aware_forward.9} parent=0 // loop_pre_header
    _
  $region3: #{human_aware_forward.9} parent=0 // loop_header
    %s9 = sphi 0, %s13
    %p10 = scmp.ge.s32.totalorder %s9, 7
    %s19 = sphi 0, %s21
    %s22 = sphi 0, %s19
    %s23 = sphi 0, %s22
    %s39 = sphi 0, %s23
    %s43 = sphi 0, %s43
    %s45 = sphi 0, %s43
    %s46 = sphi 0, %s45
    %s60 = sphi 0, %s46
    %s64 = sphi 0, %s64
    %s66 = sphi 0, %s64
    %s67 = sphi 0, %s66
    %s81 = sphi 0, %s67
    %s87 = sphi 0, %s89
    %s90 = sphi 0, %s87
    %s91 = sphi 0, %s90
    %s107 = sphi 0, %s91
  $region4: #{human_aware_forward.9} parent=0 // loop_header_branch
    %12 = sbr.rel (%p10) target = $region8
  $region5: #{human_aware_forward.9} parent=0 // loop_body
    %s14 = ssub.s32 %s9, 1
    %s15 = ssub.s32 %s9, 2
    %s16 = sadd.s32 %s9, 1
    %s17 = ssub.s32 %s9, %s16
    %p18 = scmp.eq.s32.totalorder %s17, 0
    %s20 = sadd.s32 %s19, 1
    %s21 = scalar_select %p18, %s19, %s20
    %p24 = pneg %p18
    %p25 = scmp.eq.s32.totalorder %s9, 4
    %p26 = por %p24, %p25
    %p27 = scmp.ne.s32.totalorder %s19, %s22
    %p28 = scmp.eq.s32.totalorder %s9, 0
    %p29 = por %p27, %p28
    %p30 = scmp.ne.s32.totalorder %s19, %s22
    %p31 = scmp.eq.s32.totalorder %s14, 4
    %p32 = por %p30, %p31
    %p33 = scmp.ne.s32.totalorder %s22, %s23
    %p34 = scmp.eq.s32.totalorder %s14, 0
    %p35 = por %p33, %p34
    %p36 = scmp.ne.s32.totalorder %s22, %s23
    %p37 = scmp.eq.s32.totalorder %s15, 4
    %p38 = por %p36, %p37
    %p40 = scmp.ne.s32.totalorder %s23, %s39
    %p41 = scmp.eq.s32.totalorder %s15, 0
    %p42 = por %p40, %p41
    %s44 = sadd.s32 %s43, 1
    %p47 = scmp.eq.s32.totalorder %s9, 4
    %p48 = scmp.ne.s32.totalorder %s43, %s45
    %p49 = scmp.eq.s32.totalorder %s9, 0
    %p50 = por %p48, %p49
    %p51 = scmp.ne.s32.totalorder %s43, %s45
    %p52 = scmp.eq.s32.totalorder %s14, 4
    %p53 = por %p51, %p52
    %p54 = scmp.ne.s32.totalorder %s45, %s46
    %p55 = scmp.eq.s32.totalorder %s14, 0
    %p56 = por %p54, %p55
    %p57 = scmp.ne.s32.totalorder %s45, %s46
    %p58 = scmp.eq.s32.totalorder %s15, 4
    %p59 = por %p57, %p58
    %p61 = scmp.ne.s32.totalorder %s46, %s60
    %p62 = scmp.eq.s32.totalorder %s15, 0
    %p63 = por %p61, %p62
    %s65 = sadd.s32 %s64, 1
    %p68 = scmp.eq.s32.totalorder %s9, 4
    %p69 = scmp.ne.s32.totalorder %s64, %s66
    %p70 = scmp.eq.s32.totalorder %s9, 0
    %p71 = por %p69, %p70
    %p72 = scmp.ne.s32.totalorder %s64, %s66
    %p73 = scmp.eq.s32.totalorder %s14, 4
    %p74 = por %p72, %p73
    %p75 = scmp.ne.s32.totalorder %s66, %s67
    %p76 = scmp.eq.s32.totalorder %s14, 0
    %p77 = por %p75, %p76
    %p78 = scmp.ne.s32.totalorder %s66, %s67
    %p79 = scmp.eq.s32.totalorder %s15, 4
    %p80 = por %p78, %p79
    %p82 = scmp.ne.s32.totalorder %s67, %s81
    %p83 = scmp.eq.s32.totalorder %s15, 0
    %p84 = por %p82, %p83
    %s85 = ssub.s32 %s9, %s16
    %p86 = scmp.eq.s32.totalorder %s85, 0
    %s88 = sadd.s32 %s87, 1
    %s89 = scalar_select %p86, %s87, %s88
    %p92 = pneg %p86
    %p93 = scmp.eq.s32.totalorder %s9, 4
    %p94 = por %p92, %p93
    %p95 = scmp.ne.s32.totalorder %s87, %s90
    %p96 = scmp.eq.s32.totalorder %s9, 0
    %p97 = por %p95, %p96
    %p98 = scmp.ne.s32.totalorder %s87, %s90
    %p99 = scmp.eq.s32.totalorder %s14, 4
    %p100 = por %p98, %p99
    %p101 = scmp.ne.s32.totalorder %s90, %s91
    %p102 = scmp.eq.s32.totalorder %s14, 0
    %p103 = por %p101, %p102
    %p104 = scmp.ne.s32.totalorder %s90, %s91
    %p105 = scmp.eq.s32.totalorder %s15, 4
    %p106 = por %p104, %p105
    %p108 = scmp.ne.s32.totalorder %s91, %s107
    %p109 = scmp.eq.s32.totalorder %s15, 0
    %p110 = por %p108, %p109
    %p111 = scmp.le.s32.totalorder 1, %s9
    %p112 = scmp.lt.s32.totalorder %s9, 6
    %p113 = pnand %p111, %p112
    %p114 = pneg %p113
    // Predicated region
    $region9: #{human_aware_forward.9} parent=5 // pred_check
      _
    $region10: #{human_aware_forward.9} parent=5 // pred_check_branch
      %116 = sbr.rel (%p113) target = $region12
    $region11: #{human_aware_forward.9} parent=5 // pred_region
      %s117 = ssub.s32 %s9, 1
      // Predicated region
      $region13: #{human_aware_forward.9} parent=11 // pred_check
        %p118 = pneg %p56
      $region14: #{human_aware_forward.9} parent=11 // pred_check_branch
        %120 = sbr.rel (%p118) target = $region16
      $region15: #{human_aware_forward.9} parent=11 // pred_region
        _
      $region16: #{human_aware_forward.9} parent=11 // pred_fallthru
        _
      // Predicated region
      $region17: #{human_aware_forward.9} parent=11 // pred_check
        %p121 = pneg %p77
      $region18: #{human_aware_forward.9} parent=11 // pred_check_branch
        %123 = sbr.rel (%p121) target = $region20
      $region19: #{human_aware_forward.9} parent=11 // pred_region
        _
      $region20: #{human_aware_forward.9} parent=11 // pred_fallthru
        _
    $region12: #{human_aware_forward.9} parent=5 // pred_fallthru
      _
    %p124 = scmp.lt.s32.totalorder %s9, 5
    // Predicated region
    $region21: #{human_aware_forward.9} parent=5 // pred_check
      %p125 = pneg %p124
    $region22: #{human_aware_forward.9} parent=5 // pred_check_branch
      %127 = sbr.rel (%p125) target = $region24
    $region23: #{human_aware_forward.9} parent=5 // pred_region
      // Predicated region
      $region25: #{human_aware_forward.9} parent=23 // pred_check
        %p128 = pneg %p29
      $region26: #{human_aware_forward.9} parent=23 // pred_check_branch
        %130 = sbr.rel (%p128) target = $region28
      $region27: #{human_aware_forward.9} parent=23 // pred_region
        %s131 = smul.u32 16, %s9
        %p132 = scmp.lt.s32.totalorder %s131, 79
        %s133 = scalar_select %p132, %s131, 79
        %s134 = smul.addr %s133, 4
        %s135 = scalar_lea.vmem %s0, %s134
        %s136 = smul.u32 16, %s9
      $region28: #{human_aware_forward.9} parent=23 // pred_fallthru
        _
    $region24: #{human_aware_forward.9} parent=5 // pred_fallthru
      _
    %p137 = scmp.le.s32.totalorder 1, %s9
    %p138 = scmp.lt.s32.totalorder %s9, 6
    %p139 = pnand %p137, %p138
    %p140 = pneg %p139
    // Predicated region
    $region29: #{human_aware_forward.9} parent=5 // pred_check
      _
    $region30: #{human_aware_forward.9} parent=5 // pred_check_branch
      %142 = sbr.rel (%p139) target = $region32
    $region31: #{human_aware_forward.9} parent=5 // pred_region
      %s143 = ssub.s32 %s9, 1
      %s144 = smul.u32 16, %s14
      %p145 = scmp.lt.s32.totalorder %s144, 79
      %s146 = scalar_select %p145, %s144, 79
      %s147 = smul.addr %s146, 4
      %s148 = scalar_lea.vmem %s0, %s147
      %p149 = pneg %p35
      %p150 = pneg %p32
      %p151 = pneg %p56
      %p152 = pneg %p53
      %p153 = pneg %p77
      %p154 = pneg %p74
      %p155 = pneg %p103
      %p156 = pneg %p100
      %s157 = smul.u32 16, %s14
      %p158 = scmp.lt.s32.totalorder %s157, 79
      %s159 = scalar_select %p158, %s157, 79
      %s160 = smul.addr %s159, 8
      %s161 = scalar_lea.vmem %s3, %s160
      %s162 = smul.u32 16, %s14
      %p163 = scmp.lt.s32.totalorder %s162, 79
      %s164 = scalar_select %p163, %s162, 79
      %s165 = smul.addr %s164, 4
      %s166 = scalar_lea.vmem %s0, %s165
      %s167 = smul.u32 16, %s14
      %s168 = smul.u32 16, %s14
      %p169 = scmp.lt.s32.totalorder %s168, 79
      %s170 = scalar_select %p169, %s168, 79
      %s171 = smul.addr %s170, 8
      %s172 = scalar_lea.vmem %s3, %s171
      %s173 = smul.u32 16, %s14
      %v174 = vld [vmem:[%s166] sm:$0xf]
      %v175 = vld [vmem:[%s166 + $0x4] sm:$0xf]
      %v176 = vld [vmem:[%s166 + $0x8] sm:$0xf]
      %v177 = vld [vmem:[%s166 + $0xc] sm:$0xf]
      %v178 = vld [vmem:[%s166 + $0x10] sm:$0xf]
      %v179 = vld [vmem:[%s166 + $0x14] sm:$0xf]
      %v180 = vld [vmem:[%s166 + $0x18] sm:$0xf]
      %v181 = vld [vmem:[%s166 + $0x1c] sm:$0xf]
      %v182 = vld [vmem:[%s166 + $0x20] sm:$0xf]
      %v183 = vld [vmem:[%s166 + $0x24] sm:$0xf]
      %v184 = vld [vmem:[%s166 + $0x28] sm:$0xf]
      %v185 = vld [vmem:[%s166 + $0x2c] sm:$0xf]
      %v186 = vld [vmem:[%s166 + $0x30] sm:$0xf]
      %v187 = vld [vmem:[%s166 + $0x34] sm:$0xf]
      %v188 = vld [vmem:[%s166 + $0x38] sm:$0xf]
      %v189 = vld [vmem:[%s166 + $0x3c] sm:$0xf]
      %v190 = vld [vmem:[%s1] sm:$0xf]
      %v191 = vld [vmem:[%s1 + $0x4] sm:$0xf]
      %v192 = vld [vmem:[%s1 + $0x8] sm:$0xf]
      %v193 = vld [vmem:[%s1 + $0xc] sm:$0xf]
      %v194 = vld [vmem:[%s1 + $0x10] sm:$0xf]
      %v195 = vld [vmem:[%s1 + $0x14] sm:$0xf]
      %v196 = vld [vmem:[%s1 + $0x18] sm:$0xf]
      %v197 = vld [vmem:[%s1 + $0x1c] sm:$0xf]
      %v198 = vld [vmem:[%s1 + $0x20] sm:$0xf]
      %v199 = vld [vmem:[%s1 + $0x24] sm:$0xf]
      %v200 = vld [vmem:[%s1 + $0x28] sm:$0xf]
      %v201 = vld [vmem:[%s1 + $0x2c] sm:$0xf]
      %v202 = vld [vmem:[%s1 + $0x30] sm:$0xf]
      %v203 = vld [vmem:[%s1 + $0x34] sm:$0xf]
      %v204 = vld [vmem:[%s1 + $0x38] sm:$0xf]
      %v205 = vld [vmem:[%s1 + $0x3c] sm:$0xf]
      %v206 = vld [vmem:[%s2] sm:$0x1]
      %v208 = vperm.slane %v206, 0
      %v226 = vunpack.c.l.b16 %v174
      %v227 = vunpack.c.l.b16 %v175
      %v228 = vunpack.c.l.b16 %v176
      %v229 = vunpack.c.l.b16 %v177
      %v230 = vunpack.c.l.b16 %v178
      %v231 = vunpack.c.l.b16 %v179
      %v232 = vunpack.c.l.b16 %v180
      %v233 = vunpack.c.l.b16 %v181
      %v234 = vunpack.c.l.b16 %v182
      %v235 = vunpack.c.l.b16 %v183
      %v236 = vunpack.c.l.b16 %v184
      %v237 = vunpack.c.l.b16 %v185
      %v238 = vunpack.c.l.b16 %v186
      %v239 = vunpack.c.l.b16 %v187
      %v240 = vunpack.c.l.b16 %v188
      %v241 = vunpack.c.l.b16 %v189
      %v242 = vpack.c.b16 %v227, %v226
      %v243 = vpack.c.b16 %v229, %v228
      %v244 = vpack.c.b16 %v231, %v230
      %v245 = vpack.c.b16 %v233, %v232
      %v246 = vpack.c.b16 %v235, %v234
      %v247 = vpack.c.b16 %v237, %v236
      %v248 = vpack.c.b16 %v239, %v238
      %v249 = vpack.c.b16 %v241, %v240
      %v274 = vunpack.c.l.b16 %v190
      %v275 = vunpack.c.l.b16 %v191
      %v276 = vunpack.c.l.b16 %v192
      %v277 = vunpack.c.l.b16 %v193
      %v278 = vunpack.c.l.b16 %v194
      %v279 = vunpack.c.l.b16 %v195
      %v280 = vunpack.c.l.b16 %v196
      %v281 = vunpack.c.l.b16 %v197
      %v282 = vunpack.c.l.b16 %v198
      %v283 = vunpack.c.l.b16 %v199
      %v284 = vunpack.c.l.b16 %v200
      %v285 = vunpack.c.l.b16 %v201
      %v286 = vunpack.c.l.b16 %v202
      %v287 = vunpack.c.l.b16 %v203
      %v288 = vunpack.c.l.b16 %v204
      %v289 = vunpack.c.l.b16 %v205
      %v290 = vpack.c.b16 %v275, %v274
      %v291 = vpack.c.b16 %v277, %v276
      %v292 = vpack.c.b16 %v279, %v278
      %v293 = vpack.c.b16 %v281, %v280
      %v294 = vpack.c.b16 %v283, %v282
      %v295 = vpack.c.b16 %v285, %v284
      %v296 = vpack.c.b16 %v287, %v286
      %v297 = vpack.c.b16 %v289, %v288
      %306 = vmatpush.bf16.msra.mxu0 %v297
      %307 = vmatpush.bf16.msra.mxu0 %v296
      %308 = vmatpush.bf16.msra.mxu0 %v295
      %309 = vmatpush.bf16.msra.mxu0 %v294
      %310 = vmatpush.bf16.msra.mxu0 %v293
      %311 = vmatpush.bf16.msra.mxu0 %v292
      %312 = vmatpush.bf16.msra.mxu0 %v291
      %313 = vmatpush.bf16.msra.mxu0 %v290
      %314 = vmatmul.bf16.gmra.mxu0 %v242
      %v315 = vpop.f32.mrf.mxu0
      %v316 = vadd.f32 %v208, %v315
      %v317 = vpop.f32.mrf.mxu0
      %v318 = vadd.f32 %v208, %v317
      %319 = vmatmul.bf16.gmra.mxu0 %v243
      %v320 = vpop.f32.mrf.mxu0
      %v321 = vadd.f32 %v208, %v320
      %v322 = vpop.f32.mrf.mxu0
      %v323 = vadd.f32 %v208, %v322
      %324 = vmatmul.bf16.gmra.mxu0 %v244
      %v325 = vpop.f32.mrf.mxu0
      %v326 = vadd.f32 %v208, %v325
      %v327 = vpop.f32.mrf.mxu0
      %v328 = vadd.f32 %v208, %v327
      %329 = vmatmul.bf16.gmra.mxu0 %v245
      %v330 = vpop.f32.mrf.mxu0
      %v331 = vadd.f32 %v208, %v330
      %v332 = vpop.f32.mrf.mxu0
      %v333 = vadd.f32 %v208, %v332
      %334 = vmatmul.bf16.gmra.mxu0 %v246
      %v335 = vpop.f32.mrf.mxu0
      %v336 = vadd.f32 %v208, %v335
      %v337 = vpop.f32.mrf.mxu0
      %v338 = vadd.f32 %v208, %v337
      %339 = vmatmul.bf16.gmra.mxu0 %v247
      %v340 = vpop.f32.mrf.mxu0
      %v341 = vadd.f32 %v208, %v340
      %v342 = vpop.f32.mrf.mxu0
      %v343 = vadd.f32 %v208, %v342
      %344 = vmatmul.bf16.gmra.mxu0 %v248
      %v345 = vpop.f32.mrf.mxu0
      %v346 = vadd.f32 %v208, %v345
      %v347 = vpop.f32.mrf.mxu0
      %v348 = vadd.f32 %v208, %v347
      %349 = vmatmul.bf16.gmra.mxu0 %v249
      %v350 = vpop.f32.mrf.mxu0
      %v351 = vadd.f32 %v208, %v350
      %v352 = vpop.f32.mrf.mxu0
      %v353 = vadd.f32 %v208, %v352
      %354 = vdwg.mxu0
      %v355 = vmax.f32 %v316, 0.0
      %v356 = vmax.f32 %v318, 0.0
      %v357 = vmax.f32 %v321, 0.0
      %v358 = vmax.f32 %v323, 0.0
      %v359 = vmax.f32 %v326, 0.0
      %v360 = vmax.f32 %v328, 0.0
      %v361 = vmax.f32 %v331, 0.0
      %v362 = vmax.f32 %v333, 0.0
      %v363 = vmax.f32 %v336, 0.0
      %v364 = vmax.f32 %v338, 0.0
      %v365 = vmax.f32 %v341, 0.0
      %v366 = vmax.f32 %v343, 0.0
      %v367 = vmax.f32 %v346, 0.0
      %v368 = vmax.f32 %v348, 0.0
      %v369 = vmax.f32 %v351, 0.0
      %v370 = vmax.f32 %v353, 0.0
      %371 = vst [vmem:[%s172] sm:$0xff] %v355
      %372 = vst [vmem:[%s172 + $0x8] sm:$0xff] %v356
      %373 = vst [vmem:[%s172 + $0x10] sm:$0xff] %v357
      %374 = vst [vmem:[%s172 + $0x18] sm:$0xff] %v358
      %375 = vst [vmem:[%s172 + $0x20] sm:$0xff] %v359
      %376 = vst [vmem:[%s172 + $0x28] sm:$0xff] %v360
      %377 = vst [vmem:[%s172 + $0x30] sm:$0xff] %v361
      %378 = vst [vmem:[%s172 + $0x38] sm:$0xff] %v362
      %379 = vst [vmem:[%s172 + $0x40] sm:$0xff] %v363
      %380 = vst [vmem:[%s172 + $0x48] sm:$0xff] %v364
      %381 = vst [vmem:[%s172 + $0x50] sm:$0xff] %v365
      %382 = vst [vmem:[%s172 + $0x58] sm:$0xff] %v366
      %383 = vst [vmem:[%s172 + $0x60] sm:$0xff] %v367
      %384 = vst [vmem:[%s172 + $0x68] sm:$0xff] %v368
      %385 = vst [vmem:[%s172 + $0x70] sm:$0xff] %v369
      %386 = vst [vmem:[%s172 + $0x78] sm:$0xff] %v370
      %s387 = smul.u32 16, %s14
      %p388 = scmp.lt.s32.totalorder %s387, 79
      %s389 = scalar_select %p388, %s387, 79
      %s390 = smul.addr %s389, 8
      %s391 = scalar_lea.vmem %s3, %s390
      // Predicated region
      $region33: #{human_aware_forward.9} parent=31 // pred_check
        %p392 = pneg %p100
      $region34: #{human_aware_forward.9} parent=31 // pred_check_branch
        %394 = sbr.rel (%p392) target = $region36
      $region35: #{human_aware_forward.9} parent=31 // pred_region
        %s395 = smul.u32 16, %s14
      $region36: #{human_aware_forward.9} parent=31 // pred_fallthru
        _
    $region32: #{human_aware_forward.9} parent=5 // pred_fallthru
      _
    %p396 = scmp.le.s32.totalorder 2, %s9
    // Predicated region
    $region37: #{human_aware_forward.9} parent=5 // pred_check
      %p397 = pneg %p396
    $region38: #{human_aware_forward.9} parent=5 // pred_check_branch
      %399 = sbr.rel (%p397) target = $region40
    $region39: #{human_aware_forward.9} parent=5 // pred_region
      %s400 = ssub.s32 %s9, 2
      // Predicated region
      $region41: #{human_aware_forward.9} parent=39 // pred_check
        %p401 = pneg %p106
      $region42: #{human_aware_forward.9} parent=39 // pred_check_branch
        %403 = sbr.rel (%p401) target = $region44
      $region43: #{human_aware_forward.9} parent=39 // pred_region
        %s404 = smul.u32 16, %s15
        %p405 = scmp.lt.s32.totalorder %s404, 79
        %s406 = scalar_select %p405, %s404, 79
        %s407 = smul.addr %s406, 8
        %s408 = scalar_lea.vmem %s3, %s407
      $region44: #{human_aware_forward.9} parent=39 // pred_fallthru
        _
    $region40: #{human_aware_forward.9} parent=5 // pred_fallthru
      _
  $region6: #{human_aware_forward.9} parent=0 // loop_footer
    %s13 = sadd.s32 1, %s9
  $region7: #{human_aware_forward.9} parent=0 // loop_footer_branch
    %8 = sbr.rel target = $region3
  $region8: #{human_aware_forward.9} parent=0 // loop_exit
    _

// kernel: human_aware_forward.10
$region0: #{human_aware_forward.10}
  #allocation0 [shape = 'u32[]', space=smem, size = 0x4, offset = 0x4, fixed_abs, tag = 'smem constant byte address 0x4 - core index']
  #allocation1 [shape = 'u32[72,128]{1,0:T(1,128)}', space=vmem, size = 0x9000, scoped, tag = 'internal scratch']
  %s0 = inlined_call_operand.vmem [shape: bf16[640,128], index: 0, kind: input, shape index: {}]
  %s1 = inlined_call_operand.vmem [shape: bf16[128,128], index: 1, kind: input, shape index: {}]
  %s2 = inlined_call_operand.vmem [shape: f32[1,128], index: 2, kind: input, shape index: {}]
  %s3 = inlined_call_operand.vmem [shape: f32[640,128], index: 3, kind: output, shape index: {}]
  %s4 = sld [smem:[#allocation0]]
  $region45: #{human_aware_forward.10} parent=0
    _
  %s6 = ssub.s32 1, %s4
  %s7 = scalar_select 0, %s6, %s4
  loop: start=0, step=1, limit=7
  $region2: #{human_aware_forward.10} parent=0 // loop_pre_header
    _
  $region3: #{human_aware_forward.10} parent=0 // loop_header
    %s9 = sphi 0, %s13
    %p10 = scmp.ge.s32.totalorder %s9, 7
    %s19 = sphi 0, %s21
    %s22 = sphi 0, %s19
    %s23 = sphi 0, %s22
    %s39 = sphi 0, %s23
    %s43 = sphi 0, %s43
    %s45 = sphi 0, %s43
    %s46 = sphi 0, %s45
    %s60 = sphi 0, %s46
    %s64 = sphi 0, %s64
    %s66 = sphi 0, %s64
    %s67 = sphi 0, %s66
    %s81 = sphi 0, %s67
    %s87 = sphi 0, %s89
    %s90 = sphi 0, %s87
    %s91 = sphi 0, %s90
    %s107 = sphi 0, %s91
  $region4: #{human_aware_forward.10} parent=0 // loop_header_branch
    %12 = sbr.rel (%p10) target = $region8
  $region5: #{human_aware_forward.10} parent=0 // loop_body
    %s14 = ssub.s32 %s9, 1
    %s15 = ssub.s32 %s9, 2
    %s16 = sadd.s32 %s9, 1
    %s17 = ssub.s32 %s9, %s16
    %p18 = scmp.eq.s32.totalorder %s17, 0
    %s20 = sadd.s32 %s19, 1
    %s21 = scalar_select %p18, %s19, %s20
    %p24 = pneg %p18
    %p25 = scmp.eq.s32.totalorder %s9, 4
    %p26 = por %p24, %p25
    %p27 = scmp.ne.s32.totalorder %s19, %s22
    %p28 = scmp.eq.s32.totalorder %s9, 0
    %p29 = por %p27, %p28
    %p30 = scmp.ne.s32.totalorder %s19, %s22
    %p31 = scmp.eq.s32.totalorder %s14, 4
    %p32 = por %p30, %p31
    %p33 = scmp.ne.s32.totalorder %s22, %s23
    %p34 = scmp.eq.s32.totalorder %s14, 0
    %p35 = por %p33, %p34
    %p36 = scmp.ne.s32.totalorder %s22, %s23
    %p37 = scmp.eq.s32.totalorder %s15, 4
    %p38 = por %p36, %p37
    %p40 = scmp.ne.s32.totalorder %s23, %s39
    %p41 = scmp.eq.s32.totalorder %s15, 0
    %p42 = por %p40, %p41
    %s44 = sadd.s32 %s43, 1
    %p47 = scmp.eq.s32.totalorder %s9, 4
    %p48 = scmp.ne.s32.totalorder %s43, %s45
    %p49 = scmp.eq.s32.totalorder %s9, 0
    %p50 = por %p48, %p49
    %p51 = scmp.ne.s32.totalorder %s43, %s45
    %p52 = scmp.eq.s32.totalorder %s14, 4
    %p53 = por %p51, %p52
    %p54 = scmp.ne.s32.totalorder %s45, %s46
    %p55 = scmp.eq.s32.totalorder %s14, 0
    %p56 = por %p54, %p55
    %p57 = scmp.ne.s32.totalorder %s45, %s46
    %p58 = scmp.eq.s32.totalorder %s15, 4
    %p59 = por %p57, %p58
    %p61 = scmp.ne.s32.totalorder %s46, %s60
    %p62 = scmp.eq.s32.totalorder %s15, 0
    %p63 = por %p61, %p62
    %s65 = sadd.s32 %s64, 1
    %p68 = scmp.eq.s32.totalorder %s9, 4
    %p69 = scmp.ne.s32.totalorder %s64, %s66
    %p70 = scmp.eq.s32.totalorder %s9, 0
    %p71 = por %p69, %p70
    %p72 = scmp.ne.s32.totalorder %s64, %s66
    %p73 = scmp.eq.s32.totalorder %s14, 4
    %p74 = por %p72, %p73
    %p75 = scmp.ne.s32.totalorder %s66, %s67
    %p76 = scmp.eq.s32.totalorder %s14, 0
    %p77 = por %p75, %p76
    %p78 = scmp.ne.s32.totalorder %s66, %s67
    %p79 = scmp.eq.s32.totalorder %s15, 4
    %p80 = por %p78, %p79
    %p82 = scmp.ne.s32.totalorder %s67, %s81
    %p83 = scmp.eq.s32.totalorder %s15, 0
    %p84 = por %p82, %p83
    %s85 = ssub.s32 %s9, %s16
    %p86 = scmp.eq.s32.totalorder %s85, 0
    %s88 = sadd.s32 %s87, 1
    %s89 = scalar_select %p86, %s87, %s88
    %p92 = pneg %p86
    %p93 = scmp.eq.s32.totalorder %s9, 4
    %p94 = por %p92, %p93
    %p95 = scmp.ne.s32.totalorder %s87, %s90
    %p96 = scmp.eq.s32.totalorder %s9, 0
    %p97 = por %p95, %p96
    %p98 = scmp.ne.s32.totalorder %s87, %s90
    %p99 = scmp.eq.s32.totalorder %s14, 4
    %p100 = por %p98, %p99
    %p101 = scmp.ne.s32.totalorder %s90, %s91
    %p102 = scmp.eq.s32.totalorder %s14, 0
    %p103 = por %p101, %p102
    %p104 = scmp.ne.s32.totalorder %s90, %s91
    %p105 = scmp.eq.s32.totalorder %s15, 4
    %p106 = por %p104, %p105
    %p108 = scmp.ne.s32.totalorder %s91, %s107
    %p109 = scmp.eq.s32.totalorder %s15, 0
    %p110 = por %p108, %p109
    %p111 = scmp.le.s32.totalorder 1, %s9
    %p112 = scmp.lt.s32.totalorder %s9, 6
    %p113 = pnand %p111, %p112
    %p114 = pneg %p113
    // Predicated region
    $region9: #{human_aware_forward.10} parent=5 // pred_check
      _
    $region10: #{human_aware_forward.10} parent=5 // pred_check_branch
      %116 = sbr.rel (%p113) target = $region12
    $region11: #{human_aware_forward.10} parent=5 // pred_region
      %s117 = ssub.s32 %s9, 1
      // Predicated region
      $region13: #{human_aware_forward.10} parent=11 // pred_check
        %p118 = pneg %p56
      $region14: #{human_aware_forward.10} parent=11 // pred_check_branch
        %120 = sbr.rel (%p118) target = $region16
      $region15: #{human_aware_forward.10} parent=11 // pred_region
        _
      $region16: #{human_aware_forward.10} parent=11 // pred_fallthru
        _
      // Predicated region
      $region17: #{human_aware_forward.10} parent=11 // pred_check
        %p121 = pneg %p77
      $region18: #{human_aware_forward.10} parent=11 // pred_check_branch
        %123 = sbr.rel (%p121) target = $region20
      $region19: #{human_aware_forward.10} parent=11 // pred_region
        _
      $region20: #{human_aware_forward.10} parent=11 // pred_fallthru
        _
    $region12: #{human_aware_forward.10} parent=5 // pred_fallthru
      _
    %p124 = scmp.lt.s32.totalorder %s9, 5
    // Predicated region
    $region21: #{human_aware_forward.10} parent=5 // pred_check
      %p125 = pneg %p124
    $region22: #{human_aware_forward.10} parent=5 // pred_check_branch
      %127 = sbr.rel (%p125) target = $region24
    $region23: #{human_aware_forward.10} parent=5 // pred_region
      // Predicated region
      $region25: #{human_aware_forward.10} parent=23 // pred_check
        %p128 = pneg %p29
      $region26: #{human_aware_forward.10} parent=23 // pred_check_branch
        %130 = sbr.rel (%p128) target = $region28
      $region27: #{human_aware_forward.10} parent=23 // pred_region
        %s131 = smul.u32 16, %s9
        %p132 = scmp.lt.s32.totalorder %s131, 79
        %s133 = scalar_select %p132, %s131, 79
        %s134 = smul.addr %s133, 4
        %s135 = scalar_lea.vmem %s0, %s134
        %s136 = smul.u32 16, %s9
      $region28: #{human_aware_forward.10} parent=23 // pred_fallthru
        _
    $region24: #{human_aware_forward.10} parent=5 // pred_fallthru
      _
    %p137 = scmp.le.s32.totalorder 1, %s9
    %p138 = scmp.lt.s32.totalorder %s9, 6
    %p139 = pnand %p137, %p138
    %p140 = pneg %p139
    // Predicated region
    $region29: #{human_aware_forward.10} parent=5 // pred_check
      _
    $region30: #{human_aware_forward.10} parent=5 // pred_check_branch
      %142 = sbr.rel (%p139) target = $region32
    $region31: #{human_aware_forward.10} parent=5 // pred_region
      %s143 = ssub.s32 %s9, 1
      %s144 = smul.u32 16, %s14
      %p145 = scmp.lt.s32.totalorder %s144, 79
      %s146 = scalar_select %p145, %s144, 79
      %s147 = smul.addr %s146, 4
      %s148 = scalar_lea.vmem %s0, %s147
      %p149 = pneg %p35
      %p150 = pneg %p32
      %p151 = pneg %p56
      %p152 = pneg %p53
      %p153 = pneg %p77
      %p154 = pneg %p74
      %p155 = pneg %p103
      %p156 = pneg %p100
      %s157 = smul.u32 16, %s14
      %p158 = scmp.lt.s32.totalorder %s157, 79
      %s159 = scalar_select %p158, %s157, 79
      %s160 = smul.addr %s159, 8
      %s161 = scalar_lea.vmem %s3, %s160
      %s162 = smul.u32 16, %s14
      %p163 = scmp.lt.s32.totalorder %s162, 79
      %s164 = scalar_select %p163, %s162, 79
      %s165 = smul.addr %s164, 4
      %s166 = scalar_lea.vmem %s0, %s165
      %s167 = smul.u32 16, %s14
      %s168 = smul.u32 16, %s14
      %p169 = scmp.lt.s32.totalorder %s168, 79
      %s170 = scalar_select %p169, %s168, 79
      %s171 = smul.addr %s170, 8
      %s172 = scalar_lea.vmem %s3, %s171
      %s173 = smul.u32 16, %s14
      %v174 = vld [vmem:[%s166] sm:$0xf]
      %v175 = vld [vmem:[%s166 + $0x4] sm:$0xf]
      %v176 = vld [vmem:[%s166 + $0x8] sm:$0xf]
      %v177 = vld [vmem:[%s166 + $0xc] sm:$0xf]
      %v178 = vld [vmem:[%s166 + $0x10] sm:$0xf]
      %v179 = vld [vmem:[%s166 + $0x14] sm:$0xf]
      %v180 = vld [vmem:[%s166 + $0x18] sm:$0xf]
      %v181 = vld [vmem:[%s166 + $0x1c] sm:$0xf]
      %v182 = vld [vmem:[%s166 + $0x20] sm:$0xf]
      %v183 = vld [vmem:[%s166 + $0x24] sm:$0xf]
      %v184 = vld [vmem:[%s166 + $0x28] sm:$0xf]
      %v185 = vld [vmem:[%s166 + $0x2c] sm:$0xf]
      %v186 = vld [vmem:[%s166 + $0x30] sm:$0xf]
      %v187 = vld [vmem:[%s166 + $0x34] sm:$0xf]
      %v188 = vld [vmem:[%s166 + $0x38] sm:$0xf]
      %v189 = vld [vmem:[%s166 + $0x3c] sm:$0xf]
      %v190 = vld [vmem:[%s1] sm:$0xf]
      %v191 = vld [vmem:[%s1 + $0x4] sm:$0xf]
      %v192 = vld [vmem:[%s1 + $0x8] sm:$0xf]
      %v193 = vld [vmem:[%s1 + $0xc] sm:$0xf]
      %v194 = vld [vmem:[%s1 + $0x10] sm:$0xf]
      %v195 = vld [vmem:[%s1 + $0x14] sm:$0xf]
      %v196 = vld [vmem:[%s1 + $0x18] sm:$0xf]
      %v197 = vld [vmem:[%s1 + $0x1c] sm:$0xf]
      %v198 = vld [vmem:[%s1 + $0x20] sm:$0xf]
      %v199 = vld [vmem:[%s1 + $0x24] sm:$0xf]
      %v200 = vld [vmem:[%s1 + $0x28] sm:$0xf]
      %v201 = vld [vmem:[%s1 + $0x2c] sm:$0xf]
      %v202 = vld [vmem:[%s1 + $0x30] sm:$0xf]
      %v203 = vld [vmem:[%s1 + $0x34] sm:$0xf]
      %v204 = vld [vmem:[%s1 + $0x38] sm:$0xf]
      %v205 = vld [vmem:[%s1 + $0x3c] sm:$0xf]
      %v206 = vld [vmem:[%s2] sm:$0x1]
      %v208 = vperm.slane %v206, 0
      %v226 = vunpack.c.l.b16 %v174
      %v227 = vunpack.c.l.b16 %v175
      %v228 = vunpack.c.l.b16 %v176
      %v229 = vunpack.c.l.b16 %v177
      %v230 = vunpack.c.l.b16 %v178
      %v231 = vunpack.c.l.b16 %v179
      %v232 = vunpack.c.l.b16 %v180
      %v233 = vunpack.c.l.b16 %v181
      %v234 = vunpack.c.l.b16 %v182
      %v235 = vunpack.c.l.b16 %v183
      %v236 = vunpack.c.l.b16 %v184
      %v237 = vunpack.c.l.b16 %v185
      %v238 = vunpack.c.l.b16 %v186
      %v239 = vunpack.c.l.b16 %v187
      %v240 = vunpack.c.l.b16 %v188
      %v241 = vunpack.c.l.b16 %v189
      %v242 = vpack.c.b16 %v227, %v226
      %v243 = vpack.c.b16 %v229, %v228
      %v244 = vpack.c.b16 %v231, %v230
      %v245 = vpack.c.b16 %v233, %v232
      %v246 = vpack.c.b16 %v235, %v234
      %v247 = vpack.c.b16 %v237, %v236
      %v248 = vpack.c.b16 %v239, %v238
      %v249 = vpack.c.b16 %v241, %v240
      %v274 = vunpack.c.l.b16 %v190
      %v275 = vunpack.c.l.b16 %v191
      %v276 = vunpack.c.l.b16 %v192
      %v277 = vunpack.c.l.b16 %v193
      %v278 = vunpack.c.l.b16 %v194
      %v279 = vunpack.c.l.b16 %v195
      %v280 = vunpack.c.l.b16 %v196
      %v281 = vunpack.c.l.b16 %v197
      %v282 = vunpack.c.l.b16 %v198
      %v283 = vunpack.c.l.b16 %v199
      %v284 = vunpack.c.l.b16 %v200
      %v285 = vunpack.c.l.b16 %v201
      %v286 = vunpack.c.l.b16 %v202
      %v287 = vunpack.c.l.b16 %v203
      %v288 = vunpack.c.l.b16 %v204
      %v289 = vunpack.c.l.b16 %v205
      %v290 = vpack.c.b16 %v275, %v274
      %v291 = vpack.c.b16 %v277, %v276
      %v292 = vpack.c.b16 %v279, %v278
      %v293 = vpack.c.b16 %v281, %v280
      %v294 = vpack.c.b16 %v283, %v282
      %v295 = vpack.c.b16 %v285, %v284
      %v296 = vpack.c.b16 %v287, %v286
      %v297 = vpack.c.b16 %v289, %v288
      %306 = vmatpush.bf16.msra.mxu0 %v297
      %307 = vmatpush.bf16.msra.mxu0 %v296
      %308 = vmatpush.bf16.msra.mxu0 %v295
      %309 = vmatpush.bf16.msra.mxu0 %v294
      %310 = vmatpush.bf16.msra.mxu0 %v293
      %311 = vmatpush.bf16.msra.mxu0 %v292
      %312 = vmatpush.bf16.msra.mxu0 %v291
      %313 = vmatpush.bf16.msra.mxu0 %v290
      %314 = vmatmul.bf16.gmra.mxu0 %v242
      %v315 = vpop.f32.mrf.mxu0
      %v316 = vadd.f32 %v208, %v315
      %v317 = vpop.f32.mrf.mxu0
      %v318 = vadd.f32 %v208, %v317
      %319 = vmatmul.bf16.gmra.mxu0 %v243
      %v320 = vpop.f32.mrf.mxu0
      %v321 = vadd.f32 %v208, %v320
      %v322 = vpop.f32.mrf.mxu0
      %v323 = vadd.f32 %v208, %v322
      %324 = vmatmul.bf16.gmra.mxu0 %v244
      %v325 = vpop.f32.mrf.mxu0
      %v326 = vadd.f32 %v208, %v325
      %v327 = vpop.f32.mrf.mxu0
      %v328 = vadd.f32 %v208, %v327
      %329 = vmatmul.bf16.gmra.mxu0 %v245
      %v330 = vpop.f32.mrf.mxu0
      %v331 = vadd.f32 %v208, %v330
      %v332 = vpop.f32.mrf.mxu0
      %v333 = vadd.f32 %v208, %v332
      %334 = vmatmul.bf16.gmra.mxu0 %v246
      %v335 = vpop.f32.mrf.mxu0
      %v336 = vadd.f32 %v208, %v335
      %v337 = vpop.f32.mrf.mxu0
      %v338 = vadd.f32 %v208, %v337
      %339 = vmatmul.bf16.gmra.mxu0 %v247
      %v340 = vpop.f32.mrf.mxu0
      %v341 = vadd.f32 %v208, %v340
      %v342 = vpop.f32.mrf.mxu0
      %v343 = vadd.f32 %v208, %v342
      %344 = vmatmul.bf16.gmra.mxu0 %v248
      %v345 = vpop.f32.mrf.mxu0
      %v346 = vadd.f32 %v208, %v345
      %v347 = vpop.f32.mrf.mxu0
      %v348 = vadd.f32 %v208, %v347
      %349 = vmatmul.bf16.gmra.mxu0 %v249
      %v350 = vpop.f32.mrf.mxu0
      %v351 = vadd.f32 %v208, %v350
      %v352 = vpop.f32.mrf.mxu0
      %v353 = vadd.f32 %v208, %v352
      %354 = vdwg.mxu0
      %v355 = vxor.u32 %v316, 2147483648
      %v356 = vxor.u32 %v318, 2147483648
      %v357 = vxor.u32 %v321, 2147483648
      %v358 = vxor.u32 %v323, 2147483648
      %v359 = vxor.u32 %v326, 2147483648
      %v360 = vxor.u32 %v328, 2147483648
      %v361 = vxor.u32 %v331, 2147483648
      %v362 = vxor.u32 %v333, 2147483648
      %v363 = vxor.u32 %v336, 2147483648
      %v364 = vxor.u32 %v338, 2147483648
      %v365 = vxor.u32 %v341, 2147483648
      %v366 = vxor.u32 %v343, 2147483648
      %v367 = vxor.u32 %v346, 2147483648
      %v368 = vxor.u32 %v348, 2147483648
      %v369 = vxor.u32 %v351, 2147483648
      %v370 = vxor.u32 %v353, 2147483648
      %v371 = vmul.f32 %v355, 1.442695
      %v372 = vpow.pop %v371
      %v373 = vmul.f32 %v356, 1.442695
      %v374 = vpow.pop %v373
      %v375 = vmul.f32 %v357, 1.442695
      %v376 = vpow.pop %v375
      %v377 = vmul.f32 %v358, 1.442695
      %v378 = vpow.pop %v377
      %v379 = vmul.f32 %v359, 1.442695
      %v380 = vpow.pop %v379
      %v381 = vmul.f32 %v360, 1.442695
      %v382 = vpow.pop %v381
      %v383 = vmul.f32 %v361, 1.442695
      %v384 = vpow.pop %v383
      %v385 = vmul.f32 %v362, 1.442695
      %v386 = vpow.pop %v385
      %v387 = vmul.f32 %v363, 1.442695
      %v388 = vpow.pop %v387
      %v389 = vmul.f32 %v364, 1.442695
      %v390 = vpow.pop %v389
      %v391 = vmul.f32 %v365, 1.442695
      %v392 = vpow.pop %v391
      %v393 = vmul.f32 %v366, 1.442695
      %v394 = vpow.pop %v393
      %v395 = vmul.f32 %v367, 1.442695
      %v396 = vpow.pop %v395
      %v397 = vmul.f32 %v368, 1.442695
      %v398 = vpow.pop %v397
      %v399 = vmul.f32 %v369, 1.442695
      %v400 = vpow.pop %v399
      %v401 = vmul.f32 %v370, 1.442695
      %v402 = vpow.pop %v401
      %v403 = vadd.f32 %v372, 1.0
      %v404 = vadd.f32 %v374, 1.0
      %v405 = vadd.f32 %v376, 1.0
      %v406 = vadd.f32 %v378, 1.0
      %v407 = vadd.f32 %v380, 1.0
      %v408 = vadd.f32 %v382, 1.0
      %v409 = vadd.f32 %v384, 1.0
      %v410 = vadd.f32 %v386, 1.0
      %v411 = vadd.f32 %v388, 1.0
      %v412 = vadd.f32 %v390, 1.0
      %v413 = vadd.f32 %v392, 1.0
      %v414 = vadd.f32 %v394, 1.0
      %v415 = vadd.f32 %v396, 1.0
      %v416 = vadd.f32 %v398, 1.0
      %v417 = vadd.f32 %v400, 1.0
      %v418 = vadd.f32 %v402, 1.0
      %v419 = vrcp.pop %v403
      %v420 = vmul.f32 %v403, %v419
      %v421 = vsub.f32 1.0, %v420
      %v422 = vmul.f32 %v419, %v421
      %v423 = vadd.f32 %v419, %v422
      %vm424 = vweird.f32 %v403
      %vm425 = vweird.f32 %v419
      %vm426 = vmor %vm424, %vm425
      %v427 = vsel %vm426, %v419, %v423
      %v428 = vand.u32 2147483647, %v403
      %vm429 = vcmp.eq.f32.partialorder %v428, 8.507059e+37
      %v430 = vand.u32 %v403, 2147483648
      %v431 = vor.u32 1.1754944e-38, %v430
      %v432 = vsel %vm429, %v431, %v427
      %v433 = vmul.f32 1.0, %v432
      %v434 = vrcp.pop %v404
      %v435 = vmul.f32 %v404, %v434
      %v436 = vsub.f32 1.0, %v435
      %v437 = vmul.f32 %v434, %v436
      %v438 = vadd.f32 %v434, %v437
      %vm439 = vweird.f32 %v404
      %vm440 = vweird.f32 %v434
      %vm441 = vmor %vm439, %vm440
      %v442 = vsel %vm441, %v434, %v438
      %v443 = vand.u32 2147483647, %v404
      %vm444 = vcmp.eq.f32.partialorder %v443, 8.507059e+37
      %v445 = vand.u32 %v404, 2147483648
      %v446 = vor.u32 1.1754944e-38, %v445
      %v447 = vsel %vm444, %v446, %v442
      %v448 = vmul.f32 1.0, %v447
      %v449 = vrcp.pop %v405
      %v450 = vmul.f32 %v405, %v449
      %v451 = vsub.f32 1.0, %v450
      %v452 = vmul.f32 %v449, %v451
      %v453 = vadd.f32 %v449, %v452
      %vm454 = vweird.f32 %v405
      %vm455 = vweird.f32 %v449
      %vm456 = vmor %vm454, %vm455
      %v457 = vsel %vm456, %v449, %v453
      %v458 = vand.u32 2147483647, %v405
      %vm459 = vcmp.eq.f32.partialorder %v458, 8.507059e+37
      %v460 = vand.u32 %v405, 2147483648
      %v461 = vor.u32 1.1754944e-38, %v460
      %v462 = vsel %vm459, %v461, %v457
      %v463 = vmul.f32 1.0, %v462
      %v464 = vrcp.pop %v406
      %v465 = vmul.f32 %v406, %v464
      %v466 = vsub.f32 1.0, %v465
      %v467 = vmul.f32 %v464, %v466
      %v468 = vadd.f32 %v464, %v467
      %vm469 = vweird.f32 %v406
      %vm470 = vweird.f32 %v464
      %vm471 = vmor %vm469, %vm470
      %v472 = vsel %vm471, %v464, %v468
      %v473 = vand.u32 2147483647, %v406
      %vm474 = vcmp.eq.f32.partialorder %v473, 8.507059e+37
      %v475 = vand.u32 %v406, 2147483648
      %v476 = vor.u32 1.1754944e-38, %v475
      %v477 = vsel %vm474, %v476, %v472
      %v478 = vmul.f32 1.0, %v477
      %v479 = vrcp.pop %v407
      %v480 = vmul.f32 %v407, %v479
      %v481 = vsub.f32 1.0, %v480
      %v482 = vmul.f32 %v479, %v481
      %v483 = vadd.f32 %v479, %v482
      %vm484 = vweird.f32 %v407
      %vm485 = vweird.f32 %v479
      %vm486 = vmor %vm484, %vm485
      %v487 = vsel %vm486, %v479, %v483
      %v488 = vand.u32 2147483647, %v407
      %vm489 = vcmp.eq.f32.partialorder %v488, 8.507059e+37
      %v490 = vand.u32 %v407, 2147483648
      %v491 = vor.u32 1.1754944e-38, %v490
      %v492 = vsel %vm489, %v491, %v487
      %v493 = vmul.f32 1.0, %v492
      %v494 = vrcp.pop %v408
      %v495 = vmul.f32 %v408, %v494
      %v496 = vsub.f32 1.0, %v495
      %v497 = vmul.f32 %v494, %v496
      %v498 = vadd.f32 %v494, %v497
      %vm499 = vweird.f32 %v408
      %vm500 = vweird.f32 %v494
      %vm501 = vmor %vm499, %vm500
      %v502 = vsel %vm501, %v494, %v498
      %v503 = vand.u32 2147483647, %v408
      %vm504 = vcmp.eq.f32.partialorder %v503, 8.507059e+37
      %v505 = vand.u32 %v408, 2147483648
      %v506 = vor.u32 1.1754944e-38, %v505
      %v507 = vsel %vm504, %v506, %v502
      %v508 = vmul.f32 1.0, %v507
      %v509 = vrcp.pop %v409
      %v510 = vmul.f32 %v409, %v509
      %v511 = vsub.f32 1.0, %v510
      %v512 = vmul.f32 %v509, %v511
      %v513 = vadd.f32 %v509, %v512
      %vm514 = vweird.f32 %v409
      %vm515 = vweird.f32 %v509
      %vm516 = vmor %vm514, %vm515
      %v517 = vsel %vm516, %v509, %v513
      %v518 = vand.u32 2147483647, %v409
      %vm519 = vcmp.eq.f32.partialorder %v518, 8.507059e+37
      %v520 = vand.u32 %v409, 2147483648
      %v521 = vor.u32 1.1754944e-38, %v520
      %v522 = vsel %vm519, %v521, %v517
      %v523 = vmul.f32 1.0, %v522
      %v524 = vrcp.pop %v410
      %v525 = vmul.f32 %v410, %v524
      %v526 = vsub.f32 1.0, %v525
      %v527 = vmul.f32 %v524, %v526
      %v528 = vadd.f32 %v524, %v527
      %vm529 = vweird.f32 %v410
      %vm530 = vweird.f32 %v524
      %vm531 = vmor %vm529, %vm530
      %v532 = vsel %vm531, %v524, %v528
      %v533 = vand.u32 2147483647, %v410
      %vm534 = vcmp.eq.f32.partialorder %v533, 8.507059e+37
      %v535 = vand.u32 %v410, 2147483648
      %v536 = vor.u32 1.1754944e-38, %v535
      %v537 = vsel %vm534, %v536, %v532
      %v538 = vmul.f32 1.0, %v537
      %v539 = vrcp.pop %v411
      %v540 = vmul.f32 %v411, %v539
      %v541 = vsub.f32 1.0, %v540
      %v542 = vmul.f32 %v539, %v541
      %v543 = vadd.f32 %v539, %v542
      %vm544 = vweird.f32 %v411
      %vm545 = vweird.f32 %v539
      %vm546 = vmor %vm544, %vm545
      %v547 = vsel %vm546, %v539, %v543
      %v548 = vand.u32 2147483647, %v411
      %vm549 = vcmp.eq.f32.partialorder %v548, 8.507059e+37
      %v550 = vand.u32 %v411, 2147483648
      %v551 = vor.u32 1.1754944e-38, %v550
      %v552 = vsel %vm549, %v551, %v547
      %v553 = vmul.f32 1.0, %v552
      %v554 = vrcp.pop %v412
      %v555 = vmul.f32 %v412, %v554
      %v556 = vsub.f32 1.0, %v555
      %v557 = vmul.f32 %v554, %v556
      %v558 = vadd.f32 %v554, %v557
      %vm559 = vweird.f32 %v412
      %vm560 = vweird.f32 %v554
      %vm561 = vmor %vm559, %vm560
      %v562 = vsel %vm561, %v554, %v558
      %v563 = vand.u32 2147483647, %v412
      %vm564 = vcmp.eq.f32.partialorder %v563, 8.507059e+37
      %v565 = vand.u32 %v412, 2147483648
      %v566 = vor.u32 1.1754944e-38, %v565
      %v567 = vsel %vm564, %v566, %v562
      %v568 = vmul.f32 1.0, %v567
      %v569 = vrcp.pop %v413
      %v570 = vmul.f32 %v413, %v569
      %v571 = vsub.f32 1.0, %v570
      %v572 = vmul.f32 %v569, %v571
      %v573 = vadd.f32 %v569, %v572
      %vm574 = vweird.f32 %v413
      %vm575 = vweird.f32 %v569
      %vm576 = vmor %vm574, %vm575
      %v577 = vsel %vm576, %v569, %v573
      %v578 = vand.u32 2147483647, %v413
      %vm579 = vcmp.eq.f32.partialorder %v578, 8.507059e+37
      %v580 = vand.u32 %v413, 2147483648
      %v581 = vor.u32 1.1754944e-38, %v580
      %v582 = vsel %vm579, %v581, %v577
      %v583 = vmul.f32 1.0, %v582
      %v584 = vrcp.pop %v414
      %v585 = vmul.f32 %v414, %v584
      %v586 = vsub.f32 1.0, %v585
      %v587 = vmul.f32 %v584, %v586
      %v588 = vadd.f32 %v584, %v587
      %vm589 = vweird.f32 %v414
      %vm590 = vweird.f32 %v584
      %vm591 = vmor %vm589, %vm590
      %v592 = vsel %vm591, %v584, %v588
      %v593 = vand.u32 2147483647, %v414
      %vm594 = vcmp.eq.f32.partialorder %v593, 8.507059e+37
      %v595 = vand.u32 %v414, 2147483648
      %v596 = vor.u32 1.1754944e-38, %v595
      %v597 = vsel %vm594, %v596, %v592
      %v598 = vmul.f32 1.0, %v597
      %v599 = vrcp.pop %v415
      %v600 = vmul.f32 %v415, %v599
      %v601 = vsub.f32 1.0, %v600
      %v602 = vmul.f32 %v599, %v601
      %v603 = vadd.f32 %v599, %v602
      %vm604 = vweird.f32 %v415
      %vm605 = vweird.f32 %v599
      %vm606 = vmor %vm604, %vm605
      %v607 = vsel %vm606, %v599, %v603
      %v608 = vand.u32 2147483647, %v415
      %vm609 = vcmp.eq.f32.partialorder %v608, 8.507059e+37
      %v610 = vand.u32 %v415, 2147483648
      %v611 = vor.u32 1.1754944e-38, %v610
      %v612 = vsel %vm609, %v611, %v607
      %v613 = vmul.f32 1.0, %v612
      %v614 = vrcp.pop %v416
      %v615 = vmul.f32 %v416, %v614
      %v616 = vsub.f32 1.0, %v615
      %v617 = vmul.f32 %v614, %v616
      %v618 = vadd.f32 %v614, %v617
      %vm619 = vweird.f32 %v416
      %vm620 = vweird.f32 %v614
      %vm621 = vmor %vm619, %vm620
      %v622 = vsel %vm621, %v614, %v618
      %v623 = vand.u32 2147483647, %v416
      %vm624 = vcmp.eq.f32.partialorder %v623, 8.507059e+37
      %v625 = vand.u32 %v416, 2147483648
      %v626 = vor.u32 1.1754944e-38, %v625
      %v627 = vsel %vm624, %v626, %v622
      %v628 = vmul.f32 1.0, %v627
      %v629 = vrcp.pop %v417
      %v630 = vmul.f32 %v417, %v629
      %v631 = vsub.f32 1.0, %v630
      %v632 = vmul.f32 %v629, %v631
      %v633 = vadd.f32 %v629, %v632
      %vm634 = vweird.f32 %v417
      %vm635 = vweird.f32 %v629
      %vm636 = vmor %vm634, %vm635
      %v637 = vsel %vm636, %v629, %v633
      %v638 = vand.u32 2147483647, %v417
      %vm639 = vcmp.eq.f32.partialorder %v638, 8.507059e+37
      %v640 = vand.u32 %v417, 2147483648
      %v641 = vor.u32 1.1754944e-38, %v640
      %v642 = vsel %vm639, %v641, %v637
      %v643 = vmul.f32 1.0, %v642
      %v644 = vrcp.pop %v418
      %v645 = vmul.f32 %v418, %v644
      %v646 = vsub.f32 1.0, %v645
      %v647 = vmul.f32 %v644, %v646
      %v648 = vadd.f32 %v644, %v647
      %vm649 = vweird.f32 %v418
      %vm650 = vweird.f32 %v644
      %vm651 = vmor %vm649, %vm650
      %v652 = vsel %vm651, %v644, %v648
      %v653 = vand.u32 2147483647, %v418
      %vm654 = vcmp.eq.f32.partialorder %v653, 8.507059e+37
      %v655 = vand.u32 %v418, 2147483648
      %v656 = vor.u32 1.1754944e-38, %v655
      %v657 = vsel %vm654, %v656, %v652
      %v658 = vmul.f32 1.0, %v657
      %659 = vst [vmem:[%s172] sm:$0xff] %v433
      %660 = vst [vmem:[%s172 + $0x8] sm:$0xff] %v448
      %661 = vst [vmem:[%s172 + $0x10] sm:$0xff] %v463
      %662 = vst [vmem:[%s172 + $0x18] sm:$0xff] %v478
      %663 = vst [vmem:[%s172 + $0x20] sm:$0xff] %v493
      %664 = vst [vmem:[%s172 + $0x28] sm:$0xff] %v508
      %665 = vst [vmem:[%s172 + $0x30] sm:$0xff] %v523
      %666 = vst [vmem:[%s172 + $0x38] sm:$0xff] %v538
      %667 = vst [vmem:[%s172 + $0x40] sm:$0xff] %v553
      %668 = vst [vmem:[%s172 + $0x48] sm:$0xff] %v568
      %669 = vst [vmem:[%s172 + $0x50] sm:$0xff] %v583
      %670 = vst [vmem:[%s172 + $0x58] sm:$0xff] %v598
      %671 = vst [vmem:[%s172 + $0x60] sm:$0xff] %v613
      %672 = vst [vmem:[%s172 + $0x68] sm:$0xff] %v628
      %673 = vst [vmem:[%s172 + $0x70] sm:$0xff] %v643
      %674 = vst [vmem:[%s172 + $0x78] sm:$0xff] %v658
      %s675 = smul.u32 16, %s14
      %p676 = scmp.lt.s32.totalorder %s675, 79
      %s677 = scalar_select %p676, %s675, 79
      %s678 = smul.addr %s677, 8
      %s679 = scalar_lea.vmem %s3, %s678
      // Predicated region
      $region33: #{human_aware_forward.10} parent=31 // pred_check
        %p680 = pneg %p100
      $region34: #{human_aware_forward.10} parent=31 // pred_check_branch
        %682 = sbr.rel (%p680) target = $region36
      $region35: #{human_aware_forward.10} parent=31 // pred_region
        %s683 = smul.u32 16, %s14
      $region36: #{human_aware_forward.10} parent=31 // pred_fallthru
        _
    $region32: #{human_aware_forward.10} parent=5 // pred_fallthru
      _
    %p684 = scmp.le.s32.totalorder 2, %s9
    // Predicated region
    $region37: #{human_aware_forward.10} parent=5 // pred_check
      %p685 = pneg %p684
    $region38: #{human_aware_forward.10} parent=5 // pred_check_branch
      %687 = sbr.rel (%p685) target = $region40
    $region39: #{human_aware_forward.10} parent=5 // pred_region
      %s688 = ssub.s32 %s9, 2
      // Predicated region
      $region41: #{human_aware_forward.10} parent=39 // pred_check
        %p689 = pneg %p106
      $region42: #{human_aware_forward.10} parent=39 // pred_check_branch
        %691 = sbr.rel (%p689) target = $region44
      $region43: #{human_aware_forward.10} parent=39 // pred_region
        %s692 = smul.u32 16, %s15
        %p693 = scmp.lt.s32.totalorder %s692, 79
        %s694 = scalar_select %p693, %s692, 79
        %s695 = smul.addr %s694, 8
        %s696 = scalar_lea.vmem %s3, %s695
      $region44: #{human_aware_forward.10} parent=39 // pred_fallthru
        _
    $region40: #{human_aware_forward.10} parent=5 // pred_fallthru
      _
  $region6: #{human_aware_forward.10} parent=0 // loop_footer
    %s13 = sadd.s32 1, %s9
  $region7: #{human_aware_forward.10} parent=0 // loop_footer_branch
    %8 = sbr.rel target = $region3
  $region8: #{human_aware_forward.10} parent=0 // loop_exit
    _

// kernel: human_aware_forward.11
$region0: #{human_aware_forward.11}
  #allocation0 [shape = 'u32[]', space=smem, size = 0x4, offset = 0x4, fixed_abs, tag = 'smem constant byte address 0x4 - core index']
  #allocation1 [shape = 'u32[72,128]{1,0:T(1,128)}', space=vmem, size = 0x9000, scoped, tag = 'internal scratch']
  %s0 = inlined_call_operand.vmem [shape: bf16[32,128], index: 0, kind: input, shape index: {}]
  %s1 = inlined_call_operand.vmem [shape: bf16[128,128], index: 1, kind: input, shape index: {}]
  %s2 = inlined_call_operand.vmem [shape: f32[1,128], index: 2, kind: input, shape index: {}]
  %s3 = inlined_call_operand.vmem [shape: f32[32,1], index: 3, kind: input, shape index: {}]
  %s4 = inlined_call_operand.vmem [shape: f32[32,128], index: 4, kind: output, shape index: {0}]
  %s5 = inlined_call_operand.vmem [shape: f32[32,128], index: 5, kind: output, shape index: {1}]
  %s6 = inlined_call_operand.vmem [shape: f32[32,128], index: 6, kind: output, shape index: {2}]
  %7 = xla_tuple %s4, %s5, %s6
  %s8 = sld [smem:[#allocation0]]
  $region42: #{human_aware_forward.11} parent=0
    _
  %s10 = ssub.s32 1, %s8
  %s11 = scalar_select 0, %s10, %s8
  // Predicated region
  $region2: #{human_aware_forward.11} parent=0 // pred_check
    _
  $region3: #{human_aware_forward.11} parent=0 // pred_check_branch
    %13 = sbr.rel (0) target = $region5
  $region4: #{human_aware_forward.11} parent=0 // pred_region
    _
  $region5: #{human_aware_forward.11} parent=0 // pred_fallthru
    _
  // Predicated region
  $region6: #{human_aware_forward.11} parent=0 // pred_check
    _
  $region7: #{human_aware_forward.11} parent=0 // pred_check_branch
    %15 = sbr.rel (0) target = $region9
  $region8: #{human_aware_forward.11} parent=0 // pred_region
    _
  $region9: #{human_aware_forward.11} parent=0 // pred_fallthru
    _
  // Predicated region
  $region10: #{human_aware_forward.11} parent=0 // pred_check
    _
  $region11: #{human_aware_forward.11} parent=0 // pred_check_branch
    %17 = sbr.rel (0) target = $region13
  $region12: #{human_aware_forward.11} parent=0 // pred_region
    _
  $region13: #{human_aware_forward.11} parent=0 // pred_fallthru
    _
  // Predicated region
  $region14: #{human_aware_forward.11} parent=0 // pred_check
    _
  $region15: #{human_aware_forward.11} parent=0 // pred_check_branch
    %19 = sbr.rel (0) target = $region17
  $region16: #{human_aware_forward.11} parent=0 // pred_region
    _
  $region17: #{human_aware_forward.11} parent=0 // pred_fallthru
    _
  %v20 = vld [vmem:[%s0] sm:$0xf]
  %v21 = vld [vmem:[%s0 + $0x4] sm:$0xf]
  %v22 = vld [vmem:[%s0 + $0x8] sm:$0xf]
  %v23 = vld [vmem:[%s0 + $0xc] sm:$0xf]
  %v24 = vld [vmem:[%s1] sm:$0xf]
  %v25 = vld [vmem:[%s1 + $0x4] sm:$0xf]
  %v26 = vld [vmem:[%s1 + $0x8] sm:$0xf]
  %v27 = vld [vmem:[%s1 + $0xc] sm:$0xf]
  %v28 = vld [vmem:[%s1 + $0x10] sm:$0xf]
  %v29 = vld [vmem:[%s1 + $0x14] sm:$0xf]
  %v30 = vld [vmem:[%s1 + $0x18] sm:$0xf]
  %v31 = vld [vmem:[%s1 + $0x1c] sm:$0xf]
  %v32 = vld [vmem:[%s1 + $0x20] sm:$0xf]
  %v33 = vld [vmem:[%s1 + $0x24] sm:$0xf]
  %v34 = vld [vmem:[%s1 + $0x28] sm:$0xf]
  %v35 = vld [vmem:[%s1 + $0x2c] sm:$0xf]
  %v36 = vld [vmem:[%s1 + $0x30] sm:$0xf]
  %v37 = vld [vmem:[%s1 + $0x34] sm:$0xf]
  %v38 = vld [vmem:[%s1 + $0x38] sm:$0xf]
  %v39 = vld [vmem:[%s1 + $0x3c] sm:$0xf]
  %v40 = vld [vmem:[%s2] sm:$0x1]
  %v42 = vperm.slane %v40, 0
  %v48 = vunpack.c.l.b16 %v20
  %v49 = vunpack.c.l.b16 %v21
  %v50 = vunpack.c.l.b16 %v22
  %v51 = vunpack.c.l.b16 %v23
  %v52 = vpack.c.b16 %v49, %v48
  %v53 = vpack.c.b16 %v51, %v50
  %v72 = vunpack.c.l.b16 %v24
  %v73 = vunpack.c.l.b16 %v25
  %v74 = vunpack.c.l.b16 %v26
  %v75 = vunpack.c.l.b16 %v27
  %v76 = vunpack.c.l.b16 %v28
  %v77 = vunpack.c.l.b16 %v29
  %v78 = vunpack.c.l.b16 %v30
  %v79 = vunpack.c.l.b16 %v31
  %v80 = vunpack.c.l.b16 %v32
  %v81 = vunpack.c.l.b16 %v33
  %v82 = vunpack.c.l.b16 %v34
  %v83 = vunpack.c.l.b16 %v35
  %v84 = vunpack.c.l.b16 %v36
  %v85 = vunpack.c.l.b16 %v37
  %v86 = vunpack.c.l.b16 %v38
  %v87 = vunpack.c.l.b16 %v39
  %v88 = vpack.c.b16 %v73, %v72
  %v89 = vpack.c.b16 %v75, %v74
  %v90 = vpack.c.b16 %v77, %v76
  %v91 = vpack.c.b16 %v79, %v78
  %v92 = vpack.c.b16 %v81, %v80
  %v93 = vpack.c.b16 %v83, %v82
  %v94 = vpack.c.b16 %v85, %v84
  %v95 = vpack.c.b16 %v87, %v86
  %104 = vmatpush.bf16.msra.mxu0 %v95
  %105 = vmatpush.bf16.msra.mxu0 %v94
  %106 = vmatpush.bf16.msra.mxu0 %v93
  %107 = vmatpush.bf16.msra.mxu0 %v92
  %108 = vmatpush.bf16.msra.mxu0 %v91
  %109 = vmatpush.bf16.msra.mxu0 %v90
  %110 = vmatpush.bf16.msra.mxu0 %v89
  %111 = vmatpush.bf16.msra.mxu0 %v88
  %112 = vmatmul.bf16.gmra.mxu0 %v52
  %v113 = vpop.f32.mrf.mxu0
  %v114 = vadd.f32 %v42, %v113
  %v115 = vpop.f32.mrf.mxu0
  %v116 = vadd.f32 %v42, %v115
  %117 = vmatmul.bf16.gmra.mxu0 %v53
  %v118 = vpop.f32.mrf.mxu0
  %v119 = vadd.f32 %v42, %v118
  %v120 = vpop.f32.mrf.mxu0
  %v121 = vadd.f32 %v42, %v120
  %122 = vdwg.mxu0
  %v123 = vmax.f32 %v114, 0.0
  %v124 = vmax.f32 %v116, 0.0
  %v125 = vmax.f32 %v119, 0.0
  %v126 = vmax.f32 %v121, 0.0
  %v127 = vld [vmem:[%s3] sm:$0xff]
  %v128 = vld [vmem:[%s3 + $0x8] sm:$0xff]
  %v129 = vld [vmem:[%s3 + $0x10] sm:$0xff]
  %v130 = vld [vmem:[%s3 + $0x18] sm:$0xff]
  %132 = vset.pattern.permute.xlu0 0
  %133 = vperm.xlu0 %132, %v127
  %v134 = vpop.permute.xlu0 %133
  %137 = vset.pattern.permute.xlu0 0
  %138 = vperm.xlu0 %137, %v128
  %v139 = vpop.permute.xlu0 %138
  %142 = vset.pattern.permute.xlu0 0
  %143 = vperm.xlu0 %142, %v129
  %v144 = vpop.permute.xlu0 %143
  %147 = vset.pattern.permute.xlu0 0
  %148 = vperm.xlu0 %147, %v130
  %v149 = vpop.permute.xlu0 %148
  %151 = vst [vmem:[%s4] sm:$0xff] %v123
  %152 = vst [vmem:[%s4 + $0x8] sm:$0xff] %v124
  %153 = vst [vmem:[%s4 + $0x10] sm:$0xff] %v125
  %154 = vst [vmem:[%s4 + $0x18] sm:$0xff] %v126
  %v155 = vmul.f32 %v123, %v134
  %v156 = vmul.f32 %v124, %v139
  %v157 = vmul.f32 %v125, %v144
  %v158 = vmul.f32 %v126, %v149
  %159 = vst [vmem:[%s5] sm:$0xff] %v155
  %160 = vst [vmem:[%s5 + $0x8] sm:$0xff] %v156
  %161 = vst [vmem:[%s5 + $0x10] sm:$0xff] %v157
  %162 = vst [vmem:[%s5 + $0x18] sm:$0xff] %v158
  %v163 = vsub.f32 1.0, %v134
  %v164 = vsub.f32 1.0, %v139
  %v165 = vsub.f32 1.0, %v144
  %v166 = vsub.f32 1.0, %v149
  %v167 = vmul.f32 %v123, %v163
  %v168 = vmul.f32 %v124, %v164
  %v169 = vmul.f32 %v125, %v165
  %v170 = vmul.f32 %v126, %v166
  %171 = vst [vmem:[%s6] sm:$0xff] %v167
  %172 = vst [vmem:[%s6 + $0x8] sm:$0xff] %v168
  %173 = vst [vmem:[%s6 + $0x10] sm:$0xff] %v169
  %174 = vst [vmem:[%s6 + $0x18] sm:$0xff] %v170
  // Predicated region
  $region18: #{human_aware_forward.11} parent=0 // pred_check
    _
  $region19: #{human_aware_forward.11} parent=0 // pred_check_branch
    %176 = sbr.rel (0) target = $region21
  $region20: #{human_aware_forward.11} parent=0 // pred_region
    _
  $region21: #{human_aware_forward.11} parent=0 // pred_fallthru
    _
  // Predicated region
  $region22: #{human_aware_forward.11} parent=0 // pred_check
    _
  $region23: #{human_aware_forward.11} parent=0 // pred_check_branch
    %178 = sbr.rel (0) target = $region25
  $region24: #{human_aware_forward.11} parent=0 // pred_region
    _
  $region25: #{human_aware_forward.11} parent=0 // pred_fallthru
    _
  // Predicated region
  $region26: #{human_aware_forward.11} parent=0 // pred_check
    _
  $region27: #{human_aware_forward.11} parent=0 // pred_check_branch
    %180 = sbr.rel (0) target = $region29
  $region28: #{human_aware_forward.11} parent=0 // pred_region
    _
  $region29: #{human_aware_forward.11} parent=0 // pred_fallthru
    _
  // Predicated region
  $region30: #{human_aware_forward.11} parent=0 // pred_check
    _
  $region31: #{human_aware_forward.11} parent=0 // pred_check_branch
    %182 = sbr.rel (0) target = $region33
  $region32: #{human_aware_forward.11} parent=0 // pred_region
    _
  $region33: #{human_aware_forward.11} parent=0 // pred_fallthru
    _
  // Predicated region
  $region34: #{human_aware_forward.11} parent=0 // pred_check
    _
  $region35: #{human_aware_forward.11} parent=0 // pred_check_branch
    %184 = sbr.rel (0) target = $region37
  $region36: #{human_aware_forward.11} parent=0 // pred_region
    _
  $region37: #{human_aware_forward.11} parent=0 // pred_fallthru
    _
  // Predicated region
  $region38: #{human_aware_forward.11} parent=0 // pred_check
    _
  $region39: #{human_aware_forward.11} parent=0 // pred_check_branch
    %186 = sbr.rel (0) target = $region41
  $region40: #{human_aware_forward.11} parent=0 // pred_region
    _
  $region41: #{human_aware_forward.11} parent=0 // pred_fallthru
    _

// kernel: human_aware_forward.12
$region0: #{human_aware_forward.12}
  #allocation0 [shape = 'u32[]', space=smem, size = 0x4, offset = 0x4, fixed_abs, tag = 'smem constant byte address 0x4 - core index']
  #allocation1 [shape = 'u32[72,128]{1,0:T(1,128)}', space=vmem, size = 0x9000, scoped, tag = 'internal scratch']
  #allocation2 [shape = 'f32[32,128]{1,0:T(8,128)}', space=vmem, size = 0x4000, scoped, tag = 'scratch operand']
  %s0 = inlined_call_operand.vmem [shape: bf16[3,32,1152], index: 0, kind: input, shape index: {}]
  %s1 = inlined_call_operand.vmem [shape: bf16[3,1152,128], index: 1, kind: input, shape index: {}]
  %s2 = inlined_call_operand.vmem [shape: f32[3,1,128], index: 2, kind: input, shape index: {}]
  %s3 = inlined_call_operand.vmem [shape: f32[3,32,128], index: 3, kind: output, shape index: {}]
  %s4 = sld [smem:[#allocation0]]
  $region57: #{human_aware_forward.12} parent=0
    _
  %s6 = ssub.s32 1, %s4
  %s7 = scalar_select 0, %s6, %s4
  loop: start=0, step=1, limit=5
  $region2: #{human_aware_forward.12} parent=0 // loop_pre_header
    _
  $region3: #{human_aware_forward.12} parent=0 // loop_header
    %s9 = sphi 0, %s13
    %p10 = scmp.ge.s32.totalorder %s9, 5
    %s19 = sphi 0, %s21
    %s22 = sphi 0, %s19
    %s23 = sphi 0, %s22
    %s39 = sphi 0, %s23
    %s45 = sphi 0, %s47
    %s48 = sphi 0, %s45
    %s49 = sphi 0, %s48
    %s65 = sphi 0, %s49
    %s71 = sphi 0, %s73
    %s74 = sphi 0, %s71
    %s75 = sphi 0, %s74
    %s91 = sphi 0, %s75
    %s97 = sphi 0, %s99
    %s100 = sphi 0, %s97
    %s101 = sphi 0, %s100
    %s117 = sphi 0, %s101
  $region4: #{human_aware_forward.12} parent=0 // loop_header_branch
    %12 = sbr.rel (%p10) target = $region8
  $region5: #{human_aware_forward.12} parent=0 // loop_body
    %s14 = ssub.s32 %s9, 1
    %s15 = ssub.s32 %s9, 2
    %s16 = sadd.s32 %s9, 1
    %s17 = ssub.s32 %s9, %s16
    %p18 = scmp.eq.s32.totalorder %s17, 0
    %s20 = sadd.s32 %s19, 1
    %s21 = scalar_select %p18, %s19, %s20
    %p24 = pneg %p18
    %p25 = scmp.eq.s32.totalorder %s9, 2
    %p26 = por %p24, %p25
    %p27 = scmp.ne.s32.totalorder %s19, %s22
    %p28 = scmp.eq.s32.totalorder %s9, 0
    %p29 = por %p27, %p28
    %p30 = scmp.ne.s32.totalorder %s19, %s22
    %p31 = scmp.eq.s32.totalorder %s14, 2
    %p32 = por %p30, %p31
    %p33 = scmp.ne.s32.totalorder %s22, %s23
    %p34 = scmp.eq.s32.totalorder %s14, 0
    %p35 = por %p33, %p34
    %p36 = scmp.ne.s32.totalorder %s22, %s23
    %p37 = scmp.eq.s32.totalorder %s15, 2
    %p38 = por %p36, %p37
    %p40 = scmp.ne.s32.totalorder %s23, %s39
    %p41 = scmp.eq.s32.totalorder %s15, 0
    %p42 = por %p40, %p41
    %s43 = ssub.s32 %s9, %s16
    %p44 = scmp.eq.s32.totalorder %s43, 0
    %s46 = sadd.s32 %s45, 1
    %s47 = scalar_select %p44, %s45, %s46
    %p50 = pneg %p44
    %p51 = scmp.eq.s32.totalorder %s9, 2
    %p52 = por %p50, %p51
    %p53 = scmp.ne.s32.totalorder %s45, %s48
    %p54 = scmp.eq.s32.totalorder %s9, 0
    %p55 = por %p53, %p54
    %p56 = scmp.ne.s32.totalorder %s45, %s48
    %p57 = scmp.eq.s32.totalorder %s14, 2
    %p58 = por %p56, %p57
    %p59 = scmp.ne.s32.totalorder %s48, %s49
    %p60 = scmp.eq.s32.totalorder %s14, 0
    %p61 = por %p59, %p60
    %p62 = scmp.ne.s32.totalorder %s48, %s49
    %p63 = scmp.eq.s32.totalorder %s15, 2
    %p64 = por %p62, %p63
    %p66 = scmp.ne.s32.totalorder %s49, %s65
    %p67 = scmp.eq.s32.totalorder %s15, 0
    %p68 = por %p66, %p67
    %s69 = ssub.s32 %s9, %s16
    %p70 = scmp.eq.s32.totalorder %s69, 0
    %s72 = sadd.s32 %s71, 1
    %s73 = scalar_select %p70, %s71, %s72
    %p76 = pneg %p70
    %p77 = scmp.eq.s32.totalorder %s9, 2
    %p78 = por %p76, %p77
    %p79 = scmp.ne.s32.totalorder %s71, %s74
    %p80 = scmp.eq.s32.totalorder %s9, 0
    %p81 = por %p79, %p80
    %p82 = scmp.ne.s32.totalorder %s71, %s74
    %p83 = scmp.eq.s32.totalorder %s14, 2
    %p84 = por %p82, %p83
    %p85 = scmp.ne.s32.totalorder %s74, %s75
    %p86 = scmp.eq.s32.totalorder %s14, 0
    %p87 = por %p85, %p86
    %p88 = scmp.ne.s32.totalorder %s74, %s75
    %p89 = scmp.eq.s32.totalorder %s15, 2
    %p90 = por %p88, %p89
    %p92 = scmp.ne.s32.totalorder %s75, %s91
    %p93 = scmp.eq.s32.totalorder %s15, 0
    %p94 = por %p92, %p93
    %s95 = ssub.s32 %s9, %s16
    %p96 = scmp.eq.s32.totalorder %s95, 0
    %s98 = sadd.s32 %s97, 1
    %s99 = scalar_select %p96, %s97, %s98
    %p102 = pneg %p96
    %p103 = scmp.eq.s32.totalorder %s9, 2
    %p104 = por %p102, %p103
    %p105 = scmp.ne.s32.totalorder %s97, %s100
    %p106 = scmp.eq.s32.totalorder %s9, 0
    %p107 = por %p105, %p106
    %p108 = scmp.ne.s32.totalorder %s97, %s100
    %p109 = scmp.eq.s32.totalorder %s14, 2
    %p110 = por %p108, %p109
    %p111 = scmp.ne.s32.totalorder %s100, %s101
    %p112 = scmp.eq.s32.totalorder %s14, 0
    %p113 = por %p111, %p112
    %p114 = scmp.ne.s32.totalorder %s100, %s101
    %p115 = scmp.eq.s32.totalorder %s15, 2
    %p116 = por %p114, %p115
    %p118 = scmp.ne.s32.totalorder %s101, %s117
    %p119 = scmp.eq.s32.totalorder %s15, 0
    %p120 = por %p118, %p119
    %p121 = scmp.le.s32.totalorder 1, %s9
    %p122 = scmp.lt.s32.totalorder %s9, 4
    %p123 = pnand %p121, %p122
    %p124 = pneg %p123
    // Predicated region
    $region9: #{human_aware_forward.12} parent=5 // pred_check
      _
    $region10: #{human_aware_forward.12} parent=5 // pred_check_branch
      %126 = sbr.rel (%p123) target = $region12
    $region11: #{human_aware_forward.12} parent=5 // pred_region
      %s127 = ssub.s32 %s9, 1
    $region12: #{human_aware_forward.12} parent=5 // pred_fallthru
      _
    %p128 = scmp.lt.s32.totalorder %s9, 3
    // Predicated region
    $region13: #{human_aware_forward.12} parent=5 // pred_check
      %p129 = pneg %p128
    $region14: #{human_aware_forward.12} parent=5 // pred_check_branch
      %131 = sbr.rel (%p129) target = $region16
    $region15: #{human_aware_forward.12} parent=5 // pred_region
      // Predicated region
      $region17: #{human_aware_forward.12} parent=15 // pred_check
        %p132 = pneg %p29
      $region18: #{human_aware_forward.12} parent=15 // pred_check_branch
        %134 = sbr.rel (%p132) target = $region20
      $region19: #{human_aware_forward.12} parent=15 // pred_region
        %p135 = scmp.lt.s32.totalorder %s9, 2
        %s136 = scalar_select %p135, %s9, 2
        %s137 = smul.addr %s136, 36
        %s138 = smul.addr %s137, 4
        %s139 = scalar_lea.vmem %s0, %s138
      $region20: #{human_aware_forward.12} parent=15 // pred_fallthru
        _
      // Predicated region
      $region21: #{human_aware_forward.12} parent=15 // pred_check
        %p140 = pneg %p55
      $region22: #{human_aware_forward.12} parent=15 // pred_check_branch
        %142 = sbr.rel (%p140) target = $region24
      $region23: #{human_aware_forward.12} parent=15 // pred_region
        %p143 = scmp.lt.s32.totalorder %s9, 2
        %s144 = scalar_select %p143, %s9, 2
        %s145 = smul.addr %s144, 144
        %s146 = smul.addr %s145, 4
        %s147 = scalar_lea.vmem %s1, %s146
      $region24: #{human_aware_forward.12} parent=15 // pred_fallthru
        _
      // Predicated region
      $region25: #{human_aware_forward.12} parent=15 // pred_check
        %p148 = pneg %p81
      $region26: #{human_aware_forward.12} parent=15 // pred_check_branch
        %150 = sbr.rel (%p148) target = $region28
      $region27: #{human_aware_forward.12} parent=15 // pred_region
        %p151 = scmp.lt.s32.totalorder %s9, 2
        %s152 = scalar_select %p151, %s9, 2
        %s153 = scalar_lea.vmem %s2, %s152
      $region28: #{human_aware_forward.12} parent=15 // pred_fallthru
        _
    $region16: #{human_aware_forward.12} parent=5 // pred_fallthru
      _
    %p154 = scmp.le.s32.totalorder 1, %s9
    %p155 = scmp.lt.s32.totalorder %s9, 4
    %p156 = pnand %p154, %p155
    %p157 = pneg %p156
    // Predicated region
    $region29: #{human_aware_forward.12} parent=5 // pred_check
      _
    $region30: #{human_aware_forward.12} parent=5 // pred_check_branch
      %159 = sbr.rel (%p156) target = $region32
    $region31: #{human_aware_forward.12} parent=5 // pred_region
      %s160 = ssub.s32 %s9, 1
      %p161 = scmp.lt.s32.totalorder %s14, 2
      %s162 = scalar_select %p161, %s14, 2
      %s163 = smul.addr %s162, 36
      %s164 = smul.addr %s163, 4
      %s165 = scalar_lea.vmem %s0, %s164
      %p166 = pneg %p35
      %p167 = pneg %p32
      %p168 = scmp.lt.s32.totalorder %s14, 2
      %s169 = scalar_select %p168, %s14, 2
      %s170 = smul.addr %s169, 144
      %s171 = smul.addr %s170, 4
      %s172 = scalar_lea.vmem %s1, %s171
      %p173 = pneg %p61
      %p174 = pneg %p58
      %p175 = scmp.lt.s32.totalorder %s14, 2
      %s176 = scalar_select %p175, %s14, 2
      %s177 = scalar_lea.vmem %s2, %s176
      %p178 = pneg %p87
      %p179 = pneg %p84
      %p180 = pneg %p113
      %p181 = pneg %p110
      %p182 = scmp.lt.s32.totalorder %s14, 2
      %s183 = scalar_select %p182, %s14, 2
      %s184 = smul.addr %s183, 4
      %s185 = smul.addr %s184, 8
      %s186 = scalar_lea.vmem %s3, %s185
      %p187 = scmp.lt.s32.totalorder %s14, 2
      %s188 = scalar_select %p187, %s14, 2
      %s189 = smul.addr %s188, 36
      %s190 = smul.addr %s189, 4
      %s191 = scalar_lea.vmem %s0, %s190
      %p192 = scmp.lt.s32.totalorder %s14, 2
      %s193 = scalar_select %p192, %s14, 2
      %s194 = smul.addr %s193, 144
      %s195 = smul.addr %s194, 4
      %s196 = scalar_lea.vmem %s1, %s195
      %p197 = scmp.lt.s32.totalorder %s14, 2
      %s198 = scalar_select %p197, %s14, 2
      %s199 = scalar_lea.vmem %s2, %s198
      %p200 = scmp.lt.s32.totalorder %s14, 2
      %s201 = scalar_select %p200, %s14, 2
      %s202 = smul.addr %s201, 4
      %s203 = smul.addr %s202, 8
      %s204 = scalar_lea.vmem %s3, %s203
      %p205 = scmp.eq.s32.totalorder %s14, 0
      // Predicated region
      $region33: #{human_aware_forward.12} parent=31 // pred_check
        %p206 = pneg %p205
      $region34: #{human_aware_forward.12} parent=31 // pred_check_branch
        %208 = sbr.rel (%p206) target = $region36
      $region35: #{human_aware_forward.12} parent=31 // pred_region
        %209 = vst [vmem:[#allocation2] sm:$0xff] 0.0
        %210 = vst [vmem:[#allocation2 + $0x8] sm:$0xff] 0.0
        %211 = vst [vmem:[#allocation2 + $0x10] sm:$0xff] 0.0
        %212 = vst [vmem:[#allocation2 + $0x18] sm:$0xff] 0.0
      $region36: #{human_aware_forward.12} parent=31 // pred_fallthru
        _
      %v213 = vld [vmem:[%s191] sm:$0xff]
      %v214 = vld [vmem:[%s191 + $0x8] sm:$0xff]
      %v215 = vld [vmem:[%s191 + $0x10] sm:$0xff]
      %v216 = vld [vmem:[%s191 + $0x18] sm:$0xff]
      %v217 = vld [vmem:[%s191 + $0x20] sm:$0xf]
      %v218 = vld [vmem:[%s191 + $0x24] sm:$0xff]
      %v219 = vld [vmem:[%s191 + $0x2c] sm:$0xff]
      %v220 = vld [vmem:[%s191 + $0x34] sm:$0xff]
      %v221 = vld [vmem:[%s191 + $0x3c] sm:$0xff]
      %v222 = vld [vmem:[%s191 + $0x44] sm:$0xf]
      %v223 = vld [vmem:[%s191 + $0x48] sm:$0xff]
      %v224 = vld [vmem:[%s191 + $0x50] sm:$0xff]
      %v225 = vld [vmem:[%s191 + $0x58] sm:$0xff]
      %v226 = vld [vmem:[%s191 + $0x60] sm:$0xff]
      %v227 = vld [vmem:[%s191 + $0x68] sm:$0xf]
      %v228 = vld [vmem:[%s191 + $0x6c] sm:$0xff]
      %v229 = vld [vmem:[%s191 + $0x74] sm:$0xff]
      %v230 = vld [vmem:[%s191 + $0x7c] sm:$0xff]
      %v231 = vld [vmem:[%s191 + $0x84] sm:$0xff]
      %v232 = vld [vmem:[%s191 + $0x8c] sm:$0xf]
      %v233 = vld [vmem:[%s196] sm:$0xf]
      %v234 = vld [vmem:[%s196 + $0x4] sm:$0xf]
      %v235 = vld [vmem:[%s196 + $0x8] sm:$0xf]
      %v236 = vld [vmem:[%s196 + $0xc] sm:$0xf]
      %v237 = vld [vmem:[%s196 + $0x10] sm:$0xf]
      %v238 = vld [vmem:[%s196 + $0x14] sm:$0xf]
      %v239 = vld [vmem:[%s196 + $0x18] sm:$0xf]
      %v240 = vld [vmem:[%s196 + $0x1c] sm:$0xf]
      %v241 = vld [vmem:[%s196 + $0x20] sm:$0xf]
      %v242 = vld [vmem:[%s196 + $0x24] sm:$0xf]
      %v243 = vld [vmem:[%s196 + $0x28] sm:$0xf]
      %v244 = vld [vmem:[%s196 + $0x2c] sm:$0xf]
      %v245 = vld [vmem:[%s196 + $0x30] sm:$0xf]
      %v246 = vld [vmem:[%s196 + $0x34] sm:$0xf]
      %v247 = vld [vmem:[%s196 + $0x38] sm:$0xf]
      %v248 = vld [vmem:[%s196 + $0x3c] sm:$0xf]
      %v249 = vld [vmem:[%s196 + $0x40] sm:$0xf]
      %v250 = vld [vmem:[%s196 + $0x44] sm:$0xf]
      %v251 = vld [vmem:[%s196 + $0x48] sm:$0xf]
      %v252 = vld [vmem:[%s196 + $0x4c] sm:$0xf]
      %v253 = vld [vmem:[%s196 + $0x50] sm:$0xf]
      %v254 = vld [vmem:[%s196 + $0x54] sm:$0xf]
      %v255 = vld [vmem:[%s196 + $0x58] sm:$0xf]
      %v256 = vld [vmem:[%s196 + $0x5c] sm:$0xf]
      %v257 = vld [vmem:[%s196 + $0x60] sm:$0xf]
      %v258 = vld [vmem:[%s196 + $0x64] sm:$0xf]
      %v259 = vld [vmem:[%s196 + $0x68] sm:$0xf]
      %v260 = vld [vmem:[%s196 + $0x6c] sm:$0xf]
      %v261 = vld [vmem:[%s196 + $0x70] sm:$0xf]
      %v262 = vld [vmem:[%s196 + $0x74] sm:$0xf]
      %v263 = vld [vmem:[%s196 + $0x78] sm:$0xf]
      %v264 = vld [vmem:[%s196 + $0x7c] sm:$0xf]
      %v265 = vld [vmem:[%s196 + $0x80] sm:$0xf]
      %v266 = vld [vmem:[%s196 + $0x84] sm:$0xf]
      %v267 = vld [vmem:[%s196 + $0x88] sm:$0xf]
      %v268 = vld [vmem:[%s196 + $0x8c] sm:$0xf]
      %v269 = vld [vmem:[%s196 + $0x90] sm:$0xf]
      %v270 = vld [vmem:[%s196 + $0x94] sm:$0xf]
      %v271 = vld [vmem:[%s196 + $0x98] sm:$0xf]
      %v272 = vld [vmem:[%s196 + $0x9c] sm:$0xf]
      %v273 = vld [vmem:[%s196 + $0xa0] sm:$0xf]
      %v274 = vld [vmem:[%s196 + $0xa4] sm:$0xf]
      %v275 = vld [vmem:[%s196 + $0xa8] sm:$0xf]
      %v276 = vld [vmem:[%s196 + $0xac] sm:$0xf]
      %v277 = vld [vmem:[%s196 + $0xb0] sm:$0xf]
      %v278 = vld [vmem:[%s196 + $0xb4] sm:$0xf]
      %v279 = vld [vmem:[%s196 + $0xb8] sm:$0xf]
      %v280 = vld [vmem:[%s196 + $0xbc] sm:$0xf]
      %v281 = vld [vmem:[%s196 + $0xc0] sm:$0xf]
      %v282 = vld [vmem:[%s196 + $0xc4] sm:$0xf]
      %v283 = vld [vmem:[%s196 + $0xc8] sm:$0xf]
      %v284 = vld [vmem:[%s196 + $0xcc] sm:$0xf]
      %v285 = vld [vmem:[%s196 + $0xd0] sm:$0xf]
      %v286 = vld [vmem:[%s196 + $0xd4] sm:$0xf]
      %v287 = vld [vmem:[%s196 + $0xd8] sm:$0xf]
      %v288 = vld [vmem:[%s196 + $0xdc] sm:$0xf]
      %v289 = vld [vmem:[%s196 + $0xe0] sm:$0xf]
      %v290 = vld [vmem:[%s196 + $0xe4] sm:$0xf]
      %v291 = vld [vmem:[%s196 + $0xe8] sm:$0xf]
      %v292 = vld [vmem:[%s196 + $0xec] sm:$0xf]
      %v293 = vld [vmem:[%s196 + $0xf0] sm:$0xf]
      %v294 = vld [vmem:[%s196 + $0xf4] sm:$0xf]
      %v295 = vld [vmem:[%s196 + $0xf8] sm:$0xf]
      %v296 = vld [vmem:[%s196 + $0xfc] sm:$0xf]
      %v297 = vld [vmem:[%s196 + $0x100] sm:$0xf]
      %v298 = vld [vmem:[%s196 + $0x104] sm:$0xf]
      %v299 = vld [vmem:[%s196 + $0x108] sm:$0xf]
      %v300 = vld [vmem:[%s196 + $0x10c] sm:$0xf]
      %v301 = vld [vmem:[%s196 + $0x110] sm:$0xf]
      %v302 = vld [vmem:[%s196 + $0x114] sm:$0xf]
      %v303 = vld [vmem:[%s196 + $0x118] sm:$0xf]
      %v304 = vld [vmem:[%s196 + $0x11c] sm:$0xf]
      %v305 = vld [vmem:[%s196 + $0x120] sm:$0xf]
      %v306 = vld [vmem:[%s196 + $0x124] sm:$0xf]
      %v307 = vld [vmem:[%s196 + $0x128] sm:$0xf]
      %v308 = vld [vmem:[%s196 + $0x12c] sm:$0xf]
      %v309 = vld [vmem:[%s196 + $0x130] sm:$0xf]
      %v310 = vld [vmem:[%s196 + $0x134] sm:$0xf]
      %v311 = vld [vmem:[%s196 + $0x138] sm:$0xf]
      %v312 = vld [vmem:[%s196 + $0x13c] sm:$0xf]
      %v313 = vld [vmem:[%s196 + $0x140] sm:$0xf]
      %v314 = vld [vmem:[%s196 + $0x144] sm:$0xf]
      %v315 = vld [vmem:[%s196 + $0x148] sm:$0xf]
      %v316 = vld [vmem:[%s196 + $0x14c] sm:$0xf]
      %v317 = vld [vmem:[%s196 + $0x150] sm:$0xf]
      %v318 = vld [vmem:[%s196 + $0x154] sm:$0xf]
      %v319 = vld [vmem:[%s196 + $0x158] sm:$0xf]
      %v320 = vld [vmem:[%s196 + $0x15c] sm:$0xf]
      %v321 = vld [vmem:[%s196 + $0x160] sm:$0xf]
      %v322 = vld [vmem:[%s196 + $0x164] sm:$0xf]
      %v323 = vld [vmem:[%s196 + $0x168] sm:$0xf]
      %v324 = vld [vmem:[%s196 + $0x16c] sm:$0xf]
      %v325 = vld [vmem:[%s196 + $0x170] sm:$0xf]
      %v326 = vld [vmem:[%s196 + $0x174] sm:$0xf]
      %v327 = vld [vmem:[%s196 + $0x178] sm:$0xf]
      %v328 = vld [vmem:[%s196 + $0x17c] sm:$0xf]
      %v329 = vld [vmem:[%s196 + $0x180] sm:$0xf]
      %v330 = vld [vmem:[%s196 + $0x184] sm:$0xf]
      %v331 = vld [vmem:[%s196 + $0x188] sm:$0xf]
      %v332 = vld [vmem:[%s196 + $0x18c] sm:$0xf]
      %v333 = vld [vmem:[%s196 + $0x190] sm:$0xf]
      %v334 = vld [vmem:[%s196 + $0x194] sm:$0xf]
      %v335 = vld [vmem:[%s196 + $0x198] sm:$0xf]
      %v336 = vld [vmem:[%s196 + $0x19c] sm:$0xf]
      %v337 = vld [vmem:[%s196 + $0x1a0] sm:$0xf]
      %v338 = vld [vmem:[%s196 + $0x1a4] sm:$0xf]
      %v339 = vld [vmem:[%s196 + $0x1a8] sm:$0xf]
      %v340 = vld [vmem:[%s196 + $0x1ac] sm:$0xf]
      %v341 = vld [vmem:[%s196 + $0x1b0] sm:$0xf]
      %v342 = vld [vmem:[%s196 + $0x1b4] sm:$0xf]
      %v343 = vld [vmem:[%s196 + $0x1b8] sm:$0xf]
      %v344 = vld [vmem:[%s196 + $0x1bc] sm:$0xf]
      %v345 = vld [vmem:[%s196 + $0x1c0] sm:$0xf]
      %v346 = vld [vmem:[%s196 + $0x1c4] sm:$0xf]
      %v347 = vld [vmem:[%s196 + $0x1c8] sm:$0xf]
      %v348 = vld [vmem:[%s196 + $0x1cc] sm:$0xf]
      %v349 = vld [vmem:[%s196 + $0x1d0] sm:$0xf]
      %v350 = vld [vmem:[%s196 + $0x1d4] sm:$0xf]
      %v351 = vld [vmem:[%s196 + $0x1d8] sm:$0xf]
      %v352 = vld [vmem:[%s196 + $0x1dc] sm:$0xf]
      %v353 = vld [vmem:[%s196 + $0x1e0] sm:$0xf]
      %v354 = vld [vmem:[%s196 + $0x1e4] sm:$0xf]
      %v355 = vld [vmem:[%s196 + $0x1e8] sm:$0xf]
      %v356 = vld [vmem:[%s196 + $0x1ec] sm:$0xf]
      %v357 = vld [vmem:[%s196 + $0x1f0] sm:$0xf]
      %v358 = vld [vmem:[%s196 + $0x1f4] sm:$0xf]
      %v359 = vld [vmem:[%s196 + $0x1f8] sm:$0xf]
      %v360 = vld [vmem:[%s196 + $0x1fc] sm:$0xf]
      %v361 = vld [vmem:[%s196 + $0x200] sm:$0xf]
      %v362 = vld [vmem:[%s196 + $0x204] sm:$0xf]
      %v363 = vld [vmem:[%s196 + $0x208] sm:$0xf]
      %v364 = vld [vmem:[%s196 + $0x20c] sm:$0xf]
      %v365 = vld [vmem:[%s196 + $0x210] sm:$0xf]
      %v366 = vld [vmem:[%s196 + $0x214] sm:$0xf]
      %v367 = vld [vmem:[%s196 + $0x218] sm:$0xf]
      %v368 = vld [vmem:[%s196 + $0x21c] sm:$0xf]
      %v369 = vld [vmem:[%s196 + $0x220] sm:$0xf]
      %v370 = vld [vmem:[%s196 + $0x224] sm:$0xf]
      %v371 = vld [vmem:[%s196 + $0x228] sm:$0xf]
      %v372 = vld [vmem:[%s196 + $0x22c] sm:$0xf]
      %v373 = vld [vmem:[%s196 + $0x230] sm:$0xf]
      %v374 = vld [vmem:[%s196 + $0x234] sm:$0xf]
      %v375 = vld [vmem:[%s196 + $0x238] sm:$0xf]
      %v376 = vld [vmem:[%s196 + $0x23c] sm:$0xf]
      %v377 = vld [vmem:[%s199] sm:$0x1]
      %v379 = vperm.slane %v377, 0
      %v401 = vunpack.c.l.b16 %v213
      %v402 = vunpack.c.h.b16 %v213
      %v403 = vunpack.c.l.b16 %v214
      %v404 = vunpack.c.h.b16 %v214
      %v405 = vunpack.c.l.b16 %v215
      %v406 = vunpack.c.h.b16 %v215
      %v407 = vunpack.c.l.b16 %v216
      %v408 = vunpack.c.h.b16 %v216
      %v409 = vunpack.c.l.b16 %v217
      %v410 = vunpack.c.l.b16 %v218
      %v411 = vunpack.c.h.b16 %v218
      %v412 = vunpack.c.l.b16 %v219
      %v413 = vunpack.c.h.b16 %v219
      %v414 = vunpack.c.l.b16 %v220
      %v415 = vunpack.c.h.b16 %v220
      %v416 = vunpack.c.l.b16 %v221
      %v417 = vunpack.c.h.b16 %v221
      %v418 = vunpack.c.l.b16 %v222
      %v419 = vunpack.c.l.b16 %v223
      %v420 = vunpack.c.h.b16 %v223
      %v421 = vunpack.c.l.b16 %v224
      %v422 = vunpack.c.h.b16 %v224
      %v423 = vunpack.c.l.b16 %v225
      %v424 = vunpack.c.h.b16 %v225
      %v425 = vunpack.c.l.b16 %v226
      %v426 = vunpack.c.h.b16 %v226
      %v427 = vunpack.c.l.b16 %v227
      %v428 = vunpack.c.l.b16 %v228
      %v429 = vunpack.c.h.b16 %v228
      %v430 = vunpack.c.l.b16 %v229
      %v431 = vunpack.c.h.b16 %v229
      %v432 = vunpack.c.l.b16 %v230
      %v433 = vunpack.c.h.b16 %v230
      %v434 = vunpack.c.l.b16 %v231
      %v435 = vunpack.c.h.b16 %v231
      %v436 = vunpack.c.l.b16 %v232
      %v437 = vpack.c.b16 %v410, %v401
      %v438 = vpack.c.b16 %v411, %v402
      %v439 = vpack.c.b16 %v412, %v403
      %v440 = vpack.c.b16 %v413, %v404
      %v441 = vpack.c.b16 %v414, %v405
      %v442 = vpack.c.b16 %v415, %v406
      %v443 = vpack.c.b16 %v416, %v407
      %v444 = vpack.c.b16 %v417, %v408
      %v445 = vpack.c.b16 %v418, %v409
      %v446 = vpack.c.b16 %v428, %v419
      %v447 = vpack.c.b16 %v429, %v420
      %v448 = vpack.c.b16 %v430, %v421
      %v449 = vpack.c.b16 %v431, %v422
      %v450 = vpack.c.b16 %v432, %v423
      %v451 = vpack.c.b16 %v433, %v424
      %v452 = vpack.c.b16 %v434, %v425
      %v453 = vpack.c.b16 %v435, %v426
      %v454 = vpack.c.b16 %v436, %v427
      %v617 = vunpack.c.l.b16 %v233
      %v618 = vunpack.c.l.b16 %v234
      %v619 = vunpack.c.l.b16 %v235
      %v620 = vunpack.c.l.b16 %v236
      %v621 = vunpack.c.l.b16 %v237
      %v622 = vunpack.c.l.b16 %v238
      %v623 = vunpack.c.l.b16 %v239
      %v624 = vunpack.c.l.b16 %v240
      %v625 = vunpack.c.l.b16 %v241
      %v626 = vunpack.c.l.b16 %v242
      %v627 = vunpack.c.l.b16 %v243
      %v628 = vunpack.c.l.b16 %v244
      %v629 = vunpack.c.l.b16 %v245
      %v630 = vunpack.c.l.b16 %v246
      %v631 = vunpack.c.l.b16 %v247
      %v632 = vunpack.c.l.b16 %v248
      %v633 = vunpack.c.l.b16 %v249
      %v634 = vunpack.c.l.b16 %v250
      %v635 = vunpack.c.l.b16 %v251
      %v636 = vunpack.c.l.b16 %v252
      %v637 = vunpack.c.l.b16 %v253
      %v638 = vunpack.c.l.b16 %v254
      %v639 = vunpack.c.l.b16 %v255
      %v640 = vunpack.c.l.b16 %v256
      %v641 = vunpack.c.l.b16 %v257
      %v642 = vunpack.c.l.b16 %v258
      %v643 = vunpack.c.l.b16 %v259
      %v644 = vunpack.c.l.b16 %v260
      %v645 = vunpack.c.l.b16 %v261
      %v646 = vunpack.c.l.b16 %v262
      %v647 = vunpack.c.l.b16 %v263
      %v648 = vunpack.c.l.b16 %v264
      %v649 = vunpack.c.l.b16 %v265
      %v650 = vunpack.c.l.b16 %v266
      %v651 = vunpack.c.l.b16 %v267
      %v652 = vunpack.c.l.b16 %v268
      %v653 = vunpack.c.l.b16 %v269
      %v654 = vunpack.c.l.b16 %v270
      %v655 = vunpack.c.l.b16 %v271
      %v656 = vunpack.c.l.b16 %v272
      %v657 = vunpack.c.l.b16 %v273
      %v658 = vunpack.c.l.b16 %v274
      %v659 = vunpack.c.l.b16 %v275
      %v660 = vunpack.c.l.b16 %v276
      %v661 = vunpack.c.l.b16 %v277
      %v662 = vunpack.c.l.b16 %v278
      %v663 = vunpack.c.l.b16 %v279
      %v664 = vunpack.c.l.b16 %v280
      %v665 = vunpack.c.l.b16 %v281
      %v666 = vunpack.c.l.b16 %v282
      %v667 = vunpack.c.l.b16 %v283
      %v668 = vunpack.c.l.b16 %v284
      %v669 = vunpack.c.l.b16 %v285
      %v670 = vunpack.c.l.b16 %v286
      %v671 = vunpack.c.l.b16 %v287
      %v672 = vunpack.c.l.b16 %v288
      %v673 = vunpack.c.l.b16 %v289
      %v674 = vunpack.c.l.b16 %v290
      %v675 = vunpack.c.l.b16 %v291
      %v676 = vunpack.c.l.b16 %v292
      %v677 = vunpack.c.l.b16 %v293
      %v678 = vunpack.c.l.b16 %v294
      %v679 = vunpack.c.l.b16 %v295
      %v680 = vunpack.c.l.b16 %v296
      %v681 = vunpack.c.l.b16 %v297
      %v682 = vunpack.c.l.b16 %v298
      %v683 = vunpack.c.l.b16 %v299
      %v684 = vunpack.c.l.b16 %v300
      %v685 = vunpack.c.l.b16 %v301
      %v686 = vunpack.c.l.b16 %v302
      %v687 = vunpack.c.l.b16 %v303
      %v688 = vunpack.c.l.b16 %v304
      %v689 = vunpack.c.l.b16 %v305
      %v690 = vunpack.c.l.b16 %v306
      %v691 = vunpack.c.l.b16 %v307
      %v692 = vunpack.c.l.b16 %v308
      %v693 = vunpack.c.l.b16 %v309
      %v694 = vunpack.c.l.b16 %v310
      %v695 = vunpack.c.l.b16 %v311
      %v696 = vunpack.c.l.b16 %v312
      %v697 = vunpack.c.l.b16 %v313
      %v698 = vunpack.c.l.b16 %v314
      %v699 = vunpack.c.l.b16 %v315
      %v700 = vunpack.c.l.b16 %v316
      %v701 = vunpack.c.l.b16 %v317
      %v702 = vunpack.c.l.b16 %v318
      %v703 = vunpack.c.l.b16 %v319
      %v704 = vunpack.c.l.b16 %v320
      %v705 = vunpack.c.l.b16 %v321
      %v706 = vunpack.c.l.b16 %v322
      %v707 = vunpack.c.l.b16 %v323
      %v708 = vunpack.c.l.b16 %v324
      %v709 = vunpack.c.l.b16 %v325
      %v710 = vunpack.c.l.b16 %v326
      %v711 = vunpack.c.l.b16 %v327
      %v712 = vunpack.c.l.b16 %v328
      %v713 = vunpack.c.l.b16 %v329
      %v714 = vunpack.c.l.b16 %v330
      %v715 = vunpack.c.l.b16 %v331
      %v716 = vunpack.c.l.b16 %v332
      %v717 = vunpack.c.l.b16 %v333
      %v718 = vunpack.c.l.b16 %v334
      %v719 = vunpack.c.l.b16 %v335
      %v720 = vunpack.c.l.b16 %v336
      %v721 = vunpack.c.l.b16 %v337
      %v722 = vunpack.c.l.b16 %v338
      %v723 = vunpack.c.l.b16 %v339
      %v724 = vunpack.c.l.b16 %v340
      %v725 = vunpack.c.l.b16 %v341
      %v726 = vunpack.c.l.b16 %v342
      %v727 = vunpack.c.l.b16 %v343
      %v728 = vunpack.c.l.b16 %v344
      %v729 = vunpack.c.l.b16 %v345
      %v730 = vunpack.c.l.b16 %v346
      %v731 = vunpack.c.l.b16 %v347
      %v732 = vunpack.c.l.b16 %v348
      %v733 = vunpack.c.l.b16 %v349
      %v734 = vunpack.c.l.b16 %v350
      %v735 = vunpack.c.l.b16 %v351
      %v736 = vunpack.c.l.b16 %v352
      %v737 = vunpack.c.l.b16 %v353
      %v738 = vunpack.c.l.b16 %v354
      %v739 = vunpack.c.l.b16 %v355
      %v740 = vunpack.c.l.b16 %v356
      %v741 = vunpack.c.l.b16 %v357
      %v742 = vunpack.c.l.b16 %v358
      %v743 = vunpack.c.l.b16 %v359
      %v744 = vunpack.c.l.b16 %v360
      %v745 = vunpack.c.l.b16 %v361
      %v746 = vunpack.c.l.b16 %v362
      %v747 = vunpack.c.l.b16 %v363
      %v748 = vunpack.c.l.b16 %v364
      %v749 = vunpack.c.l.b16 %v365
      %v750 = vunpack.c.l.b16 %v366
      %v751 = vunpack.c.l.b16 %v367
      %v752 = vunpack.c.l.b16 %v368
      %v753 = vunpack.c.l.b16 %v369
      %v754 = vunpack.c.l.b16 %v370
      %v755 = vunpack.c.l.b16 %v371
      %v756 = vunpack.c.l.b16 %v372
      %v757 = vunpack.c.l.b16 %v373
      %v758 = vunpack.c.l.b16 %v374
      %v759 = vunpack.c.l.b16 %v375
      %v760 = vunpack.c.l.b16 %v376
      %v761 = vpack.c.b16 %v618, %v617
      %v762 = vpack.c.b16 %v620, %v619
      %v763 = vpack.c.b16 %v622, %v621
      %v764 = vpack.c.b16 %v624, %v623
      %v765 = vpack.c.b16 %v626, %v625
      %v766 = vpack.c.b16 %v628, %v627
      %v767 = vpack.c.b16 %v630, %v629
      %v768 = vpack.c.b16 %v632, %v631
      %v769 = vpack.c.b16 %v634, %v633
      %v770 = vpack.c.b16 %v636, %v635
      %v771 = vpack.c.b16 %v638, %v637
      %v772 = vpack.c.b16 %v640, %v639
      %v773 = vpack.c.b16 %v642, %v641
      %v774 = vpack.c.b16 %v644, %v643
      %v775 = vpack.c.b16 %v646, %v645
      %v776 = vpack.c.b16 %v648, %v647
      %v777 = vpack.c.b16 %v650, %v649
      %v778 = vpack.c.b16 %v652, %v651
      %v779 = vpack.c.b16 %v654, %v653
      %v780 = vpack.c.b16 %v656, %v655
      %v781 = vpack.c.b16 %v658, %v657
      %v782 = vpack.c.b16 %v660, %v659
      %v783 = vpack.c.b16 %v662, %v661
      %v784 = vpack.c.b16 %v664, %v663
      %v785 = vpack.c.b16 %v666, %v665
      %v786 = vpack.c.b16 %v668, %v667
      %v787 = vpack.c.b16 %v670, %v669
      %v788 = vpack.c.b16 %v672, %v671
      %v789 = vpack.c.b16 %v674, %v673
      %v790 = vpack.c.b16 %v676, %v675
      %v791 = vpack.c.b16 %v678, %v677
      %v792 = vpack.c.b16 %v680, %v679
      %v793 = vpack.c.b16 %v682, %v681
      %v794 = vpack.c.b16 %v684, %v683
      %v795 = vpack.c.b16 %v686, %v685
      %v796 = vpack.c.b16 %v688, %v687
      %v797 = vpack.c.b16 %v690, %v689
      %v798 = vpack.c.b16 %v692, %v691
      %v799 = vpack.c.b16 %v694, %v693
      %v800 = vpack.c.b16 %v696, %v695
      %v801 = vpack.c.b16 %v698, %v697
      %v802 = vpack.c.b16 %v700, %v699
      %v803 = vpack.c.b16 %v702, %v701
      %v804 = vpack.c.b16 %v704, %v703
      %v805 = vpack.c.b16 %v706, %v705
      %v806 = vpack.c.b16 %v708, %v707
      %v807 = vpack.c.b16 %v710, %v709
      %v808 = vpack.c.b16 %v712, %v711
      %v809 = vpack.c.b16 %v714, %v713
      %v810 = vpack.c.b16 %v716, %v715
      %v811 = vpack.c.b16 %v718, %v717
      %v812 = vpack.c.b16 %v720, %v719
      %v813 = vpack.c.b16 %v722, %v721
      %v814 = vpack.c.b16 %v724, %v723
      %v815 = vpack.c.b16 %v726, %v725
      %v816 = vpack.c.b16 %v728, %v727
      %v817 = vpack.c.b16 %v730, %v729
      %v818 = vpack.c.b16 %v732, %v731
      %v819 = vpack.c.b16 %v734, %v733
      %v820 = vpack.c.b16 %v736, %v735
      %v821 = vpack.c.b16 %v738, %v737
      %v822 = vpack.c.b16 %v740, %v739
      %v823 = vpack.c.b16 %v742, %v741
      %v824 = vpack.c.b16 %v744, %v743
      %v825 = vpack.c.b16 %v746, %v745
      %v826 = vpack.c.b16 %v748, %v747
      %v827 = vpack.c.b16 %v750, %v749
      %v828 = vpack.c.b16 %v752, %v751
      %v829 = vpack.c.b16 %v754, %v753
      %v830 = vpack.c.b16 %v756, %v755
      %v831 = vpack.c.b16 %v758, %v757
      %v832 = vpack.c.b16 %v760, %v759
      %905 = vmatpush.bf16.msra.mxu0 %v768
      %906 = vmatpush.bf16.msra.mxu0 %v767
      %907 = vmatpush.bf16.msra.mxu0 %v766
      %908 = vmatpush.bf16.msra.mxu0 %v765
      %909 = vmatpush.bf16.msra.mxu0 %v764
      %910 = vmatpush.bf16.msra.mxu0 %v763
      %911 = vmatpush.bf16.msra.mxu0 %v762
      %912 = vmatpush.bf16.msra.mxu0 %v761
      %913 = vmatmul.bf16.gmra.mxu0 %v437
      %v914 = vpop.f32.mrf.mxu0
      %v915 = vadd.f32 %v379, %v914
      %v916 = vpop.f32.mrf.mxu0
      %v917 = vadd.f32 %v379, %v916
      %918 = vmatmul.bf16.gmra.mxu0 %v446
      %v919 = vpop.f32.mrf.mxu0
      %v920 = vadd.f32 %v379, %v919
      %v921 = vpop.f32.mrf.mxu0
      %v922 = vadd.f32 %v379, %v921
      %923 = vdwg.mxu0
      %924 = vmatpush.bf16.msra.mxu0 %v776
      %925 = vmatpush.bf16.msra.mxu0 %v775
      %926 = vmatpush.bf16.msra.mxu0 %v774
      %927 = vmatpush.bf16.msra.mxu0 %v773
      %928 = vmatpush.bf16.msra.mxu0 %v772
      %929 = vmatpush.bf16.msra.mxu0 %v771
      %930 = vmatpush.bf16.msra.mxu0 %v770
      %931 = vmatpush.bf16.msra.mxu0 %v769
      %932 = vmatmul.bf16.gmra.mxu0 %v438
      %v933 = vpop.f32.mrf.mxu0
      %v934 = vadd.f32 %v915, %v933
      %v935 = vpop.f32.mrf.mxu0
      %v936 = vadd.f32 %v917, %v935
      %937 = vmatmul.bf16.gmra.mxu0 %v447
      %v938 = vpop.f32.mrf.mxu0
      %v939 = vadd.f32 %v920, %v938
      %v940 = vpop.f32.mrf.mxu0
      %v941 = vadd.f32 %v922, %v940
      %942 = vdwg.mxu0
      %943 = vmatpush.bf16.msra.mxu0 %v784
      %944 = vmatpush.bf16.msra.mxu0 %v783
      %945 = vmatpush.bf16.msra.mxu0 %v782
      %946 = vmatpush.bf16.msra.mxu0 %v781
      %947 = vmatpush.bf16.msra.mxu0 %v780
      %948 = vmatpush.bf16.msra.mxu0 %v779
      %949 = vmatpush.bf16.msra.mxu0 %v778
      %950 = vmatpush.bf16.msra.mxu0 %v777
      %951 = vmatmul.bf16.gmra.mxu0 %v439
      %v952 = vpop.f32.mrf.mxu0
      %v953 = vadd.f32 %v934, %v952
      %v954 = vpop.f32.mrf.mxu0
      %v955 = vadd.f32 %v936, %v954
      %956 = vmatmul.bf16.gmra.mxu0 %v448
      %v957 = vpop.f32.mrf.mxu0
      %v958 = vadd.f32 %v939, %v957
      %v959 = vpop.f32.mrf.mxu0
      %v960 = vadd.f32 %v941, %v959
      %961 = vdwg.mxu0
      %962 = vmatpush.bf16.msra.mxu0 %v792
      %963 = vmatpush.bf16.msra.mxu0 %v791
      %964 = vmatpush.bf16.msra.mxu0 %v790
      %965 = vmatpush.bf16.msra.mxu0 %v789
      %966 = vmatpush.bf16.msra.mxu0 %v788
      %967 = vmatpush.bf16.msra.mxu0 %v787
      %968 = vmatpush.bf16.msra.mxu0 %v786
      %969 = vmatpush.bf16.msra.mxu0 %v785
      %970 = vmatmul.bf16.gmra.mxu0 %v440
      %v971 = vpop.f32.mrf.mxu0
      %v972 = vadd.f32 %v953, %v971
      %v973 = vpop.f32.mrf.mxu0
      %v974 = vadd.f32 %v955, %v973
      %975 = vmatmul.bf16.gmra.mxu0 %v449
      %v976 = vpop.f32.mrf.mxu0
      %v977 = vadd.f32 %v958, %v976
      %v978 = vpop.f32.mrf.mxu0
      %v979 = vadd.f32 %v960, %v978
      %980 = vdwg.mxu0
      %981 = vmatpush.bf16.msra.mxu0 %v800
      %982 = vmatpush.bf16.msra.mxu0 %v799
      %983 = vmatpush.bf16.msra.mxu0 %v798
      %984 = vmatpush.bf16.msra.mxu0 %v797
      %985 = vmatpush.bf16.msra.mxu0 %v796
      %986 = vmatpush.bf16.msra.mxu0 %v795
      %987 = vmatpush.bf16.msra.mxu0 %v794
      %988 = vmatpush.bf16.msra.mxu0 %v793
      %989 = vmatmul.bf16.gmra.mxu0 %v441
      %v990 = vpop.f32.mrf.mxu0
      %v991 = vadd.f32 %v972, %v990
      %v992 = vpop.f32.mrf.mxu0
      %v993 = vadd.f32 %v974, %v992
      %994 = vmatmul.bf16.gmra.mxu0 %v450
      %v995 = vpop.f32.mrf.mxu0
      %v996 = vadd.f32 %v977, %v995
      %v997 = vpop.f32.mrf.mxu0
      %v998 = vadd.f32 %v979, %v997
      %999 = vdwg.mxu0
      %1000 = vmatpush.bf16.msra.mxu0 %v808
      %1001 = vmatpush.bf16.msra.mxu0 %v807
      %1002 = vmatpush.bf16.msra.mxu0 %v806
      %1003 = vmatpush.bf16.msra.mxu0 %v805
      %1004 = vmatpush.bf16.msra.mxu0 %v804
      %1005 = vmatpush.bf16.msra.mxu0 %v803
      %1006 = vmatpush.bf16.msra.mxu0 %v802
      %1007 = vmatpush.bf16.msra.mxu0 %v801
      %1008 = vmatmul.bf16.gmra.mxu0 %v442
      %v1009 = vpop.f32.mrf.mxu0
      %v1010 = vadd.f32 %v991, %v1009
      %v1011 = vpop.f32.mrf.mxu0
      %v1012 = vadd.f32 %v993, %v1011
      %1013 = vmatmul.bf16.gmra.mxu0 %v451
      %v1014 = vpop.f32.mrf.mxu0
      %v1015 = vadd.f32 %v996, %v1014
      %v1016 = vpop.f32.mrf.mxu0
      %v1017 = vadd.f32 %v998, %v1016
      %1018 = vdwg.mxu0
      %1019 = vmatpush.bf16.msra.mxu0 %v816
      %1020 = vmatpush.bf16.msra.mxu0 %v815
      %1021 = vmatpush.bf16.msra.mxu0 %v814
      %1022 = vmatpush.bf16.msra.mxu0 %v813
      %1023 = vmatpush.bf16.msra.mxu0 %v812
      %1024 = vmatpush.bf16.msra.mxu0 %v811
      %1025 = vmatpush.bf16.msra.mxu0 %v810
      %1026 = vmatpush.bf16.msra.mxu0 %v809
      %1027 = vmatmul.bf16.gmra.mxu0 %v443
      %v1028 = vpop.f32.mrf.mxu0
      %v1029 = vadd.f32 %v1010, %v1028
      %v1030 = vpop.f32.mrf.mxu0
      %v1031 = vadd.f32 %v1012, %v1030
      %1032 = vmatmul.bf16.gmra.mxu0 %v452
      %v1033 = vpop.f32.mrf.mxu0
      %v1034 = vadd.f32 %v1015, %v1033
      %v1035 = vpop.f32.mrf.mxu0
      %v1036 = vadd.f32 %v1017, %v1035
      %1037 = vdwg.mxu0
      %1038 = vmatpush.bf16.msra.mxu0 %v824
      %1039 = vmatpush.bf16.msra.mxu0 %v823
      %1040 = vmatpush.bf16.msra.mxu0 %v822
      %1041 = vmatpush.bf16.msra.mxu0 %v821
      %1042 = vmatpush.bf16.msra.mxu0 %v820
      %1043 = vmatpush.bf16.msra.mxu0 %v819
      %1044 = vmatpush.bf16.msra.mxu0 %v818
      %1045 = vmatpush.bf16.msra.mxu0 %v817
      %1046 = vmatmul.bf16.gmra.mxu0 %v444
      %v1047 = vpop.f32.mrf.mxu0
      %v1048 = vadd.f32 %v1029, %v1047
      %v1049 = vpop.f32.mrf.mxu0
      %v1050 = vadd.f32 %v1031, %v1049
      %1051 = vmatmul.bf16.gmra.mxu0 %v453
      %v1052 = vpop.f32.mrf.mxu0
      %v1053 = vadd.f32 %v1034, %v1052
      %v1054 = vpop.f32.mrf.mxu0
      %v1055 = vadd.f32 %v1036, %v1054
      %1056 = vdwg.mxu0
      %1057 = vmatpush.bf16.msra.mxu0 %v832
      %1058 = vmatpush.bf16.msra.mxu0 %v831
      %1059 = vmatpush.bf16.msra.mxu0 %v830
      %1060 = vmatpush.bf16.msra.mxu0 %v829
      %1061 = vmatpush.bf16.msra.mxu0 %v828
      %1062 = vmatpush.bf16.msra.mxu0 %v827
      %1063 = vmatpush.bf16.msra.mxu0 %v826
      %1064 = vmatpush.bf16.msra.mxu0 %v825
      %1065 = vmatmul.bf16.gmra.mxu0 %v445
      %v1066 = vpop.f32.mrf.mxu0
      %v1067 = vadd.f32 %v1048, %v1066
      %v1068 = vpop.f32.mrf.mxu0
      %v1069 = vadd.f32 %v1050, %v1068
      %1070 = vmatmul.bf16.gmra.mxu0 %v454
      %v1071 = vpop.f32.mrf.mxu0
      %v1072 = vadd.f32 %v1053, %v1071
      %v1073 = vpop.f32.mrf.mxu0
      %v1074 = vadd.f32 %v1055, %v1073
      %1075 = vdwg.mxu0
      %p1076 = scmp.lt.s32.totalorder %s14, 2
      // Predicated region
      $region37: #{human_aware_forward.12} parent=31 // pred_check
        %p1077 = pneg %p1076
      $region38: #{human_aware_forward.12} parent=31 // pred_check_branch
        %1079 = sbr.rel (%p1077) target = $region40
      $region39: #{human_aware_forward.12} parent=31 // pred_region
        %v1080 = vmax.f32 %v1067, 0.0
        %v1081 = vmax.f32 %v1069, 0.0
        %v1082 = vmax.f32 %v1072, 0.0
        %v1083 = vmax.f32 %v1074, 0.0
        %1084 = vst [vmem:[%s204] sm:$0xff] %v1080
        %1085 = vst [vmem:[%s204 + $0x8] sm:$0xff] %v1081
        %1086 = vst [vmem:[%s204 + $0x10] sm:$0xff] %v1082
        %1087 = vst [vmem:[%s204 + $0x18] sm:$0xff] %v1083
        %v1088 = vld [vmem:[#allocation2] sm:$0xff]
        %v1089 = vld [vmem:[#allocation2 + $0x8] sm:$0xff]
        %v1090 = vld [vmem:[#allocation2 + $0x10] sm:$0xff]
        %v1091 = vld [vmem:[#allocation2 + $0x18] sm:$0xff]
        %v1092 = vadd.f32 %v1088, %v1080
        %v1093 = vadd.f32 %v1089, %v1081
        %v1094 = vadd.f32 %v1090, %v1082
        %v1095 = vadd.f32 %v1091, %v1083
        %1096 = vst [vmem:[#allocation2] sm:$0xff] %v1092
        %1097 = vst [vmem:[#allocation2 + $0x8] sm:$0xff] %v1093
        %1098 = vst [vmem:[#allocation2 + $0x10] sm:$0xff] %v1094
        %1099 = vst [vmem:[#allocation2 + $0x18] sm:$0xff] %v1095
      $region40: #{human_aware_forward.12} parent=31 // pred_fallthru
        _
      %p1100 = scmp.eq.s32.totalorder %s14, 2
      // Predicated region
      $region41: #{human_aware_forward.12} parent=31 // pred_check
        %p1101 = pneg %p1100
      $region42: #{human_aware_forward.12} parent=31 // pred_check_branch
        %1103 = sbr.rel (%p1101) target = $region44
      $region43: #{human_aware_forward.12} parent=31 // pred_region
        %v1104 = vld [vmem:[#allocation2] sm:$0xff]
        %v1105 = vld [vmem:[#allocation2 + $0x8] sm:$0xff]
        %v1106 = vld [vmem:[#allocation2 + $0x10] sm:$0xff]
        %v1107 = vld [vmem:[#allocation2 + $0x18] sm:$0xff]
        %v1108 = vadd.f32 %v1067, %v1104
        %v1109 = vadd.f32 %v1069, %v1105
        %v1110 = vadd.f32 %v1072, %v1106
        %v1111 = vadd.f32 %v1074, %v1107
        %v1112 = vmax.f32 %v1108, 0.0
        %v1113 = vmax.f32 %v1109, 0.0
        %v1114 = vmax.f32 %v1110, 0.0
        %v1115 = vmax.f32 %v1111, 0.0
        %1116 = vst [vmem:[%s204] sm:$0xff] %v1112
        %1117 = vst [vmem:[%s204 + $0x8] sm:$0xff] %v1113
        %1118 = vst [vmem:[%s204 + $0x10] sm:$0xff] %v1114
        %1119 = vst [vmem:[%s204 + $0x18] sm:$0xff] %v1115
      $region44: #{human_aware_forward.12} parent=31 // pred_fallthru
        _
      %p1120 = scmp.lt.s32.totalorder %s14, 2
      %s1121 = scalar_select %p1120, %s14, 2
      %s1122 = smul.addr %s1121, 4
      %s1123 = smul.addr %s1122, 8
      %s1124 = scalar_lea.vmem %s3, %s1123
      // Predicated region
      $region45: #{human_aware_forward.12} parent=31 // pred_check
        %p1125 = pneg %p110
      $region46: #{human_aware_forward.12} parent=31 // pred_check_branch
        %1127 = sbr.rel (%p1125) target = $region48
      $region47: #{human_aware_forward.12} parent=31 // pred_region
        _
      $region48: #{human_aware_forward.12} parent=31 // pred_fallthru
        _
    $region32: #{human_aware_forward.12} parent=5 // pred_fallthru
      _
    %p1128 = scmp.le.s32.totalorder 2, %s9
    // Predicated region
    $region49: #{human_aware_forward.12} parent=5 // pred_check
      %p1129 = pneg %p1128
    $region50: #{human_aware_forward.12} parent=5 // pred_check_branch
      %1131 = sbr.rel (%p1129) target = $region52
    $region51: #{human_aware_forward.12} parent=5 // pred_region
      %s1132 = ssub.s32 %s9, 2
      // Predicated region
      $region53: #{human_aware_forward.12} parent=51 // pred_check
        %p1133 = pneg %p116
      $region54: #{human_aware_forward.12} parent=51 // pred_check_branch
        %1135 = sbr.rel (%p1133) target = $region56
      $region55: #{human_aware_forward.12} parent=51 // pred_region
        %p1136 = scmp.lt.s32.totalorder %s15, 2
        %s1137 = scalar_select %p1136, %s15, 2
        %s1138 = smul.addr %s1137, 4
        %s1139 = smul.addr %s1138, 8
        %s1140 = scalar_lea.vmem %s3, %s1139
      $region56: #{human_aware_forward.12} parent=51 // pred_fallthru
        _
    $region52: #{human_aware_forward.12} parent=5 // pred_fallthru
      _
  $region6: #{human_aware_forward.12} parent=0 // loop_footer
    %s13 = sadd.s32 1, %s9
  $region7: #{human_aware_forward.12} parent=0 // loop_footer_branch
    %8 = sbr.rel target = $region3
  $region8: #{human_aware_forward.12} parent=0 // loop_exit
    _

// kernel: human_aware_forward.13
$region0: #{human_aware_forward.13}
  #allocation0 [shape = 'u32[]', space=smem, size = 0x4, offset = 0x4, fixed_abs, tag = 'smem constant byte address 0x4 - core index']
  #allocation1 [shape = 'u32[72,128]{1,0:T(1,128)}', space=vmem, size = 0x9000, scoped, tag = 'internal scratch']
  #allocation2 [shape = 'f32[32,128]{1,0:T(8,128)}', space=vmem, size = 0x4000, scoped, tag = 'scratch operand']
  %s0 = inlined_call_operand.vmem [shape: bf16[3,32,640], index: 0, kind: input, shape index: {}]
  %s1 = inlined_call_operand.vmem [shape: bf16[3,640,128], index: 1, kind: input, shape index: {}]
  %s2 = inlined_call_operand.vmem [shape: f32[3,1,128], index: 2, kind: input, shape index: {}]
  %s3 = inlined_call_operand.vmem [shape: f32[3,32,128], index: 3, kind: output, shape index: {}]
  %s4 = sld [smem:[#allocation0]]
  $region57: #{human_aware_forward.13} parent=0
    _
  %s6 = ssub.s32 1, %s4
  %s7 = scalar_select 0, %s6, %s4
  loop: start=0, step=1, limit=5
  $region2: #{human_aware_forward.13} parent=0 // loop_pre_header
    _
  $region3: #{human_aware_forward.13} parent=0 // loop_header
    %s9 = sphi 0, %s13
    %p10 = scmp.ge.s32.totalorder %s9, 5
    %s19 = sphi 0, %s21
    %s22 = sphi 0, %s19
    %s23 = sphi 0, %s22
    %s39 = sphi 0, %s23
    %s45 = sphi 0, %s47
    %s48 = sphi 0, %s45
    %s49 = sphi 0, %s48
    %s65 = sphi 0, %s49
    %s71 = sphi 0, %s73
    %s74 = sphi 0, %s71
    %s75 = sphi 0, %s74
    %s91 = sphi 0, %s75
    %s97 = sphi 0, %s99
    %s100 = sphi 0, %s97
    %s101 = sphi 0, %s100
    %s117 = sphi 0, %s101
  $region4: #{human_aware_forward.13} parent=0 // loop_header_branch
    %12 = sbr.rel (%p10) target = $region8
  $region5: #{human_aware_forward.13} parent=0 // loop_body
    %s14 = ssub.s32 %s9, 1
    %s15 = ssub.s32 %s9, 2
    %s16 = sadd.s32 %s9, 1
    %s17 = ssub.s32 %s9, %s16
    %p18 = scmp.eq.s32.totalorder %s17, 0
    %s20 = sadd.s32 %s19, 1
    %s21 = scalar_select %p18, %s19, %s20
    %p24 = pneg %p18
    %p25 = scmp.eq.s32.totalorder %s9, 2
    %p26 = por %p24, %p25
    %p27 = scmp.ne.s32.totalorder %s19, %s22
    %p28 = scmp.eq.s32.totalorder %s9, 0
    %p29 = por %p27, %p28
    %p30 = scmp.ne.s32.totalorder %s19, %s22
    %p31 = scmp.eq.s32.totalorder %s14, 2
    %p32 = por %p30, %p31
    %p33 = scmp.ne.s32.totalorder %s22, %s23
    %p34 = scmp.eq.s32.totalorder %s14, 0
    %p35 = por %p33, %p34
    %p36 = scmp.ne.s32.totalorder %s22, %s23
    %p37 = scmp.eq.s32.totalorder %s15, 2
    %p38 = por %p36, %p37
    %p40 = scmp.ne.s32.totalorder %s23, %s39
    %p41 = scmp.eq.s32.totalorder %s15, 0
    %p42 = por %p40, %p41
    %s43 = ssub.s32 %s9, %s16
    %p44 = scmp.eq.s32.totalorder %s43, 0
    %s46 = sadd.s32 %s45, 1
    %s47 = scalar_select %p44, %s45, %s46
    %p50 = pneg %p44
    %p51 = scmp.eq.s32.totalorder %s9, 2
    %p52 = por %p50, %p51
    %p53 = scmp.ne.s32.totalorder %s45, %s48
    %p54 = scmp.eq.s32.totalorder %s9, 0
    %p55 = por %p53, %p54
    %p56 = scmp.ne.s32.totalorder %s45, %s48
    %p57 = scmp.eq.s32.totalorder %s14, 2
    %p58 = por %p56, %p57
    %p59 = scmp.ne.s32.totalorder %s48, %s49
    %p60 = scmp.eq.s32.totalorder %s14, 0
    %p61 = por %p59, %p60
    %p62 = scmp.ne.s32.totalorder %s48, %s49
    %p63 = scmp.eq.s32.totalorder %s15, 2
    %p64 = por %p62, %p63
    %p66 = scmp.ne.s32.totalorder %s49, %s65
    %p67 = scmp.eq.s32.totalorder %s15, 0
    %p68 = por %p66, %p67
    %s69 = ssub.s32 %s9, %s16
    %p70 = scmp.eq.s32.totalorder %s69, 0
    %s72 = sadd.s32 %s71, 1
    %s73 = scalar_select %p70, %s71, %s72
    %p76 = pneg %p70
    %p77 = scmp.eq.s32.totalorder %s9, 2
    %p78 = por %p76, %p77
    %p79 = scmp.ne.s32.totalorder %s71, %s74
    %p80 = scmp.eq.s32.totalorder %s9, 0
    %p81 = por %p79, %p80
    %p82 = scmp.ne.s32.totalorder %s71, %s74
    %p83 = scmp.eq.s32.totalorder %s14, 2
    %p84 = por %p82, %p83
    %p85 = scmp.ne.s32.totalorder %s74, %s75
    %p86 = scmp.eq.s32.totalorder %s14, 0
    %p87 = por %p85, %p86
    %p88 = scmp.ne.s32.totalorder %s74, %s75
    %p89 = scmp.eq.s32.totalorder %s15, 2
    %p90 = por %p88, %p89
    %p92 = scmp.ne.s32.totalorder %s75, %s91
    %p93 = scmp.eq.s32.totalorder %s15, 0
    %p94 = por %p92, %p93
    %s95 = ssub.s32 %s9, %s16
    %p96 = scmp.eq.s32.totalorder %s95, 0
    %s98 = sadd.s32 %s97, 1
    %s99 = scalar_select %p96, %s97, %s98
    %p102 = pneg %p96
    %p103 = scmp.eq.s32.totalorder %s9, 2
    %p104 = por %p102, %p103
    %p105 = scmp.ne.s32.totalorder %s97, %s100
    %p106 = scmp.eq.s32.totalorder %s9, 0
    %p107 = por %p105, %p106
    %p108 = scmp.ne.s32.totalorder %s97, %s100
    %p109 = scmp.eq.s32.totalorder %s14, 2
    %p110 = por %p108, %p109
    %p111 = scmp.ne.s32.totalorder %s100, %s101
    %p112 = scmp.eq.s32.totalorder %s14, 0
    %p113 = por %p111, %p112
    %p114 = scmp.ne.s32.totalorder %s100, %s101
    %p115 = scmp.eq.s32.totalorder %s15, 2
    %p116 = por %p114, %p115
    %p118 = scmp.ne.s32.totalorder %s101, %s117
    %p119 = scmp.eq.s32.totalorder %s15, 0
    %p120 = por %p118, %p119
    %p121 = scmp.le.s32.totalorder 1, %s9
    %p122 = scmp.lt.s32.totalorder %s9, 4
    %p123 = pnand %p121, %p122
    %p124 = pneg %p123
    // Predicated region
    $region9: #{human_aware_forward.13} parent=5 // pred_check
      _
    $region10: #{human_aware_forward.13} parent=5 // pred_check_branch
      %126 = sbr.rel (%p123) target = $region12
    $region11: #{human_aware_forward.13} parent=5 // pred_region
      %s127 = ssub.s32 %s9, 1
    $region12: #{human_aware_forward.13} parent=5 // pred_fallthru
      _
    %p128 = scmp.lt.s32.totalorder %s9, 3
    // Predicated region
    $region13: #{human_aware_forward.13} parent=5 // pred_check
      %p129 = pneg %p128
    $region14: #{human_aware_forward.13} parent=5 // pred_check_branch
      %131 = sbr.rel (%p129) target = $region16
    $region15: #{human_aware_forward.13} parent=5 // pred_region
      // Predicated region
      $region17: #{human_aware_forward.13} parent=15 // pred_check
        %p132 = pneg %p29
      $region18: #{human_aware_forward.13} parent=15 // pred_check_branch
        %134 = sbr.rel (%p132) target = $region20
      $region19: #{human_aware_forward.13} parent=15 // pred_region
        %p135 = scmp.lt.s32.totalorder %s9, 2
        %s136 = scalar_select %p135, %s9, 2
        %s137 = smul.addr %s136, 20
        %s138 = smul.addr %s137, 4
        %s139 = scalar_lea.vmem %s0, %s138
      $region20: #{human_aware_forward.13} parent=15 // pred_fallthru
        _
      // Predicated region
      $region21: #{human_aware_forward.13} parent=15 // pred_check
        %p140 = pneg %p55
      $region22: #{human_aware_forward.13} parent=15 // pred_check_branch
        %142 = sbr.rel (%p140) target = $region24
      $region23: #{human_aware_forward.13} parent=15 // pred_region
        %p143 = scmp.lt.s32.totalorder %s9, 2
        %s144 = scalar_select %p143, %s9, 2
        %s145 = smul.addr %s144, 80
        %s146 = smul.addr %s145, 4
        %s147 = scalar_lea.vmem %s1, %s146
      $region24: #{human_aware_forward.13} parent=15 // pred_fallthru
        _
      // Predicated region
      $region25: #{human_aware_forward.13} parent=15 // pred_check
        %p148 = pneg %p81
      $region26: #{human_aware_forward.13} parent=15 // pred_check_branch
        %150 = sbr.rel (%p148) target = $region28
      $region27: #{human_aware_forward.13} parent=15 // pred_region
        %p151 = scmp.lt.s32.totalorder %s9, 2
        %s152 = scalar_select %p151, %s9, 2
        %s153 = scalar_lea.vmem %s2, %s152
      $region28: #{human_aware_forward.13} parent=15 // pred_fallthru
        _
    $region16: #{human_aware_forward.13} parent=5 // pred_fallthru
      _
    %p154 = scmp.le.s32.totalorder 1, %s9
    %p155 = scmp.lt.s32.totalorder %s9, 4
    %p156 = pnand %p154, %p155
    %p157 = pneg %p156
    // Predicated region
    $region29: #{human_aware_forward.13} parent=5 // pred_check
      _
    $region30: #{human_aware_forward.13} parent=5 // pred_check_branch
      %159 = sbr.rel (%p156) target = $region32
    $region31: #{human_aware_forward.13} parent=5 // pred_region
      %s160 = ssub.s32 %s9, 1
      %p161 = scmp.lt.s32.totalorder %s14, 2
      %s162 = scalar_select %p161, %s14, 2
      %s163 = smul.addr %s162, 20
      %s164 = smul.addr %s163, 4
      %s165 = scalar_lea.vmem %s0, %s164
      %p166 = pneg %p35
      %p167 = pneg %p32
      %p168 = scmp.lt.s32.totalorder %s14, 2
      %s169 = scalar_select %p168, %s14, 2
      %s170 = smul.addr %s169, 80
      %s171 = smul.addr %s170, 4
      %s172 = scalar_lea.vmem %s1, %s171
      %p173 = pneg %p61
      %p174 = pneg %p58
      %p175 = scmp.lt.s32.totalorder %s14, 2
      %s176 = scalar_select %p175, %s14, 2
      %s177 = scalar_lea.vmem %s2, %s176
      %p178 = pneg %p87
      %p179 = pneg %p84
      %p180 = pneg %p113
      %p181 = pneg %p110
      %p182 = scmp.lt.s32.totalorder %s14, 2
      %s183 = scalar_select %p182, %s14, 2
      %s184 = smul.addr %s183, 4
      %s185 = smul.addr %s184, 8
      %s186 = scalar_lea.vmem %s3, %s185
      %p187 = scmp.lt.s32.totalorder %s14, 2
      %s188 = scalar_select %p187, %s14, 2
      %s189 = smul.addr %s188, 20
      %s190 = smul.addr %s189, 4
      %s191 = scalar_lea.vmem %s0, %s190
      %p192 = scmp.lt.s32.totalorder %s14, 2
      %s193 = scalar_select %p192, %s14, 2
      %s194 = smul.addr %s193, 80
      %s195 = smul.addr %s194, 4
      %s196 = scalar_lea.vmem %s1, %s195
      %p197 = scmp.lt.s32.totalorder %s14, 2
      %s198 = scalar_select %p197, %s14, 2
      %s199 = scalar_lea.vmem %s2, %s198
      %p200 = scmp.lt.s32.totalorder %s14, 2
      %s201 = scalar_select %p200, %s14, 2
      %s202 = smul.addr %s201, 4
      %s203 = smul.addr %s202, 8
      %s204 = scalar_lea.vmem %s3, %s203
      %p205 = scmp.eq.s32.totalorder %s14, 0
      // Predicated region
      $region33: #{human_aware_forward.13} parent=31 // pred_check
        %p206 = pneg %p205
      $region34: #{human_aware_forward.13} parent=31 // pred_check_branch
        %208 = sbr.rel (%p206) target = $region36
      $region35: #{human_aware_forward.13} parent=31 // pred_region
        %209 = vst [vmem:[#allocation2] sm:$0xff] 0.0
        %210 = vst [vmem:[#allocation2 + $0x8] sm:$0xff] 0.0
        %211 = vst [vmem:[#allocation2 + $0x10] sm:$0xff] 0.0
        %212 = vst [vmem:[#allocation2 + $0x18] sm:$0xff] 0.0
      $region36: #{human_aware_forward.13} parent=31 // pred_fallthru
        _
      %v213 = vld [vmem:[%s191] sm:$0xff]
      %v214 = vld [vmem:[%s191 + $0x8] sm:$0xff]
      %v215 = vld [vmem:[%s191 + $0x10] sm:$0xf]
      %v216 = vld [vmem:[%s191 + $0x14] sm:$0xff]
      %v217 = vld [vmem:[%s191 + $0x1c] sm:$0xff]
      %v218 = vld [vmem:[%s191 + $0x24] sm:$0xf]
      %v219 = vld [vmem:[%s191 + $0x28] sm:$0xff]
      %v220 = vld [vmem:[%s191 + $0x30] sm:$0xff]
      %v221 = vld [vmem:[%s191 + $0x38] sm:$0xf]
      %v222 = vld [vmem:[%s191 + $0x3c] sm:$0xff]
      %v223 = vld [vmem:[%s191 + $0x44] sm:$0xff]
      %v224 = vld [vmem:[%s191 + $0x4c] sm:$0xf]
      %v225 = vld [vmem:[%s196] sm:$0xf]
      %v226 = vld [vmem:[%s196 + $0x4] sm:$0xf]
      %v227 = vld [vmem:[%s196 + $0x8] sm:$0xf]
      %v228 = vld [vmem:[%s196 + $0xc] sm:$0xf]
      %v229 = vld [vmem:[%s196 + $0x10] sm:$0xf]
      %v230 = vld [vmem:[%s196 + $0x14] sm:$0xf]
      %v231 = vld [vmem:[%s196 + $0x18] sm:$0xf]
      %v232 = vld [vmem:[%s196 + $0x1c] sm:$0xf]
      %v233 = vld [vmem:[%s196 + $0x20] sm:$0xf]
      %v234 = vld [vmem:[%s196 + $0x24] sm:$0xf]
      %v235 = vld [vmem:[%s196 + $0x28] sm:$0xf]
      %v236 = vld [vmem:[%s196 + $0x2c] sm:$0xf]
      %v237 = vld [vmem:[%s196 + $0x30] sm:$0xf]
      %v238 = vld [vmem:[%s196 + $0x34] sm:$0xf]
      %v239 = vld [vmem:[%s196 + $0x38] sm:$0xf]
      %v240 = vld [vmem:[%s196 + $0x3c] sm:$0xf]
      %v241 = vld [vmem:[%s196 + $0x40] sm:$0xf]
      %v242 = vld [vmem:[%s196 + $0x44] sm:$0xf]
      %v243 = vld [vmem:[%s196 + $0x48] sm:$0xf]
      %v244 = vld [vmem:[%s196 + $0x4c] sm:$0xf]
      %v245 = vld [vmem:[%s196 + $0x50] sm:$0xf]
      %v246 = vld [vmem:[%s196 + $0x54] sm:$0xf]
      %v247 = vld [vmem:[%s196 + $0x58] sm:$0xf]
      %v248 = vld [vmem:[%s196 + $0x5c] sm:$0xf]
      %v249 = vld [vmem:[%s196 + $0x60] sm:$0xf]
      %v250 = vld [vmem:[%s196 + $0x64] sm:$0xf]
      %v251 = vld [vmem:[%s196 + $0x68] sm:$0xf]
      %v252 = vld [vmem:[%s196 + $0x6c] sm:$0xf]
      %v253 = vld [vmem:[%s196 + $0x70] sm:$0xf]
      %v254 = vld [vmem:[%s196 + $0x74] sm:$0xf]
      %v255 = vld [vmem:[%s196 + $0x78] sm:$0xf]
      %v256 = vld [vmem:[%s196 + $0x7c] sm:$0xf]
      %v257 = vld [vmem:[%s196 + $0x80] sm:$0xf]
      %v258 = vld [vmem:[%s196 + $0x84] sm:$0xf]
      %v259 = vld [vmem:[%s196 + $0x88] sm:$0xf]
      %v260 = vld [vmem:[%s196 + $0x8c] sm:$0xf]
      %v261 = vld [vmem:[%s196 + $0x90] sm:$0xf]
      %v262 = vld [vmem:[%s196 + $0x94] sm:$0xf]
      %v263 = vld [vmem:[%s196 + $0x98] sm:$0xf]
      %v264 = vld [vmem:[%s196 + $0x9c] sm:$0xf]
      %v265 = vld [vmem:[%s196 + $0xa0] sm:$0xf]
      %v266 = vld [vmem:[%s196 + $0xa4] sm:$0xf]
      %v267 = vld [vmem:[%s196 + $0xa8] sm:$0xf]
      %v268 = vld [vmem:[%s196 + $0xac] sm:$0xf]
      %v269 = vld [vmem:[%s196 + $0xb0] sm:$0xf]
      %v270 = vld [vmem:[%s196 + $0xb4] sm:$0xf]
      %v271 = vld [vmem:[%s196 + $0xb8] sm:$0xf]
      %v272 = vld [vmem:[%s196 + $0xbc] sm:$0xf]
      %v273 = vld [vmem:[%s196 + $0xc0] sm:$0xf]
      %v274 = vld [vmem:[%s196 + $0xc4] sm:$0xf]
      %v275 = vld [vmem:[%s196 + $0xc8] sm:$0xf]
      %v276 = vld [vmem:[%s196 + $0xcc] sm:$0xf]
      %v277 = vld [vmem:[%s196 + $0xd0] sm:$0xf]
      %v278 = vld [vmem:[%s196 + $0xd4] sm:$0xf]
      %v279 = vld [vmem:[%s196 + $0xd8] sm:$0xf]
      %v280 = vld [vmem:[%s196 + $0xdc] sm:$0xf]
      %v281 = vld [vmem:[%s196 + $0xe0] sm:$0xf]
      %v282 = vld [vmem:[%s196 + $0xe4] sm:$0xf]
      %v283 = vld [vmem:[%s196 + $0xe8] sm:$0xf]
      %v284 = vld [vmem:[%s196 + $0xec] sm:$0xf]
      %v285 = vld [vmem:[%s196 + $0xf0] sm:$0xf]
      %v286 = vld [vmem:[%s196 + $0xf4] sm:$0xf]
      %v287 = vld [vmem:[%s196 + $0xf8] sm:$0xf]
      %v288 = vld [vmem:[%s196 + $0xfc] sm:$0xf]
      %v289 = vld [vmem:[%s196 + $0x100] sm:$0xf]
      %v290 = vld [vmem:[%s196 + $0x104] sm:$0xf]
      %v291 = vld [vmem:[%s196 + $0x108] sm:$0xf]
      %v292 = vld [vmem:[%s196 + $0x10c] sm:$0xf]
      %v293 = vld [vmem:[%s196 + $0x110] sm:$0xf]
      %v294 = vld [vmem:[%s196 + $0x114] sm:$0xf]
      %v295 = vld [vmem:[%s196 + $0x118] sm:$0xf]
      %v296 = vld [vmem:[%s196 + $0x11c] sm:$0xf]
      %v297 = vld [vmem:[%s196 + $0x120] sm:$0xf]
      %v298 = vld [vmem:[%s196 + $0x124] sm:$0xf]
      %v299 = vld [vmem:[%s196 + $0x128] sm:$0xf]
      %v300 = vld [vmem:[%s196 + $0x12c] sm:$0xf]
      %v301 = vld [vmem:[%s196 + $0x130] sm:$0xf]
      %v302 = vld [vmem:[%s196 + $0x134] sm:$0xf]
      %v303 = vld [vmem:[%s196 + $0x138] sm:$0xf]
      %v304 = vld [vmem:[%s196 + $0x13c] sm:$0xf]
      %v305 = vld [vmem:[%s199] sm:$0x1]
      %v307 = vperm.slane %v305, 0
      %v321 = vunpack.c.l.b16 %v213
      %v322 = vunpack.c.h.b16 %v213
      %v323 = vunpack.c.l.b16 %v214
      %v324 = vunpack.c.h.b16 %v214
      %v325 = vunpack.c.l.b16 %v215
      %v326 = vunpack.c.l.b16 %v216
      %v327 = vunpack.c.h.b16 %v216
      %v328 = vunpack.c.l.b16 %v217
      %v329 = vunpack.c.h.b16 %v217
      %v330 = vunpack.c.l.b16 %v218
      %v331 = vunpack.c.l.b16 %v219
      %v332 = vunpack.c.h.b16 %v219
      %v333 = vunpack.c.l.b16 %v220
      %v334 = vunpack.c.h.b16 %v220
      %v335 = vunpack.c.l.b16 %v221
      %v336 = vunpack.c.l.b16 %v222
      %v337 = vunpack.c.h.b16 %v222
      %v338 = vunpack.c.l.b16 %v223
      %v339 = vunpack.c.h.b16 %v223
      %v340 = vunpack.c.l.b16 %v224
      %v341 = vpack.c.b16 %v326, %v321
      %v342 = vpack.c.b16 %v327, %v322
      %v343 = vpack.c.b16 %v328, %v323
      %v344 = vpack.c.b16 %v329, %v324
      %v345 = vpack.c.b16 %v330, %v325
      %v346 = vpack.c.b16 %v336, %v331
      %v347 = vpack.c.b16 %v337, %v332
      %v348 = vpack.c.b16 %v338, %v333
      %v349 = vpack.c.b16 %v339, %v334
      %v350 = vpack.c.b16 %v340, %v335
      %v441 = vunpack.c.l.b16 %v225
      %v442 = vunpack.c.l.b16 %v226
      %v443 = vunpack.c.l.b16 %v227
      %v444 = vunpack.c.l.b16 %v228
      %v445 = vunpack.c.l.b16 %v229
      %v446 = vunpack.c.l.b16 %v230
      %v447 = vunpack.c.l.b16 %v231
      %v448 = vunpack.c.l.b16 %v232
      %v449 = vunpack.c.l.b16 %v233
      %v450 = vunpack.c.l.b16 %v234
      %v451 = vunpack.c.l.b16 %v235
      %v452 = vunpack.c.l.b16 %v236
      %v453 = vunpack.c.l.b16 %v237
      %v454 = vunpack.c.l.b16 %v238
      %v455 = vunpack.c.l.b16 %v239
      %v456 = vunpack.c.l.b16 %v240
      %v457 = vunpack.c.l.b16 %v241
      %v458 = vunpack.c.l.b16 %v242
      %v459 = vunpack.c.l.b16 %v243
      %v460 = vunpack.c.l.b16 %v244
      %v461 = vunpack.c.l.b16 %v245
      %v462 = vunpack.c.l.b16 %v246
      %v463 = vunpack.c.l.b16 %v247
      %v464 = vunpack.c.l.b16 %v248
      %v465 = vunpack.c.l.b16 %v249
      %v466 = vunpack.c.l.b16 %v250
      %v467 = vunpack.c.l.b16 %v251
      %v468 = vunpack.c.l.b16 %v252
      %v469 = vunpack.c.l.b16 %v253
      %v470 = vunpack.c.l.b16 %v254
      %v471 = vunpack.c.l.b16 %v255
      %v472 = vunpack.c.l.b16 %v256
      %v473 = vunpack.c.l.b16 %v257
      %v474 = vunpack.c.l.b16 %v258
      %v475 = vunpack.c.l.b16 %v259
      %v476 = vunpack.c.l.b16 %v260
      %v477 = vunpack.c.l.b16 %v261
      %v478 = vunpack.c.l.b16 %v262
      %v479 = vunpack.c.l.b16 %v263
      %v480 = vunpack.c.l.b16 %v264
      %v481 = vunpack.c.l.b16 %v265
      %v482 = vunpack.c.l.b16 %v266
      %v483 = vunpack.c.l.b16 %v267
      %v484 = vunpack.c.l.b16 %v268
      %v485 = vunpack.c.l.b16 %v269
      %v486 = vunpack.c.l.b16 %v270
      %v487 = vunpack.c.l.b16 %v271
      %v488 = vunpack.c.l.b16 %v272
      %v489 = vunpack.c.l.b16 %v273
      %v490 = vunpack.c.l.b16 %v274
      %v491 = vunpack.c.l.b16 %v275
      %v492 = vunpack.c.l.b16 %v276
      %v493 = vunpack.c.l.b16 %v277
      %v494 = vunpack.c.l.b16 %v278
      %v495 = vunpack.c.l.b16 %v279
      %v496 = vunpack.c.l.b16 %v280
      %v497 = vunpack.c.l.b16 %v281
      %v498 = vunpack.c.l.b16 %v282
      %v499 = vunpack.c.l.b16 %v283
      %v500 = vunpack.c.l.b16 %v284
      %v501 = vunpack.c.l.b16 %v285
      %v502 = vunpack.c.l.b16 %v286
      %v503 = vunpack.c.l.b16 %v287
      %v504 = vunpack.c.l.b16 %v288
      %v505 = vunpack.c.l.b16 %v289
      %v506 = vunpack.c.l.b16 %v290
      %v507 = vunpack.c.l.b16 %v291
      %v508 = vunpack.c.l.b16 %v292
      %v509 = vunpack.c.l.b16 %v293
      %v510 = vunpack.c.l.b16 %v294
      %v511 = vunpack.c.l.b16 %v295
      %v512 = vunpack.c.l.b16 %v296
      %v513 = vunpack.c.l.b16 %v297
      %v514 = vunpack.c.l.b16 %v298
      %v515 = vunpack.c.l.b16 %v299
      %v516 = vunpack.c.l.b16 %v300
      %v517 = vunpack.c.l.b16 %v301
      %v518 = vunpack.c.l.b16 %v302
      %v519 = vunpack.c.l.b16 %v303
      %v520 = vunpack.c.l.b16 %v304
      %v521 = vpack.c.b16 %v442, %v441
      %v522 = vpack.c.b16 %v444, %v443
      %v523 = vpack.c.b16 %v446, %v445
      %v524 = vpack.c.b16 %v448, %v447
      %v525 = vpack.c.b16 %v450, %v449
      %v526 = vpack.c.b16 %v452, %v451
      %v527 = vpack.c.b16 %v454, %v453
      %v528 = vpack.c.b16 %v456, %v455
      %v529 = vpack.c.b16 %v458, %v457
      %v530 = vpack.c.b16 %v460, %v459
      %v531 = vpack.c.b16 %v462, %v461
      %v532 = vpack.c.b16 %v464, %v463
      %v533 = vpack.c.b16 %v466, %v465
      %v534 = vpack.c.b16 %v468, %v467
      %v535 = vpack.c.b16 %v470, %v469
      %v536 = vpack.c.b16 %v472, %v471
      %v537 = vpack.c.b16 %v474, %v473
      %v538 = vpack.c.b16 %v476, %v475
      %v539 = vpack.c.b16 %v478, %v477
      %v540 = vpack.c.b16 %v480, %v479
      %v541 = vpack.c.b16 %v482, %v481
      %v542 = vpack.c.b16 %v484, %v483
      %v543 = vpack.c.b16 %v486, %v485
      %v544 = vpack.c.b16 %v488, %v487
      %v545 = vpack.c.b16 %v490, %v489
      %v546 = vpack.c.b16 %v492, %v491
      %v547 = vpack.c.b16 %v494, %v493
      %v548 = vpack.c.b16 %v496, %v495
      %v549 = vpack.c.b16 %v498, %v497
      %v550 = vpack.c.b16 %v500, %v499
      %v551 = vpack.c.b16 %v502, %v501
      %v552 = vpack.c.b16 %v504, %v503
      %v553 = vpack.c.b16 %v506, %v505
      %v554 = vpack.c.b16 %v508, %v507
      %v555 = vpack.c.b16 %v510, %v509
      %v556 = vpack.c.b16 %v512, %v511
      %v557 = vpack.c.b16 %v514, %v513
      %v558 = vpack.c.b16 %v516, %v515
      %v559 = vpack.c.b16 %v518, %v517
      %v560 = vpack.c.b16 %v520, %v519
      %601 = vmatpush.bf16.msra.mxu0 %v528
      %602 = vmatpush.bf16.msra.mxu0 %v527
      %603 = vmatpush.bf16.msra.mxu0 %v526
      %604 = vmatpush.bf16.msra.mxu0 %v525
      %605 = vmatpush.bf16.msra.mxu0 %v524
      %606 = vmatpush.bf16.msra.mxu0 %v523
      %607 = vmatpush.bf16.msra.mxu0 %v522
      %608 = vmatpush.bf16.msra.mxu0 %v521
      %609 = vmatmul.bf16.gmra.mxu0 %v341
      %v610 = vpop.f32.mrf.mxu0
      %v611 = vadd.f32 %v307, %v610
      %v612 = vpop.f32.mrf.mxu0
      %v613 = vadd.f32 %v307, %v612
      %614 = vmatmul.bf16.gmra.mxu0 %v346
      %v615 = vpop.f32.mrf.mxu0
      %v616 = vadd.f32 %v307, %v615
      %v617 = vpop.f32.mrf.mxu0
      %v618 = vadd.f32 %v307, %v617
      %619 = vdwg.mxu0
      %620 = vmatpush.bf16.msra.mxu0 %v536
      %621 = vmatpush.bf16.msra.mxu0 %v535
      %622 = vmatpush.bf16.msra.mxu0 %v534
      %623 = vmatpush.bf16.msra.mxu0 %v533
      %624 = vmatpush.bf16.msra.mxu0 %v532
      %625 = vmatpush.bf16.msra.mxu0 %v531
      %626 = vmatpush.bf16.msra.mxu0 %v530
      %627 = vmatpush.bf16.msra.mxu0 %v529
      %628 = vmatmul.bf16.gmra.mxu0 %v342
      %v629 = vpop.f32.mrf.mxu0
      %v630 = vadd.f32 %v611, %v629
      %v631 = vpop.f32.mrf.mxu0
      %v632 = vadd.f32 %v613, %v631
      %633 = vmatmul.bf16.gmra.mxu0 %v347
      %v634 = vpop.f32.mrf.mxu0
      %v635 = vadd.f32 %v616, %v634
      %v636 = vpop.f32.mrf.mxu0
      %v637 = vadd.f32 %v618, %v636
      %638 = vdwg.mxu0
      %639 = vmatpush.bf16.msra.mxu0 %v544
      %640 = vmatpush.bf16.msra.mxu0 %v543
      %641 = vmatpush.bf16.msra.mxu0 %v542
      %642 = vmatpush.bf16.msra.mxu0 %v541
      %643 = vmatpush.bf16.msra.mxu0 %v540
      %644 = vmatpush.bf16.msra.mxu0 %v539
      %645 = vmatpush.bf16.msra.mxu0 %v538
      %646 = vmatpush.bf16.msra.mxu0 %v537
      %647 = vmatmul.bf16.gmra.mxu0 %v343
      %v648 = vpop.f32.mrf.mxu0
      %v649 = vadd.f32 %v630, %v648
      %v650 = vpop.f32.mrf.mxu0
      %v651 = vadd.f32 %v632, %v650
      %652 = vmatmul.bf16.gmra.mxu0 %v348
      %v653 = vpop.f32.mrf.mxu0
      %v654 = vadd.f32 %v635, %v653
      %v655 = vpop.f32.mrf.mxu0
      %v656 = vadd.f32 %v637, %v655
      %657 = vdwg.mxu0
      %658 = vmatpush.bf16.msra.mxu0 %v552
      %659 = vmatpush.bf16.msra.mxu0 %v551
      %660 = vmatpush.bf16.msra.mxu0 %v550
      %661 = vmatpush.bf16.msra.mxu0 %v549
      %662 = vmatpush.bf16.msra.mxu0 %v548
      %663 = vmatpush.bf16.msra.mxu0 %v547
      %664 = vmatpush.bf16.msra.mxu0 %v546
      %665 = vmatpush.bf16.msra.mxu0 %v545
      %666 = vmatmul.bf16.gmra.mxu0 %v344
      %v667 = vpop.f32.mrf.mxu0
      %v668 = vadd.f32 %v649, %v667
      %v669 = vpop.f32.mrf.mxu0
      %v670 = vadd.f32 %v651, %v669
      %671 = vmatmul.bf16.gmra.mxu0 %v349
      %v672 = vpop.f32.mrf.mxu0
      %v673 = vadd.f32 %v654, %v672
      %v674 = vpop.f32.mrf.mxu0
      %v675 = vadd.f32 %v656, %v674
      %676 = vdwg.mxu0
      %677 = vmatpush.bf16.msra.mxu0 %v560
      %678 = vmatpush.bf16.msra.mxu0 %v559
      %679 = vmatpush.bf16.msra.mxu0 %v558
      %680 = vmatpush.bf16.msra.mxu0 %v557
      %681 = vmatpush.bf16.msra.mxu0 %v556
      %682 = vmatpush.bf16.msra.mxu0 %v555
      %683 = vmatpush.bf16.msra.mxu0 %v554
      %684 = vmatpush.bf16.msra.mxu0 %v553
      %685 = vmatmul.bf16.gmra.mxu0 %v345
      %v686 = vpop.f32.mrf.mxu0
      %v687 = vadd.f32 %v668, %v686
      %v688 = vpop.f32.mrf.mxu0
      %v689 = vadd.f32 %v670, %v688
      %690 = vmatmul.bf16.gmra.mxu0 %v350
      %v691 = vpop.f32.mrf.mxu0
      %v692 = vadd.f32 %v673, %v691
      %v693 = vpop.f32.mrf.mxu0
      %v694 = vadd.f32 %v675, %v693
      %695 = vdwg.mxu0
      %p696 = scmp.lt.s32.totalorder %s14, 2
      // Predicated region
      $region37: #{human_aware_forward.13} parent=31 // pred_check
        %p697 = pneg %p696
      $region38: #{human_aware_forward.13} parent=31 // pred_check_branch
        %699 = sbr.rel (%p697) target = $region40
      $region39: #{human_aware_forward.13} parent=31 // pred_region
        %v700 = vmax.f32 %v687, 0.0
        %v701 = vmax.f32 %v689, 0.0
        %v702 = vmax.f32 %v692, 0.0
        %v703 = vmax.f32 %v694, 0.0
        %704 = vst [vmem:[%s204] sm:$0xff] %v700
        %705 = vst [vmem:[%s204 + $0x8] sm:$0xff] %v701
        %706 = vst [vmem:[%s204 + $0x10] sm:$0xff] %v702
        %707 = vst [vmem:[%s204 + $0x18] sm:$0xff] %v703
        %v708 = vld [vmem:[#allocation2] sm:$0xff]
        %v709 = vld [vmem:[#allocation2 + $0x8] sm:$0xff]
        %v710 = vld [vmem:[#allocation2 + $0x10] sm:$0xff]
        %v711 = vld [vmem:[#allocation2 + $0x18] sm:$0xff]
        %v712 = vadd.f32 %v708, %v700
        %v713 = vadd.f32 %v709, %v701
        %v714 = vadd.f32 %v710, %v702
        %v715 = vadd.f32 %v711, %v703
        %716 = vst [vmem:[#allocation2] sm:$0xff] %v712
        %717 = vst [vmem:[#allocation2 + $0x8] sm:$0xff] %v713
        %718 = vst [vmem:[#allocation2 + $0x10] sm:$0xff] %v714
        %719 = vst [vmem:[#allocation2 + $0x18] sm:$0xff] %v715
      $region40: #{human_aware_forward.13} parent=31 // pred_fallthru
        _
      %p720 = scmp.eq.s32.totalorder %s14, 2
      // Predicated region
      $region41: #{human_aware_forward.13} parent=31 // pred_check
        %p721 = pneg %p720
      $region42: #{human_aware_forward.13} parent=31 // pred_check_branch
        %723 = sbr.rel (%p721) target = $region44
      $region43: #{human_aware_forward.13} parent=31 // pred_region
        %v724 = vld [vmem:[#allocation2] sm:$0xff]
        %v725 = vld [vmem:[#allocation2 + $0x8] sm:$0xff]
        %v726 = vld [vmem:[#allocation2 + $0x10] sm:$0xff]
        %v727 = vld [vmem:[#allocation2 + $0x18] sm:$0xff]
        %v728 = vadd.f32 %v687, %v724
        %v729 = vadd.f32 %v689, %v725
        %v730 = vadd.f32 %v692, %v726
        %v731 = vadd.f32 %v694, %v727
        %v732 = vmax.f32 %v728, 0.0
        %v733 = vmax.f32 %v729, 0.0
        %v734 = vmax.f32 %v730, 0.0
        %v735 = vmax.f32 %v731, 0.0
        %736 = vst [vmem:[%s204] sm:$0xff] %v732
        %737 = vst [vmem:[%s204 + $0x8] sm:$0xff] %v733
        %738 = vst [vmem:[%s204 + $0x10] sm:$0xff] %v734
        %739 = vst [vmem:[%s204 + $0x18] sm:$0xff] %v735
      $region44: #{human_aware_forward.13} parent=31 // pred_fallthru
        _
      %p740 = scmp.lt.s32.totalorder %s14, 2
      %s741 = scalar_select %p740, %s14, 2
      %s742 = smul.addr %s741, 4
      %s743 = smul.addr %s742, 8
      %s744 = scalar_lea.vmem %s3, %s743
      // Predicated region
      $region45: #{human_aware_forward.13} parent=31 // pred_check
        %p745 = pneg %p110
      $region46: #{human_aware_forward.13} parent=31 // pred_check_branch
        %747 = sbr.rel (%p745) target = $region48
      $region47: #{human_aware_forward.13} parent=31 // pred_region
        _
      $region48: #{human_aware_forward.13} parent=31 // pred_fallthru
        _
    $region32: #{human_aware_forward.13} parent=5 // pred_fallthru
      _
    %p748 = scmp.le.s32.totalorder 2, %s9
    // Predicated region
    $region49: #{human_aware_forward.13} parent=5 // pred_check
      %p749 = pneg %p748
    $region50: #{human_aware_forward.13} parent=5 // pred_check_branch
      %751 = sbr.rel (%p749) target = $region52
    $region51: #{human_aware_forward.13} parent=5 // pred_region
      %s752 = ssub.s32 %s9, 2
      // Predicated region
      $region53: #{human_aware_forward.13} parent=51 // pred_check
        %p753 = pneg %p116
      $region54: #{human_aware_forward.13} parent=51 // pred_check_branch
        %755 = sbr.rel (%p753) target = $region56
      $region55: #{human_aware_forward.13} parent=51 // pred_region
        %p756 = scmp.lt.s32.totalorder %s15, 2
        %s757 = scalar_select %p756, %s15, 2
        %s758 = smul.addr %s757, 4
        %s759 = smul.addr %s758, 8
        %s760 = scalar_lea.vmem %s3, %s759
      $region56: #{human_aware_forward.13} parent=51 // pred_fallthru
        _
    $region52: #{human_aware_forward.13} parent=5 // pred_fallthru
      _
  $region6: #{human_aware_forward.13} parent=0 // loop_footer
    %s13 = sadd.s32 1, %s9
  $region7: #{human_aware_forward.13} parent=0 // loop_footer_branch
    %8 = sbr.rel target = $region3
  $region8: #{human_aware_forward.13} parent=0 // loop_exit
    _

// kernel: human_aware_forward.14
$region0: #{human_aware_forward.14}
  #allocation0 [shape = 'u32[]', space=smem, size = 0x4, offset = 0x4, fixed_abs, tag = 'smem constant byte address 0x4 - core index']
  #allocation1 [shape = 'u32[72,128]{1,0:T(1,128)}', space=vmem, size = 0x9000, scoped, tag = 'internal scratch']
  #allocation2 [shape = 'f32[32,128]{1,0:T(8,128)}', space=vmem, size = 0x4000, scoped, tag = 'scratch operand']
  %s0 = inlined_call_operand.vmem [shape: bf16[3,32,384], index: 0, kind: input, shape index: {}]
  %s1 = inlined_call_operand.vmem [shape: bf16[3,384,128], index: 1, kind: input, shape index: {}]
  %s2 = inlined_call_operand.vmem [shape: f32[3,1,128], index: 2, kind: input, shape index: {}]
  %s3 = inlined_call_operand.vmem [shape: f32[3,32,128], index: 3, kind: output, shape index: {}]
  %s4 = sld [smem:[#allocation0]]
  $region57: #{human_aware_forward.14} parent=0
    _
  %s6 = ssub.s32 1, %s4
  %s7 = scalar_select 0, %s6, %s4
  loop: start=0, step=1, limit=5
  $region2: #{human_aware_forward.14} parent=0 // loop_pre_header
    _
  $region3: #{human_aware_forward.14} parent=0 // loop_header
    %s9 = sphi 0, %s13
    %p10 = scmp.ge.s32.totalorder %s9, 5
    %s19 = sphi 0, %s21
    %s22 = sphi 0, %s19
    %s23 = sphi 0, %s22
    %s39 = sphi 0, %s23
    %s45 = sphi 0, %s47
    %s48 = sphi 0, %s45
    %s49 = sphi 0, %s48
    %s65 = sphi 0, %s49
    %s71 = sphi 0, %s73
    %s74 = sphi 0, %s71
    %s75 = sphi 0, %s74
    %s91 = sphi 0, %s75
    %s97 = sphi 0, %s99
    %s100 = sphi 0, %s97
    %s101 = sphi 0, %s100
    %s117 = sphi 0, %s101
  $region4: #{human_aware_forward.14} parent=0 // loop_header_branch
    %12 = sbr.rel (%p10) target = $region8
  $region5: #{human_aware_forward.14} parent=0 // loop_body
    %s14 = ssub.s32 %s9, 1
    %s15 = ssub.s32 %s9, 2
    %s16 = sadd.s32 %s9, 1
    %s17 = ssub.s32 %s9, %s16
    %p18 = scmp.eq.s32.totalorder %s17, 0
    %s20 = sadd.s32 %s19, 1
    %s21 = scalar_select %p18, %s19, %s20
    %p24 = pneg %p18
    %p25 = scmp.eq.s32.totalorder %s9, 2
    %p26 = por %p24, %p25
    %p27 = scmp.ne.s32.totalorder %s19, %s22
    %p28 = scmp.eq.s32.totalorder %s9, 0
    %p29 = por %p27, %p28
    %p30 = scmp.ne.s32.totalorder %s19, %s22
    %p31 = scmp.eq.s32.totalorder %s14, 2
    %p32 = por %p30, %p31
    %p33 = scmp.ne.s32.totalorder %s22, %s23
    %p34 = scmp.eq.s32.totalorder %s14, 0
    %p35 = por %p33, %p34
    %p36 = scmp.ne.s32.totalorder %s22, %s23
    %p37 = scmp.eq.s32.totalorder %s15, 2
    %p38 = por %p36, %p37
    %p40 = scmp.ne.s32.totalorder %s23, %s39
    %p41 = scmp.eq.s32.totalorder %s15, 0
    %p42 = por %p40, %p41
    %s43 = ssub.s32 %s9, %s16
    %p44 = scmp.eq.s32.totalorder %s43, 0
    %s46 = sadd.s32 %s45, 1
    %s47 = scalar_select %p44, %s45, %s46
    %p50 = pneg %p44
    %p51 = scmp.eq.s32.totalorder %s9, 2
    %p52 = por %p50, %p51
    %p53 = scmp.ne.s32.totalorder %s45, %s48
    %p54 = scmp.eq.s32.totalorder %s9, 0
    %p55 = por %p53, %p54
    %p56 = scmp.ne.s32.totalorder %s45, %s48
    %p57 = scmp.eq.s32.totalorder %s14, 2
    %p58 = por %p56, %p57
    %p59 = scmp.ne.s32.totalorder %s48, %s49
    %p60 = scmp.eq.s32.totalorder %s14, 0
    %p61 = por %p59, %p60
    %p62 = scmp.ne.s32.totalorder %s48, %s49
    %p63 = scmp.eq.s32.totalorder %s15, 2
    %p64 = por %p62, %p63
    %p66 = scmp.ne.s32.totalorder %s49, %s65
    %p67 = scmp.eq.s32.totalorder %s15, 0
    %p68 = por %p66, %p67
    %s69 = ssub.s32 %s9, %s16
    %p70 = scmp.eq.s32.totalorder %s69, 0
    %s72 = sadd.s32 %s71, 1
    %s73 = scalar_select %p70, %s71, %s72
    %p76 = pneg %p70
    %p77 = scmp.eq.s32.totalorder %s9, 2
    %p78 = por %p76, %p77
    %p79 = scmp.ne.s32.totalorder %s71, %s74
    %p80 = scmp.eq.s32.totalorder %s9, 0
    %p81 = por %p79, %p80
    %p82 = scmp.ne.s32.totalorder %s71, %s74
    %p83 = scmp.eq.s32.totalorder %s14, 2
    %p84 = por %p82, %p83
    %p85 = scmp.ne.s32.totalorder %s74, %s75
    %p86 = scmp.eq.s32.totalorder %s14, 0
    %p87 = por %p85, %p86
    %p88 = scmp.ne.s32.totalorder %s74, %s75
    %p89 = scmp.eq.s32.totalorder %s15, 2
    %p90 = por %p88, %p89
    %p92 = scmp.ne.s32.totalorder %s75, %s91
    %p93 = scmp.eq.s32.totalorder %s15, 0
    %p94 = por %p92, %p93
    %s95 = ssub.s32 %s9, %s16
    %p96 = scmp.eq.s32.totalorder %s95, 0
    %s98 = sadd.s32 %s97, 1
    %s99 = scalar_select %p96, %s97, %s98
    %p102 = pneg %p96
    %p103 = scmp.eq.s32.totalorder %s9, 2
    %p104 = por %p102, %p103
    %p105 = scmp.ne.s32.totalorder %s97, %s100
    %p106 = scmp.eq.s32.totalorder %s9, 0
    %p107 = por %p105, %p106
    %p108 = scmp.ne.s32.totalorder %s97, %s100
    %p109 = scmp.eq.s32.totalorder %s14, 2
    %p110 = por %p108, %p109
    %p111 = scmp.ne.s32.totalorder %s100, %s101
    %p112 = scmp.eq.s32.totalorder %s14, 0
    %p113 = por %p111, %p112
    %p114 = scmp.ne.s32.totalorder %s100, %s101
    %p115 = scmp.eq.s32.totalorder %s15, 2
    %p116 = por %p114, %p115
    %p118 = scmp.ne.s32.totalorder %s101, %s117
    %p119 = scmp.eq.s32.totalorder %s15, 0
    %p120 = por %p118, %p119
    %p121 = scmp.le.s32.totalorder 1, %s9
    %p122 = scmp.lt.s32.totalorder %s9, 4
    %p123 = pnand %p121, %p122
    %p124 = pneg %p123
    // Predicated region
    $region9: #{human_aware_forward.14} parent=5 // pred_check
      _
    $region10: #{human_aware_forward.14} parent=5 // pred_check_branch
      %126 = sbr.rel (%p123) target = $region12
    $region11: #{human_aware_forward.14} parent=5 // pred_region
      %s127 = ssub.s32 %s9, 1
    $region12: #{human_aware_forward.14} parent=5 // pred_fallthru
      _
    %p128 = scmp.lt.s32.totalorder %s9, 3
    // Predicated region
    $region13: #{human_aware_forward.14} parent=5 // pred_check
      %p129 = pneg %p128
    $region14: #{human_aware_forward.14} parent=5 // pred_check_branch
      %131 = sbr.rel (%p129) target = $region16
    $region15: #{human_aware_forward.14} parent=5 // pred_region
      // Predicated region
      $region17: #{human_aware_forward.14} parent=15 // pred_check
        %p132 = pneg %p29
      $region18: #{human_aware_forward.14} parent=15 // pred_check_branch
        %134 = sbr.rel (%p132) target = $region20
      $region19: #{human_aware_forward.14} parent=15 // pred_region
        %p135 = scmp.lt.s32.totalorder %s9, 2
        %s136 = scalar_select %p135, %s9, 2
        %s137 = smul.addr %s136, 12
        %s138 = smul.addr %s137, 4
        %s139 = scalar_lea.vmem %s0, %s138
      $region20: #{human_aware_forward.14} parent=15 // pred_fallthru
        _
      // Predicated region
      $region21: #{human_aware_forward.14} parent=15 // pred_check
        %p140 = pneg %p55
      $region22: #{human_aware_forward.14} parent=15 // pred_check_branch
        %142 = sbr.rel (%p140) target = $region24
      $region23: #{human_aware_forward.14} parent=15 // pred_region
        %p143 = scmp.lt.s32.totalorder %s9, 2
        %s144 = scalar_select %p143, %s9, 2
        %s145 = smul.addr %s144, 48
        %s146 = smul.addr %s145, 4
        %s147 = scalar_lea.vmem %s1, %s146
      $region24: #{human_aware_forward.14} parent=15 // pred_fallthru
        _
      // Predicated region
      $region25: #{human_aware_forward.14} parent=15 // pred_check
        %p148 = pneg %p81
      $region26: #{human_aware_forward.14} parent=15 // pred_check_branch
        %150 = sbr.rel (%p148) target = $region28
      $region27: #{human_aware_forward.14} parent=15 // pred_region
        %p151 = scmp.lt.s32.totalorder %s9, 2
        %s152 = scalar_select %p151, %s9, 2
        %s153 = scalar_lea.vmem %s2, %s152
      $region28: #{human_aware_forward.14} parent=15 // pred_fallthru
        _
    $region16: #{human_aware_forward.14} parent=5 // pred_fallthru
      _
    %p154 = scmp.le.s32.totalorder 1, %s9
    %p155 = scmp.lt.s32.totalorder %s9, 4
    %p156 = pnand %p154, %p155
    %p157 = pneg %p156
    // Predicated region
    $region29: #{human_aware_forward.14} parent=5 // pred_check
      _
    $region30: #{human_aware_forward.14} parent=5 // pred_check_branch
      %159 = sbr.rel (%p156) target = $region32
    $region31: #{human_aware_forward.14} parent=5 // pred_region
      %s160 = ssub.s32 %s9, 1
      %p161 = scmp.lt.s32.totalorder %s14, 2
      %s162 = scalar_select %p161, %s14, 2
      %s163 = smul.addr %s162, 12
      %s164 = smul.addr %s163, 4
      %s165 = scalar_lea.vmem %s0, %s164
      %p166 = pneg %p35
      %p167 = pneg %p32
      %p168 = scmp.lt.s32.totalorder %s14, 2
      %s169 = scalar_select %p168, %s14, 2
      %s170 = smul.addr %s169, 48
      %s171 = smul.addr %s170, 4
      %s172 = scalar_lea.vmem %s1, %s171
      %p173 = pneg %p61
      %p174 = pneg %p58
      %p175 = scmp.lt.s32.totalorder %s14, 2
      %s176 = scalar_select %p175, %s14, 2
      %s177 = scalar_lea.vmem %s2, %s176
      %p178 = pneg %p87
      %p179 = pneg %p84
      %p180 = pneg %p113
      %p181 = pneg %p110
      %p182 = scmp.lt.s32.totalorder %s14, 2
      %s183 = scalar_select %p182, %s14, 2
      %s184 = smul.addr %s183, 4
      %s185 = smul.addr %s184, 8
      %s186 = scalar_lea.vmem %s3, %s185
      %p187 = scmp.lt.s32.totalorder %s14, 2
      %s188 = scalar_select %p187, %s14, 2
      %s189 = smul.addr %s188, 12
      %s190 = smul.addr %s189, 4
      %s191 = scalar_lea.vmem %s0, %s190
      %p192 = scmp.lt.s32.totalorder %s14, 2
      %s193 = scalar_select %p192, %s14, 2
      %s194 = smul.addr %s193, 48
      %s195 = smul.addr %s194, 4
      %s196 = scalar_lea.vmem %s1, %s195
      %p197 = scmp.lt.s32.totalorder %s14, 2
      %s198 = scalar_select %p197, %s14, 2
      %s199 = scalar_lea.vmem %s2, %s198
      %p200 = scmp.lt.s32.totalorder %s14, 2
      %s201 = scalar_select %p200, %s14, 2
      %s202 = smul.addr %s201, 4
      %s203 = smul.addr %s202, 8
      %s204 = scalar_lea.vmem %s3, %s203
      %p205 = scmp.eq.s32.totalorder %s14, 0
      // Predicated region
      $region33: #{human_aware_forward.14} parent=31 // pred_check
        %p206 = pneg %p205
      $region34: #{human_aware_forward.14} parent=31 // pred_check_branch
        %208 = sbr.rel (%p206) target = $region36
      $region35: #{human_aware_forward.14} parent=31 // pred_region
        %209 = vst [vmem:[#allocation2] sm:$0xff] 0.0
        %210 = vst [vmem:[#allocation2 + $0x8] sm:$0xff] 0.0
        %211 = vst [vmem:[#allocation2 + $0x10] sm:$0xff] 0.0
        %212 = vst [vmem:[#allocation2 + $0x18] sm:$0xff] 0.0
      $region36: #{human_aware_forward.14} parent=31 // pred_fallthru
        _
      %v213 = vld [vmem:[%s191] sm:$0xff]
      %v214 = vld [vmem:[%s191 + $0x8] sm:$0xf]
      %v215 = vld [vmem:[%s191 + $0xc] sm:$0xff]
      %v216 = vld [vmem:[%s191 + $0x14] sm:$0xf]
      %v217 = vld [vmem:[%s191 + $0x18] sm:$0xff]
      %v218 = vld [vmem:[%s191 + $0x20] sm:$0xf]
      %v219 = vld [vmem:[%s191 + $0x24] sm:$0xff]
      %v220 = vld [vmem:[%s191 + $0x2c] sm:$0xf]
      %v221 = vld [vmem:[%s196] sm:$0xf]
      %v222 = vld [vmem:[%s196 + $0x4] sm:$0xf]
      %v223 = vld [vmem:[%s196 + $0x8] sm:$0xf]
      %v224 = vld [vmem:[%s196 + $0xc] sm:$0xf]
      %v225 = vld [vmem:[%s196 + $0x10] sm:$0xf]
      %v226 = vld [vmem:[%s196 + $0x14] sm:$0xf]
      %v227 = vld [vmem:[%s196 + $0x18] sm:$0xf]
      %v228 = vld [vmem:[%s196 + $0x1c] sm:$0xf]
      %v229 = vld [vmem:[%s196 + $0x20] sm:$0xf]
      %v230 = vld [vmem:[%s196 + $0x24] sm:$0xf]
      %v231 = vld [vmem:[%s196 + $0x28] sm:$0xf]
      %v232 = vld [vmem:[%s196 + $0x2c] sm:$0xf]
      %v233 = vld [vmem:[%s196 + $0x30] sm:$0xf]
      %v234 = vld [vmem:[%s196 + $0x34] sm:$0xf]
      %v235 = vld [vmem:[%s196 + $0x38] sm:$0xf]
      %v236 = vld [vmem:[%s196 + $0x3c] sm:$0xf]
      %v237 = vld [vmem:[%s196 + $0x40] sm:$0xf]
      %v238 = vld [vmem:[%s196 + $0x44] sm:$0xf]
      %v239 = vld [vmem:[%s196 + $0x48] sm:$0xf]
      %v240 = vld [vmem:[%s196 + $0x4c] sm:$0xf]
      %v241 = vld [vmem:[%s196 + $0x50] sm:$0xf]
      %v242 = vld [vmem:[%s196 + $0x54] sm:$0xf]
      %v243 = vld [vmem:[%s196 + $0x58] sm:$0xf]
      %v244 = vld [vmem:[%s196 + $0x5c] sm:$0xf]
      %v245 = vld [vmem:[%s196 + $0x60] sm:$0xf]
      %v246 = vld [vmem:[%s196 + $0x64] sm:$0xf]
      %v247 = vld [vmem:[%s196 + $0x68] sm:$0xf]
      %v248 = vld [vmem:[%s196 + $0x6c] sm:$0xf]
      %v249 = vld [vmem:[%s196 + $0x70] sm:$0xf]
      %v250 = vld [vmem:[%s196 + $0x74] sm:$0xf]
      %v251 = vld [vmem:[%s196 + $0x78] sm:$0xf]
      %v252 = vld [vmem:[%s196 + $0x7c] sm:$0xf]
      %v253 = vld [vmem:[%s196 + $0x80] sm:$0xf]
      %v254 = vld [vmem:[%s196 + $0x84] sm:$0xf]
      %v255 = vld [vmem:[%s196 + $0x88] sm:$0xf]
      %v256 = vld [vmem:[%s196 + $0x8c] sm:$0xf]
      %v257 = vld [vmem:[%s196 + $0x90] sm:$0xf]
      %v258 = vld [vmem:[%s196 + $0x94] sm:$0xf]
      %v259 = vld [vmem:[%s196 + $0x98] sm:$0xf]
      %v260 = vld [vmem:[%s196 + $0x9c] sm:$0xf]
      %v261 = vld [vmem:[%s196 + $0xa0] sm:$0xf]
      %v262 = vld [vmem:[%s196 + $0xa4] sm:$0xf]
      %v263 = vld [vmem:[%s196 + $0xa8] sm:$0xf]
      %v264 = vld [vmem:[%s196 + $0xac] sm:$0xf]
      %v265 = vld [vmem:[%s196 + $0xb0] sm:$0xf]
      %v266 = vld [vmem:[%s196 + $0xb4] sm:$0xf]
      %v267 = vld [vmem:[%s196 + $0xb8] sm:$0xf]
      %v268 = vld [vmem:[%s196 + $0xbc] sm:$0xf]
      %v269 = vld [vmem:[%s199] sm:$0x1]
      %v271 = vperm.slane %v269, 0
      %v281 = vunpack.c.l.b16 %v213
      %v282 = vunpack.c.h.b16 %v213
      %v283 = vunpack.c.l.b16 %v214
      %v284 = vunpack.c.l.b16 %v215
      %v285 = vunpack.c.h.b16 %v215
      %v286 = vunpack.c.l.b16 %v216
      %v287 = vunpack.c.l.b16 %v217
      %v288 = vunpack.c.h.b16 %v217
      %v289 = vunpack.c.l.b16 %v218
      %v290 = vunpack.c.l.b16 %v219
      %v291 = vunpack.c.h.b16 %v219
      %v292 = vunpack.c.l.b16 %v220
      %v293 = vpack.c.b16 %v284, %v281
      %v294 = vpack.c.b16 %v285, %v282
      %v295 = vpack.c.b16 %v286, %v283
      %v296 = vpack.c.b16 %v290, %v287
      %v297 = vpack.c.b16 %v291, %v288
      %v298 = vpack.c.b16 %v292, %v289
      %v353 = vunpack.c.l.b16 %v221
      %v354 = vunpack.c.l.b16 %v222
      %v355 = vunpack.c.l.b16 %v223
      %v356 = vunpack.c.l.b16 %v224
      %v357 = vunpack.c.l.b16 %v225
      %v358 = vunpack.c.l.b16 %v226
      %v359 = vunpack.c.l.b16 %v227
      %v360 = vunpack.c.l.b16 %v228
      %v361 = vunpack.c.l.b16 %v229
      %v362 = vunpack.c.l.b16 %v230
      %v363 = vunpack.c.l.b16 %v231
      %v364 = vunpack.c.l.b16 %v232
      %v365 = vunpack.c.l.b16 %v233
      %v366 = vunpack.c.l.b16 %v234
      %v367 = vunpack.c.l.b16 %v235
      %v368 = vunpack.c.l.b16 %v236
      %v369 = vunpack.c.l.b16 %v237
      %v370 = vunpack.c.l.b16 %v238
      %v371 = vunpack.c.l.b16 %v239
      %v372 = vunpack.c.l.b16 %v240
      %v373 = vunpack.c.l.b16 %v241
      %v374 = vunpack.c.l.b16 %v242
      %v375 = vunpack.c.l.b16 %v243
      %v376 = vunpack.c.l.b16 %v244
      %v377 = vunpack.c.l.b16 %v245
      %v378 = vunpack.c.l.b16 %v246
      %v379 = vunpack.c.l.b16 %v247
      %v380 = vunpack.c.l.b16 %v248
      %v381 = vunpack.c.l.b16 %v249
      %v382 = vunpack.c.l.b16 %v250
      %v383 = vunpack.c.l.b16 %v251
      %v384 = vunpack.c.l.b16 %v252
      %v385 = vunpack.c.l.b16 %v253
      %v386 = vunpack.c.l.b16 %v254
      %v387 = vunpack.c.l.b16 %v255
      %v388 = vunpack.c.l.b16 %v256
      %v389 = vunpack.c.l.b16 %v257
      %v390 = vunpack.c.l.b16 %v258
      %v391 = vunpack.c.l.b16 %v259
      %v392 = vunpack.c.l.b16 %v260
      %v393 = vunpack.c.l.b16 %v261
      %v394 = vunpack.c.l.b16 %v262
      %v395 = vunpack.c.l.b16 %v263
      %v396 = vunpack.c.l.b16 %v264
      %v397 = vunpack.c.l.b16 %v265
      %v398 = vunpack.c.l.b16 %v266
      %v399 = vunpack.c.l.b16 %v267
      %v400 = vunpack.c.l.b16 %v268
      %v401 = vpack.c.b16 %v354, %v353
      %v402 = vpack.c.b16 %v356, %v355
      %v403 = vpack.c.b16 %v358, %v357
      %v404 = vpack.c.b16 %v360, %v359
      %v405 = vpack.c.b16 %v362, %v361
      %v406 = vpack.c.b16 %v364, %v363
      %v407 = vpack.c.b16 %v366, %v365
      %v408 = vpack.c.b16 %v368, %v367
      %v409 = vpack.c.b16 %v370, %v369
      %v410 = vpack.c.b16 %v372, %v371
      %v411 = vpack.c.b16 %v374, %v373
      %v412 = vpack.c.b16 %v376, %v375
      %v413 = vpack.c.b16 %v378, %v377
      %v414 = vpack.c.b16 %v380, %v379
      %v415 = vpack.c.b16 %v382, %v381
      %v416 = vpack.c.b16 %v384, %v383
      %v417 = vpack.c.b16 %v386, %v385
      %v418 = vpack.c.b16 %v388, %v387
      %v419 = vpack.c.b16 %v390, %v389
      %v420 = vpack.c.b16 %v392, %v391
      %v421 = vpack.c.b16 %v394, %v393
      %v422 = vpack.c.b16 %v396, %v395
      %v423 = vpack.c.b16 %v398, %v397
      %v424 = vpack.c.b16 %v400, %v399
      %449 = vmatpush.bf16.msra.mxu0 %v408
      %450 = vmatpush.bf16.msra.mxu0 %v407
      %451 = vmatpush.bf16.msra.mxu0 %v406
      %452 = vmatpush.bf16.msra.mxu0 %v405
      %453 = vmatpush.bf16.msra.mxu0 %v404
      %454 = vmatpush.bf16.msra.mxu0 %v403
      %455 = vmatpush.bf16.msra.mxu0 %v402
      %456 = vmatpush.bf16.msra.mxu0 %v401
      %457 = vmatmul.bf16.gmra.mxu0 %v293
      %v458 = vpop.f32.mrf.mxu0
      %v459 = vadd.f32 %v271, %v458
      %v460 = vpop.f32.mrf.mxu0
      %v461 = vadd.f32 %v271, %v460
      %462 = vmatmul.bf16.gmra.mxu0 %v296
      %v463 = vpop.f32.mrf.mxu0
      %v464 = vadd.f32 %v271, %v463
      %v465 = vpop.f32.mrf.mxu0
      %v466 = vadd.f32 %v271, %v465
      %467 = vdwg.mxu0
      %468 = vmatpush.bf16.msra.mxu0 %v416
      %469 = vmatpush.bf16.msra.mxu0 %v415
      %470 = vmatpush.bf16.msra.mxu0 %v414
      %471 = vmatpush.bf16.msra.mxu0 %v413
      %472 = vmatpush.bf16.msra.mxu0 %v412
      %473 = vmatpush.bf16.msra.mxu0 %v411
      %474 = vmatpush.bf16.msra.mxu0 %v410
      %475 = vmatpush.bf16.msra.mxu0 %v409
      %476 = vmatmul.bf16.gmra.mxu0 %v294
      %v477 = vpop.f32.mrf.mxu0
      %v478 = vadd.f32 %v459, %v477
      %v479 = vpop.f32.mrf.mxu0
      %v480 = vadd.f32 %v461, %v479
      %481 = vmatmul.bf16.gmra.mxu0 %v297
      %v482 = vpop.f32.mrf.mxu0
      %v483 = vadd.f32 %v464, %v482
      %v484 = vpop.f32.mrf.mxu0
      %v485 = vadd.f32 %v466, %v484
      %486 = vdwg.mxu0
      %487 = vmatpush.bf16.msra.mxu0 %v424
      %488 = vmatpush.bf16.msra.mxu0 %v423
      %489 = vmatpush.bf16.msra.mxu0 %v422
      %490 = vmatpush.bf16.msra.mxu0 %v421
      %491 = vmatpush.bf16.msra.mxu0 %v420
      %492 = vmatpush.bf16.msra.mxu0 %v419
      %493 = vmatpush.bf16.msra.mxu0 %v418
      %494 = vmatpush.bf16.msra.mxu0 %v417
      %495 = vmatmul.bf16.gmra.mxu0 %v295
      %v496 = vpop.f32.mrf.mxu0
      %v497 = vadd.f32 %v478, %v496
      %v498 = vpop.f32.mrf.mxu0
      %v499 = vadd.f32 %v480, %v498
      %500 = vmatmul.bf16.gmra.mxu0 %v298
      %v501 = vpop.f32.mrf.mxu0
      %v502 = vadd.f32 %v483, %v501
      %v503 = vpop.f32.mrf.mxu0
      %v504 = vadd.f32 %v485, %v503
      %505 = vdwg.mxu0
      %p506 = scmp.lt.s32.totalorder %s14, 2
      // Predicated region
      $region37: #{human_aware_forward.14} parent=31 // pred_check
        %p507 = pneg %p506
      $region38: #{human_aware_forward.14} parent=31 // pred_check_branch
        %509 = sbr.rel (%p507) target = $region40
      $region39: #{human_aware_forward.14} parent=31 // pred_region
        %v510 = vmax.f32 %v497, 0.0
        %v511 = vmax.f32 %v499, 0.0
        %v512 = vmax.f32 %v502, 0.0
        %v513 = vmax.f32 %v504, 0.0
        %514 = vst [vmem:[%s204] sm:$0xff] %v510
        %515 = vst [vmem:[%s204 + $0x8] sm:$0xff] %v511
        %516 = vst [vmem:[%s204 + $0x10] sm:$0xff] %v512
        %517 = vst [vmem:[%s204 + $0x18] sm:$0xff] %v513
        %v518 = vld [vmem:[#allocation2] sm:$0xff]
        %v519 = vld [vmem:[#allocation2 + $0x8] sm:$0xff]
        %v520 = vld [vmem:[#allocation2 + $0x10] sm:$0xff]
        %v521 = vld [vmem:[#allocation2 + $0x18] sm:$0xff]
        %v522 = vadd.f32 %v518, %v510
        %v523 = vadd.f32 %v519, %v511
        %v524 = vadd.f32 %v520, %v512
        %v525 = vadd.f32 %v521, %v513
        %526 = vst [vmem:[#allocation2] sm:$0xff] %v522
        %527 = vst [vmem:[#allocation2 + $0x8] sm:$0xff] %v523
        %528 = vst [vmem:[#allocation2 + $0x10] sm:$0xff] %v524
        %529 = vst [vmem:[#allocation2 + $0x18] sm:$0xff] %v525
      $region40: #{human_aware_forward.14} parent=31 // pred_fallthru
        _
      %p530 = scmp.eq.s32.totalorder %s14, 2
      // Predicated region
      $region41: #{human_aware_forward.14} parent=31 // pred_check
        %p531 = pneg %p530
      $region42: #{human_aware_forward.14} parent=31 // pred_check_branch
        %533 = sbr.rel (%p531) target = $region44
      $region43: #{human_aware_forward.14} parent=31 // pred_region
        %v534 = vld [vmem:[#allocation2] sm:$0xff]
        %v535 = vld [vmem:[#allocation2 + $0x8] sm:$0xff]
        %v536 = vld [vmem:[#allocation2 + $0x10] sm:$0xff]
        %v537 = vld [vmem:[#allocation2 + $0x18] sm:$0xff]
        %v538 = vadd.f32 %v497, %v534
        %v539 = vadd.f32 %v499, %v535
        %v540 = vadd.f32 %v502, %v536
        %v541 = vadd.f32 %v504, %v537
        %v542 = vmax.f32 %v538, 0.0
        %v543 = vmax.f32 %v539, 0.0
        %v544 = vmax.f32 %v540, 0.0
        %v545 = vmax.f32 %v541, 0.0
        %546 = vst [vmem:[%s204] sm:$0xff] %v542
        %547 = vst [vmem:[%s204 + $0x8] sm:$0xff] %v543
        %548 = vst [vmem:[%s204 + $0x10] sm:$0xff] %v544
        %549 = vst [vmem:[%s204 + $0x18] sm:$0xff] %v545
      $region44: #{human_aware_forward.14} parent=31 // pred_fallthru
        _
      %p550 = scmp.lt.s32.totalorder %s14, 2
      %s551 = scalar_select %p550, %s14, 2
      %s552 = smul.addr %s551, 4
      %s553 = smul.addr %s552, 8
      %s554 = scalar_lea.vmem %s3, %s553
      // Predicated region
      $region45: #{human_aware_forward.14} parent=31 // pred_check
        %p555 = pneg %p110
      $region46: #{human_aware_forward.14} parent=31 // pred_check_branch
        %557 = sbr.rel (%p555) target = $region48
      $region47: #{human_aware_forward.14} parent=31 // pred_region
        _
      $region48: #{human_aware_forward.14} parent=31 // pred_fallthru
        _
    $region32: #{human_aware_forward.14} parent=5 // pred_fallthru
      _
    %p558 = scmp.le.s32.totalorder 2, %s9
    // Predicated region
    $region49: #{human_aware_forward.14} parent=5 // pred_check
      %p559 = pneg %p558
    $region50: #{human_aware_forward.14} parent=5 // pred_check_branch
      %561 = sbr.rel (%p559) target = $region52
    $region51: #{human_aware_forward.14} parent=5 // pred_region
      %s562 = ssub.s32 %s9, 2
      // Predicated region
      $region53: #{human_aware_forward.14} parent=51 // pred_check
        %p563 = pneg %p116
      $region54: #{human_aware_forward.14} parent=51 // pred_check_branch
        %565 = sbr.rel (%p563) target = $region56
      $region55: #{human_aware_forward.14} parent=51 // pred_region
        %p566 = scmp.lt.s32.totalorder %s15, 2
        %s567 = scalar_select %p566, %s15, 2
        %s568 = smul.addr %s567, 4
        %s569 = smul.addr %s568, 8
        %s570 = scalar_lea.vmem %s3, %s569
      $region56: #{human_aware_forward.14} parent=51 // pred_fallthru
        _
    $region52: #{human_aware_forward.14} parent=5 // pred_fallthru
      _
  $region6: #{human_aware_forward.14} parent=0 // loop_footer
    %s13 = sadd.s32 1, %s9
  $region7: #{human_aware_forward.14} parent=0 // loop_footer_branch
    %8 = sbr.rel target = $region3
  $region8: #{human_aware_forward.14} parent=0 // loop_exit
    _

// kernel: human_aware_forward.15
$region0: #{human_aware_forward.15}
  #allocation0 [shape = 'u32[]', space=smem, size = 0x4, offset = 0x4, fixed_abs, tag = 'smem constant byte address 0x4 - core index']
  #allocation1 [shape = 'u32[72,128]{1,0:T(1,128)}', space=vmem, size = 0x9000, scoped, tag = 'internal scratch']
  %s0 = inlined_call_operand.vmem [shape: bf16[3,32,256], index: 0, kind: input, shape index: {}]
  %s1 = inlined_call_operand.vmem [shape: bf16[3,256,128], index: 1, kind: input, shape index: {}]
  %s2 = inlined_call_operand.vmem [shape: f32[3,1,128], index: 2, kind: input, shape index: {}]
  %s3 = inlined_call_operand.vmem [shape: f32[3,32,128], index: 3, kind: output, shape index: {}]
  %s4 = sld [smem:[#allocation0]]
  $region45: #{human_aware_forward.15} parent=0
    _
  %s6 = ssub.s32 1, %s4
  %s7 = scalar_select 0, %s6, %s4
  loop: start=0, step=1, limit=5
  $region2: #{human_aware_forward.15} parent=0 // loop_pre_header
    _
  $region3: #{human_aware_forward.15} parent=0 // loop_header
    %s9 = sphi 0, %s13
    %p10 = scmp.ge.s32.totalorder %s9, 5
    %s19 = sphi 0, %s21
    %s22 = sphi 0, %s19
    %s23 = sphi 0, %s22
    %s39 = sphi 0, %s23
    %s45 = sphi 0, %s47
    %s48 = sphi 0, %s45
    %s49 = sphi 0, %s48
    %s65 = sphi 0, %s49
    %s71 = sphi 0, %s73
    %s74 = sphi 0, %s71
    %s75 = sphi 0, %s74
    %s91 = sphi 0, %s75
    %s97 = sphi 0, %s99
    %s100 = sphi 0, %s97
    %s101 = sphi 0, %s100
    %s117 = sphi 0, %s101
  $region4: #{human_aware_forward.15} parent=0 // loop_header_branch
    %12 = sbr.rel (%p10) target = $region8
  $region5: #{human_aware_forward.15} parent=0 // loop_body
    %s14 = ssub.s32 %s9, 1
    %s15 = ssub.s32 %s9, 2
    %s16 = sadd.s32 %s9, 1
    %s17 = ssub.s32 %s9, %s16
    %p18 = scmp.eq.s32.totalorder %s17, 0
    %s20 = sadd.s32 %s19, 1
    %s21 = scalar_select %p18, %s19, %s20
    %p24 = pneg %p18
    %p25 = scmp.eq.s32.totalorder %s9, 2
    %p26 = por %p24, %p25
    %p27 = scmp.ne.s32.totalorder %s19, %s22
    %p28 = scmp.eq.s32.totalorder %s9, 0
    %p29 = por %p27, %p28
    %p30 = scmp.ne.s32.totalorder %s19, %s22
    %p31 = scmp.eq.s32.totalorder %s14, 2
    %p32 = por %p30, %p31
    %p33 = scmp.ne.s32.totalorder %s22, %s23
    %p34 = scmp.eq.s32.totalorder %s14, 0
    %p35 = por %p33, %p34
    %p36 = scmp.ne.s32.totalorder %s22, %s23
    %p37 = scmp.eq.s32.totalorder %s15, 2
    %p38 = por %p36, %p37
    %p40 = scmp.ne.s32.totalorder %s23, %s39
    %p41 = scmp.eq.s32.totalorder %s15, 0
    %p42 = por %p40, %p41
    %s43 = ssub.s32 %s9, %s16
    %p44 = scmp.eq.s32.totalorder %s43, 0
    %s46 = sadd.s32 %s45, 1
    %s47 = scalar_select %p44, %s45, %s46
    %p50 = pneg %p44
    %p51 = scmp.eq.s32.totalorder %s9, 2
    %p52 = por %p50, %p51
    %p53 = scmp.ne.s32.totalorder %s45, %s48
    %p54 = scmp.eq.s32.totalorder %s9, 0
    %p55 = por %p53, %p54
    %p56 = scmp.ne.s32.totalorder %s45, %s48
    %p57 = scmp.eq.s32.totalorder %s14, 2
    %p58 = por %p56, %p57
    %p59 = scmp.ne.s32.totalorder %s48, %s49
    %p60 = scmp.eq.s32.totalorder %s14, 0
    %p61 = por %p59, %p60
    %p62 = scmp.ne.s32.totalorder %s48, %s49
    %p63 = scmp.eq.s32.totalorder %s15, 2
    %p64 = por %p62, %p63
    %p66 = scmp.ne.s32.totalorder %s49, %s65
    %p67 = scmp.eq.s32.totalorder %s15, 0
    %p68 = por %p66, %p67
    %s69 = ssub.s32 %s9, %s16
    %p70 = scmp.eq.s32.totalorder %s69, 0
    %s72 = sadd.s32 %s71, 1
    %s73 = scalar_select %p70, %s71, %s72
    %p76 = pneg %p70
    %p77 = scmp.eq.s32.totalorder %s9, 2
    %p78 = por %p76, %p77
    %p79 = scmp.ne.s32.totalorder %s71, %s74
    %p80 = scmp.eq.s32.totalorder %s9, 0
    %p81 = por %p79, %p80
    %p82 = scmp.ne.s32.totalorder %s71, %s74
    %p83 = scmp.eq.s32.totalorder %s14, 2
    %p84 = por %p82, %p83
    %p85 = scmp.ne.s32.totalorder %s74, %s75
    %p86 = scmp.eq.s32.totalorder %s14, 0
    %p87 = por %p85, %p86
    %p88 = scmp.ne.s32.totalorder %s74, %s75
    %p89 = scmp.eq.s32.totalorder %s15, 2
    %p90 = por %p88, %p89
    %p92 = scmp.ne.s32.totalorder %s75, %s91
    %p93 = scmp.eq.s32.totalorder %s15, 0
    %p94 = por %p92, %p93
    %s95 = ssub.s32 %s9, %s16
    %p96 = scmp.eq.s32.totalorder %s95, 0
    %s98 = sadd.s32 %s97, 1
    %s99 = scalar_select %p96, %s97, %s98
    %p102 = pneg %p96
    %p103 = scmp.eq.s32.totalorder %s9, 2
    %p104 = por %p102, %p103
    %p105 = scmp.ne.s32.totalorder %s97, %s100
    %p106 = scmp.eq.s32.totalorder %s9, 0
    %p107 = por %p105, %p106
    %p108 = scmp.ne.s32.totalorder %s97, %s100
    %p109 = scmp.eq.s32.totalorder %s14, 2
    %p110 = por %p108, %p109
    %p111 = scmp.ne.s32.totalorder %s100, %s101
    %p112 = scmp.eq.s32.totalorder %s14, 0
    %p113 = por %p111, %p112
    %p114 = scmp.ne.s32.totalorder %s100, %s101
    %p115 = scmp.eq.s32.totalorder %s15, 2
    %p116 = por %p114, %p115
    %p118 = scmp.ne.s32.totalorder %s101, %s117
    %p119 = scmp.eq.s32.totalorder %s15, 0
    %p120 = por %p118, %p119
    %p121 = scmp.le.s32.totalorder 1, %s9
    %p122 = scmp.lt.s32.totalorder %s9, 4
    %p123 = pnand %p121, %p122
    %p124 = pneg %p123
    // Predicated region
    $region9: #{human_aware_forward.15} parent=5 // pred_check
      _
    $region10: #{human_aware_forward.15} parent=5 // pred_check_branch
      %126 = sbr.rel (%p123) target = $region12
    $region11: #{human_aware_forward.15} parent=5 // pred_region
      %s127 = ssub.s32 %s9, 1
    $region12: #{human_aware_forward.15} parent=5 // pred_fallthru
      _
    %p128 = scmp.lt.s32.totalorder %s9, 3
    // Predicated region
    $region13: #{human_aware_forward.15} parent=5 // pred_check
      %p129 = pneg %p128
    $region14: #{human_aware_forward.15} parent=5 // pred_check_branch
      %131 = sbr.rel (%p129) target = $region16
    $region15: #{human_aware_forward.15} parent=5 // pred_region
      // Predicated region
      $region17: #{human_aware_forward.15} parent=15 // pred_check
        %p132 = pneg %p29
      $region18: #{human_aware_forward.15} parent=15 // pred_check_branch
        %134 = sbr.rel (%p132) target = $region20
      $region19: #{human_aware_forward.15} parent=15 // pred_region
        %p135 = scmp.lt.s32.totalorder %s9, 2
        %s136 = scalar_select %p135, %s9, 2
        %s137 = smul.addr %s136, 8
        %s138 = smul.addr %s137, 4
        %s139 = scalar_lea.vmem %s0, %s138
      $region20: #{human_aware_forward.15} parent=15 // pred_fallthru
        _
      // Predicated region
      $region21: #{human_aware_forward.15} parent=15 // pred_check
        %p140 = pneg %p55
      $region22: #{human_aware_forward.15} parent=15 // pred_check_branch
        %142 = sbr.rel (%p140) target = $region24
      $region23: #{human_aware_forward.15} parent=15 // pred_region
        %p143 = scmp.lt.s32.totalorder %s9, 2
        %s144 = scalar_select %p143, %s9, 2
        %s145 = smul.addr %s144, 32
        %s146 = smul.addr %s145, 4
        %s147 = scalar_lea.vmem %s1, %s146
      $region24: #{human_aware_forward.15} parent=15 // pred_fallthru
        _
      // Predicated region
      $region25: #{human_aware_forward.15} parent=15 // pred_check
        %p148 = pneg %p81
      $region26: #{human_aware_forward.15} parent=15 // pred_check_branch
        %150 = sbr.rel (%p148) target = $region28
      $region27: #{human_aware_forward.15} parent=15 // pred_region
        %p151 = scmp.lt.s32.totalorder %s9, 2
        %s152 = scalar_select %p151, %s9, 2
        %s153 = scalar_lea.vmem %s2, %s152
      $region28: #{human_aware_forward.15} parent=15 // pred_fallthru
        _
    $region16: #{human_aware_forward.15} parent=5 // pred_fallthru
      _
    %p154 = scmp.le.s32.totalorder 1, %s9
    %p155 = scmp.lt.s32.totalorder %s9, 4
    %p156 = pnand %p154, %p155
    %p157 = pneg %p156
    // Predicated region
    $region29: #{human_aware_forward.15} parent=5 // pred_check
      _
    $region30: #{human_aware_forward.15} parent=5 // pred_check_branch
      %159 = sbr.rel (%p156) target = $region32
    $region31: #{human_aware_forward.15} parent=5 // pred_region
      %s160 = ssub.s32 %s9, 1
      %p161 = scmp.lt.s32.totalorder %s14, 2
      %s162 = scalar_select %p161, %s14, 2
      %s163 = smul.addr %s162, 8
      %s164 = smul.addr %s163, 4
      %s165 = scalar_lea.vmem %s0, %s164
      %p166 = pneg %p35
      %p167 = pneg %p32
      %p168 = scmp.lt.s32.totalorder %s14, 2
      %s169 = scalar_select %p168, %s14, 2
      %s170 = smul.addr %s169, 32
      %s171 = smul.addr %s170, 4
      %s172 = scalar_lea.vmem %s1, %s171
      %p173 = pneg %p61
      %p174 = pneg %p58
      %p175 = scmp.lt.s32.totalorder %s14, 2
      %s176 = scalar_select %p175, %s14, 2
      %s177 = scalar_lea.vmem %s2, %s176
      %p178 = pneg %p87
      %p179 = pneg %p84
      %p180 = pneg %p113
      %p181 = pneg %p110
      %p182 = scmp.lt.s32.totalorder %s14, 2
      %s183 = scalar_select %p182, %s14, 2
      %s184 = smul.addr %s183, 4
      %s185 = smul.addr %s184, 8
      %s186 = scalar_lea.vmem %s3, %s185
      %p187 = scmp.lt.s32.totalorder %s14, 2
      %s188 = scalar_select %p187, %s14, 2
      %s189 = smul.addr %s188, 8
      %s190 = smul.addr %s189, 4
      %s191 = scalar_lea.vmem %s0, %s190
      %p192 = scmp.lt.s32.totalorder %s14, 2
      %s193 = scalar_select %p192, %s14, 2
      %s194 = smul.addr %s193, 32
      %s195 = smul.addr %s194, 4
      %s196 = scalar_lea.vmem %s1, %s195
      %p197 = scmp.lt.s32.totalorder %s14, 2
      %s198 = scalar_select %p197, %s14, 2
      %s199 = scalar_lea.vmem %s2, %s198
      %p200 = scmp.lt.s32.totalorder %s14, 2
      %s201 = scalar_select %p200, %s14, 2
      %s202 = smul.addr %s201, 4
      %s203 = smul.addr %s202, 8
      %s204 = scalar_lea.vmem %s3, %s203
      %v205 = vld [vmem:[%s191] sm:$0xff]
      %v206 = vld [vmem:[%s191 + $0x8] sm:$0xff]
      %v207 = vld [vmem:[%s191 + $0x10] sm:$0xff]
      %v208 = vld [vmem:[%s191 + $0x18] sm:$0xff]
      %v209 = vld [vmem:[%s196] sm:$0xf]
      %v210 = vld [vmem:[%s196 + $0x4] sm:$0xf]
      %v211 = vld [vmem:[%s196 + $0x8] sm:$0xf]
      %v212 = vld [vmem:[%s196 + $0xc] sm:$0xf]
      %v213 = vld [vmem:[%s196 + $0x10] sm:$0xf]
      %v214 = vld [vmem:[%s196 + $0x14] sm:$0xf]
      %v215 = vld [vmem:[%s196 + $0x18] sm:$0xf]
      %v216 = vld [vmem:[%s196 + $0x1c] sm:$0xf]
      %v217 = vld [vmem:[%s196 + $0x20] sm:$0xf]
      %v218 = vld [vmem:[%s196 + $0x24] sm:$0xf]
      %v219 = vld [vmem:[%s196 + $0x28] sm:$0xf]
      %v220 = vld [vmem:[%s196 + $0x2c] sm:$0xf]
      %v221 = vld [vmem:[%s196 + $0x30] sm:$0xf]
      %v222 = vld [vmem:[%s196 + $0x34] sm:$0xf]
      %v223 = vld [vmem:[%s196 + $0x38] sm:$0xf]
      %v224 = vld [vmem:[%s196 + $0x3c] sm:$0xf]
      %v225 = vld [vmem:[%s196 + $0x40] sm:$0xf]
      %v226 = vld [vmem:[%s196 + $0x44] sm:$0xf]
      %v227 = vld [vmem:[%s196 + $0x48] sm:$0xf]
      %v228 = vld [vmem:[%s196 + $0x4c] sm:$0xf]
      %v229 = vld [vmem:[%s196 + $0x50] sm:$0xf]
      %v230 = vld [vmem:[%s196 + $0x54] sm:$0xf]
      %v231 = vld [vmem:[%s196 + $0x58] sm:$0xf]
      %v232 = vld [vmem:[%s196 + $0x5c] sm:$0xf]
      %v233 = vld [vmem:[%s196 + $0x60] sm:$0xf]
      %v234 = vld [vmem:[%s196 + $0x64] sm:$0xf]
      %v235 = vld [vmem:[%s196 + $0x68] sm:$0xf]
      %v236 = vld [vmem:[%s196 + $0x6c] sm:$0xf]
      %v237 = vld [vmem:[%s196 + $0x70] sm:$0xf]
      %v238 = vld [vmem:[%s196 + $0x74] sm:$0xf]
      %v239 = vld [vmem:[%s196 + $0x78] sm:$0xf]
      %v240 = vld [vmem:[%s196 + $0x7c] sm:$0xf]
      %v241 = vld [vmem:[%s199] sm:$0x1]
      %v243 = vperm.slane %v241, 0
      %v249 = vunpack.c.l.b16 %v205
      %v250 = vunpack.c.h.b16 %v205
      %v251 = vunpack.c.l.b16 %v206
      %v252 = vunpack.c.h.b16 %v206
      %v253 = vunpack.c.l.b16 %v207
      %v254 = vunpack.c.h.b16 %v207
      %v255 = vunpack.c.l.b16 %v208
      %v256 = vunpack.c.h.b16 %v208
      %v257 = vpack.c.b16 %v251, %v249
      %v258 = vpack.c.b16 %v252, %v250
      %v259 = vpack.c.b16 %v255, %v253
      %v260 = vpack.c.b16 %v256, %v254
      %v297 = vunpack.c.l.b16 %v209
      %v298 = vunpack.c.l.b16 %v210
      %v299 = vunpack.c.l.b16 %v211
      %v300 = vunpack.c.l.b16 %v212
      %v301 = vunpack.c.l.b16 %v213
      %v302 = vunpack.c.l.b16 %v214
      %v303 = vunpack.c.l.b16 %v215
      %v304 = vunpack.c.l.b16 %v216
      %v305 = vunpack.c.l.b16 %v217
      %v306 = vunpack.c.l.b16 %v218
      %v307 = vunpack.c.l.b16 %v219
      %v308 = vunpack.c.l.b16 %v220
      %v309 = vunpack.c.l.b16 %v221
      %v310 = vunpack.c.l.b16 %v222
      %v311 = vunpack.c.l.b16 %v223
      %v312 = vunpack.c.l.b16 %v224
      %v313 = vunpack.c.l.b16 %v225
      %v314 = vunpack.c.l.b16 %v226
      %v315 = vunpack.c.l.b16 %v227
      %v316 = vunpack.c.l.b16 %v228
      %v317 = vunpack.c.l.b16 %v229
      %v318 = vunpack.c.l.b16 %v230
      %v319 = vunpack.c.l.b16 %v231
      %v320 = vunpack.c.l.b16 %v232
      %v321 = vunpack.c.l.b16 %v233
      %v322 = vunpack.c.l.b16 %v234
      %v323 = vunpack.c.l.b16 %v235
      %v324 = vunpack.c.l.b16 %v236
      %v325 = vunpack.c.l.b16 %v237
      %v326 = vunpack.c.l.b16 %v238
      %v327 = vunpack.c.l.b16 %v239
      %v328 = vunpack.c.l.b16 %v240
      %v329 = vpack.c.b16 %v298, %v297
      %v330 = vpack.c.b16 %v300, %v299
      %v331 = vpack.c.b16 %v302, %v301
      %v332 = vpack.c.b16 %v304, %v303
      %v333 = vpack.c.b16 %v306, %v305
      %v334 = vpack.c.b16 %v308, %v307
      %v335 = vpack.c.b16 %v310, %v309
      %v336 = vpack.c.b16 %v312, %v311
      %v337 = vpack.c.b16 %v314, %v313
      %v338 = vpack.c.b16 %v316, %v315
      %v339 = vpack.c.b16 %v318, %v317
      %v340 = vpack.c.b16 %v320, %v319
      %v341 = vpack.c.b16 %v322, %v321
      %v342 = vpack.c.b16 %v324, %v323
      %v343 = vpack.c.b16 %v326, %v325
      %v344 = vpack.c.b16 %v328, %v327
      %361 = vmatpush.bf16.msra.mxu0 %v336
      %362 = vmatpush.bf16.msra.mxu0 %v335
      %363 = vmatpush.bf16.msra.mxu0 %v334
      %364 = vmatpush.bf16.msra.mxu0 %v333
      %365 = vmatpush.bf16.msra.mxu0 %v332
      %366 = vmatpush.bf16.msra.mxu0 %v331
      %367 = vmatpush.bf16.msra.mxu0 %v330
      %368 = vmatpush.bf16.msra.mxu0 %v329
      %369 = vmatmul.bf16.gmra.mxu0 %v257
      %v370 = vpop.f32.mrf.mxu0
      %v371 = vadd.f32 %v243, %v370
      %v372 = vpop.f32.mrf.mxu0
      %v373 = vadd.f32 %v243, %v372
      %374 = vmatmul.bf16.gmra.mxu0 %v259
      %v375 = vpop.f32.mrf.mxu0
      %v376 = vadd.f32 %v243, %v375
      %v377 = vpop.f32.mrf.mxu0
      %v378 = vadd.f32 %v243, %v377
      %379 = vdwg.mxu0
      %380 = vmatpush.bf16.msra.mxu0 %v344
      %381 = vmatpush.bf16.msra.mxu0 %v343
      %382 = vmatpush.bf16.msra.mxu0 %v342
      %383 = vmatpush.bf16.msra.mxu0 %v341
      %384 = vmatpush.bf16.msra.mxu0 %v340
      %385 = vmatpush.bf16.msra.mxu0 %v339
      %386 = vmatpush.bf16.msra.mxu0 %v338
      %387 = vmatpush.bf16.msra.mxu0 %v337
      %388 = vmatmul.bf16.gmra.mxu0 %v258
      %v389 = vpop.f32.mrf.mxu0
      %v390 = vadd.f32 %v371, %v389
      %v391 = vpop.f32.mrf.mxu0
      %v392 = vadd.f32 %v373, %v391
      %393 = vmatmul.bf16.gmra.mxu0 %v260
      %v394 = vpop.f32.mrf.mxu0
      %v395 = vadd.f32 %v376, %v394
      %v396 = vpop.f32.mrf.mxu0
      %v397 = vadd.f32 %v378, %v396
      %398 = vdwg.mxu0
      %v399 = vxor.u32 %v390, 2147483648
      %v400 = vxor.u32 %v392, 2147483648
      %v401 = vxor.u32 %v395, 2147483648
      %v402 = vxor.u32 %v397, 2147483648
      %v403 = vmul.f32 %v399, 1.442695
      %v404 = vpow.pop %v403
      %v405 = vmul.f32 %v400, 1.442695
      %v406 = vpow.pop %v405
      %v407 = vmul.f32 %v401, 1.442695
      %v408 = vpow.pop %v407
      %v409 = vmul.f32 %v402, 1.442695
      %v410 = vpow.pop %v409
      %v411 = vadd.f32 %v404, 1.0
      %v412 = vadd.f32 %v406, 1.0
      %v413 = vadd.f32 %v408, 1.0
      %v414 = vadd.f32 %v410, 1.0
      %v415 = vrcp.pop %v411
      %v416 = vmul.f32 %v411, %v415
      %v417 = vsub.f32 1.0, %v416
      %v418 = vmul.f32 %v415, %v417
      %v419 = vadd.f32 %v415, %v418
      %vm420 = vweird.f32 %v411
      %vm421 = vweird.f32 %v415
      %vm422 = vmor %vm420, %vm421
      %v423 = vsel %vm422, %v415, %v419
      %v424 = vand.u32 2147483647, %v411
      %vm425 = vcmp.eq.f32.partialorder %v424, 8.507059e+37
      %v426 = vand.u32 %v411, 2147483648
      %v427 = vor.u32 1.1754944e-38, %v426
      %v428 = vsel %vm425, %v427, %v423
      %v429 = vmul.f32 1.0, %v428
      %v430 = vrcp.pop %v412
      %v431 = vmul.f32 %v412, %v430
      %v432 = vsub.f32 1.0, %v431
      %v433 = vmul.f32 %v430, %v432
      %v434 = vadd.f32 %v430, %v433
      %vm435 = vweird.f32 %v412
      %vm436 = vweird.f32 %v430
      %vm437 = vmor %vm435, %vm436
      %v438 = vsel %vm437, %v430, %v434
      %v439 = vand.u32 2147483647, %v412
      %vm440 = vcmp.eq.f32.partialorder %v439, 8.507059e+37
      %v441 = vand.u32 %v412, 2147483648
      %v442 = vor.u32 1.1754944e-38, %v441
      %v443 = vsel %vm440, %v442, %v438
      %v444 = vmul.f32 1.0, %v443
      %v445 = vrcp.pop %v413
      %v446 = vmul.f32 %v413, %v445
      %v447 = vsub.f32 1.0, %v446
      %v448 = vmul.f32 %v445, %v447
      %v449 = vadd.f32 %v445, %v448
      %vm450 = vweird.f32 %v413
      %vm451 = vweird.f32 %v445
      %vm452 = vmor %vm450, %vm451
      %v453 = vsel %vm452, %v445, %v449
      %v454 = vand.u32 2147483647, %v413
      %vm455 = vcmp.eq.f32.partialorder %v454, 8.507059e+37
      %v456 = vand.u32 %v413, 2147483648
      %v457 = vor.u32 1.1754944e-38, %v456
      %v458 = vsel %vm455, %v457, %v453
      %v459 = vmul.f32 1.0, %v458
      %v460 = vrcp.pop %v414
      %v461 = vmul.f32 %v414, %v460
      %v462 = vsub.f32 1.0, %v461
      %v463 = vmul.f32 %v460, %v462
      %v464 = vadd.f32 %v460, %v463
      %vm465 = vweird.f32 %v414
      %vm466 = vweird.f32 %v460
      %vm467 = vmor %vm465, %vm466
      %v468 = vsel %vm467, %v460, %v464
      %v469 = vand.u32 2147483647, %v414
      %vm470 = vcmp.eq.f32.partialorder %v469, 8.507059e+37
      %v471 = vand.u32 %v414, 2147483648
      %v472 = vor.u32 1.1754944e-38, %v471
      %v473 = vsel %vm470, %v472, %v468
      %v474 = vmul.f32 1.0, %v473
      %475 = vst [vmem:[%s204] sm:$0xff] %v429
      %476 = vst [vmem:[%s204 + $0x8] sm:$0xff] %v444
      %477 = vst [vmem:[%s204 + $0x10] sm:$0xff] %v459
      %478 = vst [vmem:[%s204 + $0x18] sm:$0xff] %v474
      %p479 = scmp.lt.s32.totalorder %s14, 2
      %s480 = scalar_select %p479, %s14, 2
      %s481 = smul.addr %s480, 4
      %s482 = smul.addr %s481, 8
      %s483 = scalar_lea.vmem %s3, %s482
      // Predicated region
      $region33: #{human_aware_forward.15} parent=31 // pred_check
        %p484 = pneg %p110
      $region34: #{human_aware_forward.15} parent=31 // pred_check_branch
        %486 = sbr.rel (%p484) target = $region36
      $region35: #{human_aware_forward.15} parent=31 // pred_region
        _
      $region36: #{human_aware_forward.15} parent=31 // pred_fallthru
        _
    $region32: #{human_aware_forward.15} parent=5 // pred_fallthru
      _
    %p487 = scmp.le.s32.totalorder 2, %s9
    // Predicated region
    $region37: #{human_aware_forward.15} parent=5 // pred_check
      %p488 = pneg %p487
    $region38: #{human_aware_forward.15} parent=5 // pred_check_branch
      %490 = sbr.rel (%p488) target = $region40
    $region39: #{human_aware_forward.15} parent=5 // pred_region
      %s491 = ssub.s32 %s9, 2
      // Predicated region
      $region41: #{human_aware_forward.15} parent=39 // pred_check
        %p492 = pneg %p116
      $region42: #{human_aware_forward.15} parent=39 // pred_check_branch
        %494 = sbr.rel (%p492) target = $region44
      $region43: #{human_aware_forward.15} parent=39 // pred_region
        %p495 = scmp.lt.s32.totalorder %s15, 2
        %s496 = scalar_select %p495, %s15, 2
        %s497 = smul.addr %s496, 4
        %s498 = smul.addr %s497, 8
        %s499 = scalar_lea.vmem %s3, %s498
      $region44: #{human_aware_forward.15} parent=39 // pred_fallthru
        _
    $region40: #{human_aware_forward.15} parent=5 // pred_fallthru
      _
  $region6: #{human_aware_forward.15} parent=0 // loop_footer
    %s13 = sadd.s32 1, %s9
  $region7: #{human_aware_forward.15} parent=0 // loop_footer_branch
    %8 = sbr.rel target = $region3
  $region8: #{human_aware_forward.15} parent=0 // loop_exit
    _

</llo_original>
